<compile_context>
chip_gen: v7x
topology: tpu7x:2x2x1
jax: 0.10.0
libtpu: 0.0.40
codegen_flags: <defaults>
</compile_context>

<pallas_src>
import math

import jax
import jax.numpy as jnp
from jax.experimental import pallas as pl
from jax.experimental.pallas import tpu as pltpu


D_IN = 1024   # fc1 in / fc4 out
D_H1 = 256    # fc1 out / fc21,fc22 in / fc3 out / fc4 in
D_Z = 128     # latent (fc21/fc22 out, fc3 in)
D_ML = 2 * D_Z  # fused mu||logvar width


def _round_up(n, m):
    return ((n + m - 1) // m) * m


def vae_kernel(
    x_ref, eps_ref,
    w1_ref, b1_ref,
    w2_ref, b2_ref,       # fused [W21 || W22], [b21 || b22]
    w3_ref, b3_ref,
    w4_ref, b4_ref,
    recon_ref, mulogvar_ref,
):
    x = x_ref[...]                                    # (TB, 1024) bf16
    eps = eps_ref[...]                                # (TB, 128)  f32

    # ---- encode ----
    h1 = jnp.dot(x, w1_ref[...], preferred_element_type=jnp.float32) + b1_ref[...]
    h1 = jnp.maximum(h1, 0.0)                         # relu, f32 (TB, 256)

    # Fused fc21/fc22: one N=256 MXU push instead of two N=128 pushes.
    ml = jnp.dot(h1.astype(jnp.bfloat16), w2_ref[...],
                 preferred_element_type=jnp.float32) + b2_ref[...]   # (TB, 256) f32
    mu = ml[:, :D_Z]                                  # lane-tile-aligned slice (free)
    logvar = ml[:, D_Z:]

    # ---- reparameterize (f32 VPU/EUP) ----
    std = jnp.exp(0.5 * logvar)
    z = mu + eps * std                                # (TB, 128) f32

    # ---- decode ----
    h3 = jnp.dot(z.astype(jnp.bfloat16), w3_ref[...],
                 preferred_element_type=jnp.float32) + b3_ref[...]
    h3 = jnp.maximum(h3, 0.0)                         # relu, f32 (TB, 256)

    logits = jnp.dot(h3.astype(jnp.bfloat16), w4_ref[...],
                     preferred_element_type=jnp.float32) + b4_ref[...]
    recon = jax.nn.sigmoid(logits)                    # (TB, 1024) f32

    recon_ref[...] = recon.astype(recon_ref.dtype)
    mulogvar_ref[...] = ml.astype(mulogvar_ref.dtype)


def vae_forward(x, eps, params, *, batch_tile=256):
    """x: (B, 1024); eps: (B, 128); params: dict of (in, out) f32 weights and (1, out) f32 biases.

    Returns (recon (B, 1024), mu (B, 128), logvar (B, 128)) in float32.
    """
    B = x.shape[0]

    # bf16 blocks need the second-to-last dim to be a multiple of 16.
    TB = min(batch_tile, _round_up(B, 16))
    B_pad = _round_up(B, TB)
    if B_pad != B:
        pad = B_pad - B
        x = jnp.pad(x, ((0, pad), (0, 0)))
        eps = jnp.pad(eps, ((0, pad), (0, 0)))

    # bf16 MXU operands; biases stay f32 (added post-accumulation).
    x_bf = x.astype(jnp.bfloat16)
    w1 = params["w1"].astype(jnp.bfloat16)
    w2 = jnp.concatenate([params["w21"], params["w22"]], axis=1).astype(jnp.bfloat16)
    w3 = params["w3"].astype(jnp.bfloat16)
    w4 = params["w4"].astype(jnp.bfloat16)
    b1 = params["b1"].astype(jnp.float32)
    b2 = jnp.concatenate([params["b21"], params["b22"]], axis=1).astype(jnp.float32)
    b3 = params["b3"].astype(jnp.float32)
    b4 = params["b4"].astype(jnp.float32)

    grid = (B_pad // TB,)

    def row_map(i):
        return (i, 0)

    def whole(i):
        return (0, 0)

    recon, mulogvar = pl.pallas_call(
        vae_kernel,
        out_shape=(
            jax.ShapeDtypeStruct((B_pad, D_IN), jnp.float32),   # recon
            jax.ShapeDtypeStruct((B_pad, D_ML), jnp.float32),   # mu || logvar
        ),
        grid_spec=pltpu.PrefetchScalarGridSpec(
            num_scalar_prefetch=0,
            grid=grid,
            in_specs=[
                pl.BlockSpec((TB, D_IN), row_map),        # x tile (bf16)
                pl.BlockSpec((TB, D_Z), row_map),         # eps tile (f32)
                pl.BlockSpec((D_IN, D_H1), whole),        # W1   (VMEM-resident)
                pl.BlockSpec((1, D_H1), whole),           # b1
                pl.BlockSpec((D_H1, D_ML), whole),        # W21||W22
                pl.BlockSpec((1, D_ML), whole),           # b21||b22
                pl.BlockSpec((D_Z, D_H1), whole),         # W3
                pl.BlockSpec((1, D_H1), whole),           # b3
                pl.BlockSpec((D_H1, D_IN), whole),        # W4
                pl.BlockSpec((1, D_IN), whole),           # b4
            ],
            out_specs=[
                pl.BlockSpec((TB, D_IN), row_map),        # recon
                pl.BlockSpec((TB, D_ML), row_map),        # mu || logvar
            ],
        ),
        compiler_params=pltpu.CompilerParams(
            dimension_semantics=("parallel",),            # batch tiles independent -> megacore
        ),
    )(x_bf, eps, w1, b1, w2, b2, w3, b3, w4, b4)

    recon = recon[:B]
    mu = mulogvar[:B, :D_Z]
    logvar = mulogvar[:B, D_Z:]
    return recon, mu, logvar


def vae_reference(x, eps, params):
    """Pure-JAX reference mirroring the PyTorch VAE.forward (eps supplied), using the same
    mixed precision as the kernel (bf16 matmul operands, f32 accumulation/elementwise)."""
    xb = x.astype(jnp.bfloat16)
    w1 = params["w1"].astype(jnp.bfloat16)
    w21 = params["w21"].astype(jnp.bfloat16)
    w22 = params["w22"].astype(jnp.bfloat16)
    w3 = params["w3"].astype(jnp.bfloat16)
    w4 = params["w4"].astype(jnp.bfloat16)

    h1 = jnp.maximum(
        jnp.dot(xb, w1, preferred_element_type=jnp.float32) + params["b1"], 0.0)
    h1b = h1.astype(jnp.bfloat16)
    mu = jnp.dot(h1b, w21, preferred_element_type=jnp.float32) + params["b21"]
    logvar = jnp.dot(h1b, w22, preferred_element_type=jnp.float32) + params["b22"]
    std = jnp.exp(0.5 * logvar)
    z = mu + eps * std
    h3 = jnp.maximum(
        jnp.dot(z.astype(jnp.bfloat16), w3, preferred_element_type=jnp.float32) + params["b3"], 0.0)
    recon = jax.nn.sigmoid(
        jnp.dot(h3.astype(jnp.bfloat16), w4, preferred_element_type=jnp.float32) + params["b4"])
    return recon, mu, logvar


def _init_linear(key, fan_in, fan_out):
    # PyTorch nn.Linear default init: U(-1/sqrt(fan_in), 1/sqrt(fan_in)).
    kw, kb = jax.random.split(key)
    bound = 1.0 / math.sqrt(fan_in)
    # Stored pre-transposed as (in, out) so the kernel computes x @ W.
    w = jax.random.uniform(kw, (fan_in, fan_out), minval=-bound, maxval=bound, dtype=jnp.float32)
    b = jax.random.uniform(kb, (1, fan_out), minval=-bound, maxval=bound, dtype=jnp.float32)
    return w, b


if __name__ == "__main__":
    B = 512  # 4 batch tiles of 128 -> exercises the parallel grid / megacore path

    key = jax.random.PRNGKey(0)
    k_x, k_eps, k1, k21, k22, k3, k4 = jax.random.split(key, 7)

    x = jax.random.normal(k_x, (B, D_IN), dtype=jnp.float32)
    eps = jax.random.normal(k_eps, (B, D_Z), dtype=jnp.float32)

    w1, b1 = _init_linear(k1, D_IN, D_H1)
    w21, b21 = _init_linear(k21, D_H1, D_Z)
    w22, b22 = _init_linear(k22, D_H1, D_Z)
    w3, b3 = _init_linear(k3, D_Z, D_H1)
    w4, b4 = _init_linear(k4, D_H1, D_IN)

    params = dict(
        w1=w1, b1=b1, w21=w21, b21=b21, w22=w22, b22=b22,
        w3=w3, b3=b3, w4=w4, b4=b4,
    )

    recon, mu, logvar = jax.block_until_ready(vae_forward(x, eps, params, batch_tile=128))
    recon_ref, mu_ref, logvar_ref = jax.block_until_ready(vae_reference(x, eps, params))

    assert recon.shape == (B, D_IN)
    assert mu.shape == (B, D_Z) and logvar.shape == (B, D_Z)
    # bf16 MXU operands -> tolerances loosened vs. the pure-f32 check.
    assert jnp.allclose(mu, mu_ref, atol=1e-2, rtol=1e-2), "mu mismatch"
    assert jnp.allclose(logvar, logvar_ref, atol=1e-2, rtol=1e-2), "logvar mismatch"
    assert jnp.allclose(recon, recon_ref, atol=1e-2, rtol=1e-2), "recon mismatch"

    print("KERNEL_OK")
</pallas_src>

<mosaic_0001>
module attributes {stable_mosaic.version = 11 : i64} {
  func.func @vae_kernel(%arg0: i32, %arg1: memref<128x1024xbf16, #tpu.memory_space<vmem>>, %arg2: memref<128x128xf32, #tpu.memory_space<vmem>>, %arg3: memref<1024x256xbf16, #tpu.memory_space<vmem>>, %arg4: memref<1x256xf32, #tpu.memory_space<vmem>>, %arg5: memref<256x256xbf16, #tpu.memory_space<vmem>>, %arg6: memref<1x256xf32, #tpu.memory_space<vmem>>, %arg7: memref<128x256xbf16, #tpu.memory_space<vmem>>, %arg8: memref<1x256xf32, #tpu.memory_space<vmem>>, %arg9: memref<256x1024xbf16, #tpu.memory_space<vmem>>, %arg10: memref<1x1024xf32, #tpu.memory_space<vmem>>, %arg11: memref<128x1024xf32, #tpu.memory_space<vmem>>, %arg12: memref<128x256xf32, #tpu.memory_space<vmem>>) attributes {dimension_semantics = [#tpu.dimension_semantics<parallel>], iteration_bounds = array<i64: 4>, scalar_prefetch = 0 : i64, scratch_operands = 0 : i64, tpu.core_type = #tpu.core_type<tc>, window_params = [{transform_indices = @transform_0, window_bounds = array<i64: 128, 1024>}, {transform_indices = @transform_1, window_bounds = array<i64: 128, 128>}, {pipeline_mode = #tpu.pipeline_mode<synchronous>, transform_indices = @transform_2, window_bounds = array<i64: 1024, 256>}, {pipeline_mode = #tpu.pipeline_mode<synchronous>, transform_indices = @transform_3, window_bounds = array<i64: 1, 256>}, {pipeline_mode = #tpu.pipeline_mode<synchronous>, transform_indices = @transform_4, window_bounds = array<i64: 256, 256>}, {pipeline_mode = #tpu.pipeline_mode<synchronous>, transform_indices = @transform_5, window_bounds = array<i64: 1, 256>}, {pipeline_mode = #tpu.pipeline_mode<synchronous>, transform_indices = @transform_6, window_bounds = array<i64: 128, 256>}, {pipeline_mode = #tpu.pipeline_mode<synchronous>, transform_indices = @transform_7, window_bounds = array<i64: 1, 256>}, {pipeline_mode = #tpu.pipeline_mode<synchronous>, transform_indices = @transform_8, window_bounds = array<i64: 256, 1024>}, {pipeline_mode = #tpu.pipeline_mode<synchronous>, transform_indices = @transform_9, window_bounds = array<i64: 1, 1024>}, {transform_indices = @transform_10, window_bounds = array<i64: 128, 1024>}, {transform_indices = @transform_11, window_bounds = array<i64: 128, 256>}]} {
    %c0 = arith.constant 0 : index
    %c0_0 = arith.constant 0 : index
    %0 = vector.load %arg1[%c0, %c0_0] : memref<128x1024xbf16, #tpu.memory_space<vmem>>, vector<128x1024xbf16>
    %c0_1 = arith.constant 0 : index
    %c0_2 = arith.constant 0 : index
    %1 = vector.load %arg2[%c0_1, %c0_2] : memref<128x128xf32, #tpu.memory_space<vmem>>, vector<128x128xf32>
    %c0_3 = arith.constant 0 : index
    %c0_4 = arith.constant 0 : index
    %2 = vector.load %arg3[%c0_3, %c0_4] : memref<1024x256xbf16, #tpu.memory_space<vmem>>, vector<1024x256xbf16>
    %cst = arith.constant dense<0.000000e+00> : vector<128x256xf32>
    %3 = tpu.matmul %0, %2, %cst {dimension_numbers = #tpu.dot_dimension_numbers<[1], [0], [0], [1], [0, 0, 1, 1], [], []>} : vector<128x1024xbf16>, vector<1024x256xbf16>, vector<128x256xf32> -> vector<128x256xf32>
    %c0_5 = arith.constant 0 : index
    %c0_6 = arith.constant 0 : index
    %4 = vector.load %arg4[%c0_5, %c0_6] : memref<1x256xf32, #tpu.memory_space<vmem>>, vector<1x256xf32>
    %5 = vector.broadcast %4 : vector<1x256xf32> to vector<128x256xf32>
    %6 = arith.addf %3, %5 : vector<128x256xf32>
    %cst_7 = arith.constant 0.000000e+00 : f32
    %7 = vector.broadcast %cst_7 : f32 to vector<128x256xf32>
    %8 = arith.maximumf %6, %7 : vector<128x256xf32>
    %9 = arith.truncf %8 : vector<128x256xf32> to vector<128x256xbf16>
    %c0_8 = arith.constant 0 : index
    %c0_9 = arith.constant 0 : index
    %10 = vector.load %arg5[%c0_8, %c0_9] : memref<256x256xbf16, #tpu.memory_space<vmem>>, vector<256x256xbf16>
    %cst_10 = arith.constant dense<0.000000e+00> : vector<128x256xf32>
    %11 = tpu.matmul %9, %10, %cst_10 {dimension_numbers = #tpu.dot_dimension_numbers<[1], [0], [0], [1], [0, 0, 1, 1], [], []>} : vector<128x256xbf16>, vector<256x256xbf16>, vector<128x256xf32> -> vector<128x256xf32>
    %c0_11 = arith.constant 0 : index
    %c0_12 = arith.constant 0 : index
    %12 = vector.load %arg6[%c0_11, %c0_12] : memref<1x256xf32, #tpu.memory_space<vmem>>, vector<1x256xf32>
    %13 = vector.broadcast %12 : vector<1x256xf32> to vector<128x256xf32>
    %14 = arith.addf %11, %13 : vector<128x256xf32>
    %15 = vector.extract_strided_slice %14 {offsets = [0, 0], sizes = [128, 128], strides = [1, 1]} : vector<128x256xf32> to vector<128x128xf32>
    %16 = vector.extract_strided_slice %14 {offsets = [0, 128], sizes = [128, 128], strides = [1, 1]} : vector<128x256xf32> to vector<128x128xf32>
    %cst_13 = arith.constant 5.000000e-01 : f32
    %17 = vector.broadcast %cst_13 : f32 to vector<128x128xf32>
    %18 = arith.mulf %17, %16 : vector<128x128xf32>
    %19 = math.exp %18 : vector<128x128xf32>
    %20 = arith.mulf %1, %19 : vector<128x128xf32>
    %21 = arith.addf %15, %20 : vector<128x128xf32>
    %22 = arith.truncf %21 : vector<128x128xf32> to vector<128x128xbf16>
    %c0_14 = arith.constant 0 : index
    %c0_15 = arith.constant 0 : index
    %23 = vector.load %arg7[%c0_14, %c0_15] : memref<128x256xbf16, #tpu.memory_space<vmem>>, vector<128x256xbf16>
    %cst_16 = arith.constant dense<0.000000e+00> : vector<128x256xf32>
    %24 = tpu.matmul %22, %23, %cst_16 {dimension_numbers = #tpu.dot_dimension_numbers<[1], [0], [0], [1], [0, 0, 1, 1], [], []>} : vector<128x128xbf16>, vector<128x256xbf16>, vector<128x256xf32> -> vector<128x256xf32>
    %c0_17 = arith.constant 0 : index
    %c0_18 = arith.constant 0 : index
    %25 = vector.load %arg8[%c0_17, %c0_18] : memref<1x256xf32, #tpu.memory_space<vmem>>, vector<1x256xf32>
    %26 = vector.broadcast %25 : vector<1x256xf32> to vector<128x256xf32>
    %27 = arith.addf %24, %26 : vector<128x256xf32>
    %cst_19 = arith.constant 0.000000e+00 : f32
    %28 = vector.broadcast %cst_19 : f32 to vector<128x256xf32>
    %29 = arith.maximumf %27, %28 : vector<128x256xf32>
    %30 = arith.truncf %29 : vector<128x256xf32> to vector<128x256xbf16>
    %c0_20 = arith.constant 0 : index
    %c0_21 = arith.constant 0 : index
    %31 = vector.load %arg9[%c0_20, %c0_21] : memref<256x1024xbf16, #tpu.memory_space<vmem>>, vector<256x1024xbf16>
    %cst_22 = arith.constant dense<0.000000e+00> : vector<128x1024xf32>
    %32 = tpu.matmul %30, %31, %cst_22 {dimension_numbers = #tpu.dot_dimension_numbers<[1], [0], [0], [1], [0, 0, 1, 1], [], []>} : vector<128x256xbf16>, vector<256x1024xbf16>, vector<128x1024xf32> -> vector<128x1024xf32>
    %c0_23 = arith.constant 0 : index
    %c0_24 = arith.constant 0 : index
    %33 = vector.load %arg10[%c0_23, %c0_24] : memref<1x1024xf32, #tpu.memory_space<vmem>>, vector<1x1024xf32>
    %34 = vector.broadcast %33 : vector<1x1024xf32> to vector<128x1024xf32>
    %35 = arith.addf %32, %34 : vector<128x1024xf32>
    %36 = arith.negf %35 : vector<128x1024xf32>
    %37 = math.exp %36 : vector<128x1024xf32>
    %cst_25 = arith.constant 1.000000e+00 : f32
    %38 = vector.broadcast %cst_25 : f32 to vector<128x1024xf32>
    %39 = arith.addf %38, %37 : vector<128x1024xf32>
    %40 = arith.divf %38, %39 : vector<128x1024xf32>
    %c0_26 = arith.constant 0 : index
    %c0_27 = arith.constant 0 : index
    %41 = vector.load %arg11[%c0_26, %c0_27] : memref<128x1024xf32, #tpu.memory_space<vmem>>, vector<128x1024xf32>
    tpu.vector_store %arg11[%c0_26, %c0_27], %40 {strides = array<i32>} : memref<128x1024xf32, #tpu.memory_space<vmem>>, vector<128x1024xf32>,
    %c0_28 = arith.constant 0 : index
    %c0_29 = arith.constant 0 : index
    %42 = vector.load %arg12[%c0_28, %c0_29] : memref<128x256xf32, #tpu.memory_space<vmem>>, vector<128x256xf32>
    tpu.vector_store %arg12[%c0_28, %c0_29], %14 {strides = array<i32>} : memref<128x256xf32, #tpu.memory_space<vmem>>, vector<128x256xf32>,
    return
  }
  func.func @transform_0(%arg0: i32) -> (i32, i32) {
    %c0_i32 = arith.constant 0 : i32
    %c0_i32_0 = arith.constant 0 : i32
    return %arg0, %c0_i32 : i32, i32
  }
  func.func @transform_1(%arg0: i32) -> (i32, i32) {
    %c0_i32 = arith.constant 0 : i32
    %c0_i32_0 = arith.constant 0 : i32
    return %arg0, %c0_i32 : i32, i32
  }
  func.func @transform_2(%arg0: i32) -> (i32, i32) {
    %c0_i32 = arith.constant 0 : i32
    %c0_i32_0 = arith.constant 0 : i32
    %c0_i32_1 = arith.constant 0 : i32
    return %c0_i32, %c0_i32_0 : i32, i32
  }
  func.func @transform_3(%arg0: i32) -> (i32, i32) {
    %c0_i32 = arith.constant 0 : i32
    %c0_i32_0 = arith.constant 0 : i32
    %c0_i32_1 = arith.constant 0 : i32
    return %c0_i32, %c0_i32_0 : i32, i32
  }
  func.func @transform_4(%arg0: i32) -> (i32, i32) {
    %c0_i32 = arith.constant 0 : i32
    %c0_i32_0 = arith.constant 0 : i32
    %c0_i32_1 = arith.constant 0 : i32
    return %c0_i32, %c0_i32_0 : i32, i32
  }
  func.func @transform_5(%arg0: i32) -> (i32, i32) {
    %c0_i32 = arith.constant 0 : i32
    %c0_i32_0 = arith.constant 0 : i32
    %c0_i32_1 = arith.constant 0 : i32
    return %c0_i32, %c0_i32_0 : i32, i32
  }
  func.func @transform_6(%arg0: i32) -> (i32, i32) {
    %c0_i32 = arith.constant 0 : i32
    %c0_i32_0 = arith.constant 0 : i32
    %c0_i32_1 = arith.constant 0 : i32
    return %c0_i32, %c0_i32_0 : i32, i32
  }
  func.func @transform_7(%arg0: i32) -> (i32, i32) {
    %c0_i32 = arith.constant 0 : i32
    %c0_i32_0 = arith.constant 0 : i32
    %c0_i32_1 = arith.constant 0 : i32
    return %c0_i32, %c0_i32_0 : i32, i32
  }
  func.func @transform_8(%arg0: i32) -> (i32, i32) {
    %c0_i32 = arith.constant 0 : i32
    %c0_i32_0 = arith.constant 0 : i32
    %c0_i32_1 = arith.constant 0 : i32
    return %c0_i32, %c0_i32_0 : i32, i32
  }
  func.func @transform_9(%arg0: i32) -> (i32, i32) {
    %c0_i32 = arith.constant 0 : i32
    %c0_i32_0 = arith.constant 0 : i32
    %c0_i32_1 = arith.constant 0 : i32
    return %c0_i32, %c0_i32_0 : i32, i32
  }
  func.func @transform_10(%arg0: i32) -> (i32, i32) {
    %c0_i32 = arith.constant 0 : i32
    %c0_i32_0 = arith.constant 0 : i32
    return %arg0, %c0_i32 : i32, i32
  }
  func.func @transform_11(%arg0: i32) -> (i32, i32) {
    %c0_i32 = arith.constant 0 : i32
    %c0_i32_0 = arith.constant 0 : i32
    return %arg0, %c0_i32 : i32, i32
  }
}

</mosaic_0001>

<llo_original>
// kernel: tpu_custom_call.1
$region0: #{tpu_custom_call.1}
  #allocation0 [shape = 'u32[]', space=smem, size = 0x4, offset = 0x4, fixed_abs, tag = 'smem constant byte address 0x4 - core index']
  #allocation1 [shape = 'u32[144,128]{1,0:T(1,128)}', space=vmem, size = 0x12000, scoped, tag = 'internal scratch']
  %s0 = inlined_call_operand.hbm [shape: bf16[512,1024], index: 0, kind: input, shape index: {}]
  %s1 = inlined_call_operand.hbm [shape: f32[512,128], index: 1, kind: input, shape index: {}]
  %s2 = inlined_call_operand.hbm [shape: bf16[1024,256], index: 2, kind: input, shape index: {}]
  %s3 = inlined_call_operand.hbm [shape: f32[1,256], index: 3, kind: input, shape index: {}]
  %s4 = inlined_call_operand.hbm [shape: bf16[256,256], index: 4, kind: input, shape index: {}]
  %s5 = inlined_call_operand.hbm [shape: f32[1,256], index: 5, kind: input, shape index: {}]
  %s6 = inlined_call_operand.hbm [shape: bf16[128,256], index: 6, kind: input, shape index: {}]
  %s7 = inlined_call_operand.hbm [shape: f32[1,256], index: 7, kind: input, shape index: {}]
  %s8 = inlined_call_operand.hbm [shape: bf16[256,1024], index: 8, kind: input, shape index: {}]
  %s9 = inlined_call_operand.hbm [shape: f32[1,1024], index: 9, kind: input, shape index: {}]
  %s10 = inlined_call_operand.hbm [shape: f32[512,1024], index: 10, kind: output, shape index: {0}]
  %s11 = inlined_call_operand.hbm [shape: f32[512,256], index: 11, kind: output, shape index: {1}]
  %12 = xla_tuple %s10, %s11
  %s13 = sld [smem:[#allocation0]]
  $region121: #{tpu_custom_call.1} parent=0
    _
  %s15 = ssub.s32 1, %s13
  %s16 = scalar_select 0, %s15, %s13
  $region1: #{tpu_custom_call.1} parent=0
    #allocation2 [shape = 'u8[524288]{0}', space=vmem, size = 0x80000, scoped, tag = 'input window, operand 0']
    #allocation3 [shape = 's32[2]{0}', space=sflag, size = 0x8, scoped, tag = 'scoped memory for tpu_custom_call.1']
    #allocation4 [shape = 's32[2]{0}', space=sflag, size = 0x8, scoped, tag = 'scoped memory for tpu_custom_call.1']
    #allocation5 [shape = 'u8[131072]{0}', space=vmem, size = 0x20000, scoped, tag = 'input window, operand 1']
    #allocation6 [shape = 's32[2]{0}', space=sflag, size = 0x8, scoped, tag = 'scoped memory for tpu_custom_call.1']
    #allocation7 [shape = 'u8[524288]{0}', space=vmem, size = 0x80000, scoped, tag = 'input window, operand 2, single buffered']
    #allocation8 [shape = 'u8[1024]{0}', space=vmem, size = 0x400, scoped, tag = 'input window, operand 3, single buffered']
    #allocation9 [shape = 's32[1]{0}', space=sflag, size = 0x4, scoped, tag = 'scoped memory for tpu_custom_call.1']
    #allocation10 [shape = 'u8[131072]{0}', space=vmem, size = 0x20000, scoped, tag = 'input window, operand 4, single buffered']
    #allocation11 [shape = 'u8[1024]{0}', space=vmem, size = 0x400, scoped, tag = 'input window, operand 5, single buffered']
    #allocation12 [shape = 's32[1]{0}', space=sflag, size = 0x4, scoped, tag = 'scoped memory for tpu_custom_call.1']
    #allocation13 [shape = 'u8[65536]{0}', space=vmem, size = 0x10000, scoped, tag = 'input window, operand 6, single buffered']
    #allocation14 [shape = 'u8[1024]{0}', space=vmem, size = 0x400, scoped, tag = 'input window, operand 7, single buffered']
    #allocation15 [shape = 's32[1]{0}', space=sflag, size = 0x4, scoped, tag = 'scoped memory for tpu_custom_call.1']
    #allocation16 [shape = 'u8[524288]{0}', space=vmem, size = 0x80000, scoped, tag = 'input window, operand 8, single buffered']
    #allocation17 [shape = 'u8[4096]{0}', space=vmem, size = 0x1000, scoped, tag = 'input window, operand 9, single buffered']
    #allocation18 [shape = 's32[1]{0}', space=sflag, size = 0x4, scoped, tag = 'scoped memory for tpu_custom_call.1']
    #allocation19 [shape = 'u8[1048576]{0}', space=vmem, size = 0x100000, scoped, tag = 'output window, operand 0']
    #allocation20 [shape = 'u8[262144]{0}', space=vmem, size = 0x40000, scoped, tag = 'output window, operand 1']
    #allocation21 [shape = 's32[2]{0}', space=sflag, size = 0x8, scoped, tag = 'scoped memory for tpu_custom_call.1']
    %17 = vsyncpa [#allocation3], 0
    %s18 = scalar_lea.sflag [#allocation3], 1
    %19 = vsyncpa %s18, 0
    %20 = vsyncpa [#allocation6], 0
    %s21 = scalar_lea.sflag [#allocation6], 1
    %22 = vsyncpa %s21, 0
    %23 = vsyncpa [#allocation9], 0
    %24 = vsyncpa [#allocation12], 0
    %25 = vsyncpa [#allocation15], 0
    %26 = vsyncpa [#allocation18], 0
    %27 = vsyncpa [#allocation4], 0
    %s28 = scalar_lea.sflag [#allocation4], 1
    %29 = vsyncpa %s28, 0
    %30 = vsyncpa [#allocation21], 0
    %s31 = scalar_lea.sflag [#allocation21], 1
    %32 = vsyncpa %s31, 0
    loop: start=0, step=1, limit=6
    $region2: #{tpu_custom_call.1} parent=1 // loop_pre_header
      _
    $region3: #{tpu_custom_call.1} parent=1 // loop_header
      %s34 = sphi 0, %s38
      %p35 = scmp.ge.s32.totalorder %s34, 6
      %s44 = sphi 0, %s46
      %s47 = sphi 0, %s44
      %s48 = sphi 0, %s47
      %s64 = sphi 0, %s48
      %s70 = sphi 0, %s72
      %s73 = sphi 0, %s70
      %s74 = sphi 0, %s73
      %s90 = sphi 0, %s74
      %s94 = sphi 0, %s94
      %s96 = sphi 0, %s94
      %s97 = sphi 0, %s96
      %s111 = sphi 0, %s97
      %s115 = sphi 0, %s115
      %s117 = sphi 0, %s115
      %s118 = sphi 0, %s117
      %s132 = sphi 0, %s118
      %s136 = sphi 0, %s136
      %s138 = sphi 0, %s136
      %s139 = sphi 0, %s138
      %s153 = sphi 0, %s139
      %s157 = sphi 0, %s157
      %s159 = sphi 0, %s157
      %s160 = sphi 0, %s159
      %s174 = sphi 0, %s160
      %s178 = sphi 0, %s178
      %s180 = sphi 0, %s178
      %s181 = sphi 0, %s180
      %s195 = sphi 0, %s181
      %s199 = sphi 0, %s199
      %s201 = sphi 0, %s199
      %s202 = sphi 0, %s201
      %s216 = sphi 0, %s202
      %s220 = sphi 0, %s220
      %s222 = sphi 0, %s220
      %s223 = sphi 0, %s222
      %s237 = sphi 0, %s223
      %s241 = sphi 0, %s241
      %s243 = sphi 0, %s241
      %s244 = sphi 0, %s243
      %s258 = sphi 0, %s244
      %s264 = sphi 0, %s266
      %s267 = sphi 0, %s264
      %s268 = sphi 0, %s267
      %s284 = sphi 0, %s268
      %s290 = sphi 0, %s292
      %s293 = sphi 0, %s290
      %s294 = sphi 0, %s293
      %s310 = sphi 0, %s294
    $region4: #{tpu_custom_call.1} parent=1 // loop_header_branch
      %37 = sbr.rel (%p35) target = $region8
    $region5: #{tpu_custom_call.1} parent=1 // loop_body
      %s39 = ssub.s32 %s34, 1
      %s40 = ssub.s32 %s34, 2
      %s41 = sadd.s32 %s34, 1
      %s42 = ssub.s32 %s34, %s41
      %p43 = scmp.eq.s32.totalorder %s42, 0
      %s45 = sadd.s32 %s44, 1
      %s46 = scalar_select %p43, %s44, %s45
      %p49 = pneg %p43
      %p50 = scmp.eq.s32.totalorder %s34, 3
      %p51 = por %p49, %p50
      %p52 = scmp.ne.s32.totalorder %s44, %s47
      %p53 = scmp.eq.s32.totalorder %s34, 0
      %p54 = por %p52, %p53
      %p55 = scmp.ne.s32.totalorder %s44, %s47
      %p56 = scmp.eq.s32.totalorder %s39, 3
      %p57 = por %p55, %p56
      %p58 = scmp.ne.s32.totalorder %s47, %s48
      %p59 = scmp.eq.s32.totalorder %s39, 0
      %p60 = por %p58, %p59
      %p61 = scmp.ne.s32.totalorder %s47, %s48
      %p62 = scmp.eq.s32.totalorder %s40, 3
      %p63 = por %p61, %p62
      %p65 = scmp.ne.s32.totalorder %s48, %s64
      %p66 = scmp.eq.s32.totalorder %s40, 0
      %p67 = por %p65, %p66
      %s68 = ssub.s32 %s34, %s41
      %p69 = scmp.eq.s32.totalorder %s68, 0
      %s71 = sadd.s32 %s70, 1
      %s72 = scalar_select %p69, %s70, %s71
      %p75 = pneg %p69
      %p76 = scmp.eq.s32.totalorder %s34, 3
      %p77 = por %p75, %p76
      %p78 = scmp.ne.s32.totalorder %s70, %s73
      %p79 = scmp.eq.s32.totalorder %s34, 0
      %p80 = por %p78, %p79
      %p81 = scmp.ne.s32.totalorder %s70, %s73
      %p82 = scmp.eq.s32.totalorder %s39, 3
      %p83 = por %p81, %p82
      %p84 = scmp.ne.s32.totalorder %s73, %s74
      %p85 = scmp.eq.s32.totalorder %s39, 0
      %p86 = por %p84, %p85
      %p87 = scmp.ne.s32.totalorder %s73, %s74
      %p88 = scmp.eq.s32.totalorder %s40, 3
      %p89 = por %p87, %p88
      %p91 = scmp.ne.s32.totalorder %s74, %s90
      %p92 = scmp.eq.s32.totalorder %s40, 0
      %p93 = por %p91, %p92
      %s95 = sadd.s32 %s94, 1
      %p98 = scmp.eq.s32.totalorder %s34, 3
      %p99 = scmp.ne.s32.totalorder %s94, %s96
      %p100 = scmp.eq.s32.totalorder %s34, 0
      %p101 = por %p99, %p100
      %p102 = scmp.ne.s32.totalorder %s94, %s96
      %p103 = scmp.eq.s32.totalorder %s39, 3
      %p104 = por %p102, %p103
      %p105 = scmp.ne.s32.totalorder %s96, %s97
      %p106 = scmp.eq.s32.totalorder %s39, 0
      %p107 = por %p105, %p106
      %p108 = scmp.ne.s32.totalorder %s96, %s97
      %p109 = scmp.eq.s32.totalorder %s40, 3
      %p110 = por %p108, %p109
      %p112 = scmp.ne.s32.totalorder %s97, %s111
      %p113 = scmp.eq.s32.totalorder %s40, 0
      %p114 = por %p112, %p113
      %s116 = sadd.s32 %s115, 1
      %p119 = scmp.eq.s32.totalorder %s34, 3
      %p120 = scmp.ne.s32.totalorder %s115, %s117
      %p121 = scmp.eq.s32.totalorder %s34, 0
      %p122 = por %p120, %p121
      %p123 = scmp.ne.s32.totalorder %s115, %s117
      %p124 = scmp.eq.s32.totalorder %s39, 3
      %p125 = por %p123, %p124
      %p126 = scmp.ne.s32.totalorder %s117, %s118
      %p127 = scmp.eq.s32.totalorder %s39, 0
      %p128 = por %p126, %p127
      %p129 = scmp.ne.s32.totalorder %s117, %s118
      %p130 = scmp.eq.s32.totalorder %s40, 3
      %p131 = por %p129, %p130
      %p133 = scmp.ne.s32.totalorder %s118, %s132
      %p134 = scmp.eq.s32.totalorder %s40, 0
      %p135 = por %p133, %p134
      %s137 = sadd.s32 %s136, 1
      %p140 = scmp.eq.s32.totalorder %s34, 3
      %p141 = scmp.ne.s32.totalorder %s136, %s138
      %p142 = scmp.eq.s32.totalorder %s34, 0
      %p143 = por %p141, %p142
      %p144 = scmp.ne.s32.totalorder %s136, %s138
      %p145 = scmp.eq.s32.totalorder %s39, 3
      %p146 = por %p144, %p145
      %p147 = scmp.ne.s32.totalorder %s138, %s139
      %p148 = scmp.eq.s32.totalorder %s39, 0
      %p149 = por %p147, %p148
      %p150 = scmp.ne.s32.totalorder %s138, %s139
      %p151 = scmp.eq.s32.totalorder %s40, 3
      %p152 = por %p150, %p151
      %p154 = scmp.ne.s32.totalorder %s139, %s153
      %p155 = scmp.eq.s32.totalorder %s40, 0
      %p156 = por %p154, %p155
      %s158 = sadd.s32 %s157, 1
      %p161 = scmp.eq.s32.totalorder %s34, 3
      %p162 = scmp.ne.s32.totalorder %s157, %s159
      %p163 = scmp.eq.s32.totalorder %s34, 0
      %p164 = por %p162, %p163
      %p165 = scmp.ne.s32.totalorder %s157, %s159
      %p166 = scmp.eq.s32.totalorder %s39, 3
      %p167 = por %p165, %p166
      %p168 = scmp.ne.s32.totalorder %s159, %s160
      %p169 = scmp.eq.s32.totalorder %s39, 0
      %p170 = por %p168, %p169
      %p171 = scmp.ne.s32.totalorder %s159, %s160
      %p172 = scmp.eq.s32.totalorder %s40, 3
      %p173 = por %p171, %p172
      %p175 = scmp.ne.s32.totalorder %s160, %s174
      %p176 = scmp.eq.s32.totalorder %s40, 0
      %p177 = por %p175, %p176
      %s179 = sadd.s32 %s178, 1
      %p182 = scmp.eq.s32.totalorder %s34, 3
      %p183 = scmp.ne.s32.totalorder %s178, %s180
      %p184 = scmp.eq.s32.totalorder %s34, 0
      %p185 = por %p183, %p184
      %p186 = scmp.ne.s32.totalorder %s178, %s180
      %p187 = scmp.eq.s32.totalorder %s39, 3
      %p188 = por %p186, %p187
      %p189 = scmp.ne.s32.totalorder %s180, %s181
      %p190 = scmp.eq.s32.totalorder %s39, 0
      %p191 = por %p189, %p190
      %p192 = scmp.ne.s32.totalorder %s180, %s181
      %p193 = scmp.eq.s32.totalorder %s40, 3
      %p194 = por %p192, %p193
      %p196 = scmp.ne.s32.totalorder %s181, %s195
      %p197 = scmp.eq.s32.totalorder %s40, 0
      %p198 = por %p196, %p197
      %s200 = sadd.s32 %s199, 1
      %p203 = scmp.eq.s32.totalorder %s34, 3
      %p204 = scmp.ne.s32.totalorder %s199, %s201
      %p205 = scmp.eq.s32.totalorder %s34, 0
      %p206 = por %p204, %p205
      %p207 = scmp.ne.s32.totalorder %s199, %s201
      %p208 = scmp.eq.s32.totalorder %s39, 3
      %p209 = por %p207, %p208
      %p210 = scmp.ne.s32.totalorder %s201, %s202
      %p211 = scmp.eq.s32.totalorder %s39, 0
      %p212 = por %p210, %p211
      %p213 = scmp.ne.s32.totalorder %s201, %s202
      %p214 = scmp.eq.s32.totalorder %s40, 3
      %p215 = por %p213, %p214
      %p217 = scmp.ne.s32.totalorder %s202, %s216
      %p218 = scmp.eq.s32.totalorder %s40, 0
      %p219 = por %p217, %p218
      %s221 = sadd.s32 %s220, 1
      %p224 = scmp.eq.s32.totalorder %s34, 3
      %p225 = scmp.ne.s32.totalorder %s220, %s222
      %p226 = scmp.eq.s32.totalorder %s34, 0
      %p227 = por %p225, %p226
      %p228 = scmp.ne.s32.totalorder %s220, %s222
      %p229 = scmp.eq.s32.totalorder %s39, 3
      %p230 = por %p228, %p229
      %p231 = scmp.ne.s32.totalorder %s222, %s223
      %p232 = scmp.eq.s32.totalorder %s39, 0
      %p233 = por %p231, %p232
      %p234 = scmp.ne.s32.totalorder %s222, %s223
      %p235 = scmp.eq.s32.totalorder %s40, 3
      %p236 = por %p234, %p235
      %p238 = scmp.ne.s32.totalorder %s223, %s237
      %p239 = scmp.eq.s32.totalorder %s40, 0
      %p240 = por %p238, %p239
      %s242 = sadd.s32 %s241, 1
      %p245 = scmp.eq.s32.totalorder %s34, 3
      %p246 = scmp.ne.s32.totalorder %s241, %s243
      %p247 = scmp.eq.s32.totalorder %s34, 0
      %p248 = por %p246, %p247
      %p249 = scmp.ne.s32.totalorder %s241, %s243
      %p250 = scmp.eq.s32.totalorder %s39, 3
      %p251 = por %p249, %p250
      %p252 = scmp.ne.s32.totalorder %s243, %s244
      %p253 = scmp.eq.s32.totalorder %s39, 0
      %p254 = por %p252, %p253
      %p255 = scmp.ne.s32.totalorder %s243, %s244
      %p256 = scmp.eq.s32.totalorder %s40, 3
      %p257 = por %p255, %p256
      %p259 = scmp.ne.s32.totalorder %s244, %s258
      %p260 = scmp.eq.s32.totalorder %s40, 0
      %p261 = por %p259, %p260
      %s262 = ssub.s32 %s34, %s41
      %p263 = scmp.eq.s32.totalorder %s262, 0
      %s265 = sadd.s32 %s264, 1
      %s266 = scalar_select %p263, %s264, %s265
      %p269 = pneg %p263
      %p270 = scmp.eq.s32.totalorder %s34, 3
      %p271 = por %p269, %p270
      %p272 = scmp.ne.s32.totalorder %s264, %s267
      %p273 = scmp.eq.s32.totalorder %s34, 0
      %p274 = por %p272, %p273
      %p275 = scmp.ne.s32.totalorder %s264, %s267
      %p276 = scmp.eq.s32.totalorder %s39, 3
      %p277 = por %p275, %p276
      %p278 = scmp.ne.s32.totalorder %s267, %s268
      %p279 = scmp.eq.s32.totalorder %s39, 0
      %p280 = por %p278, %p279
      %p281 = scmp.ne.s32.totalorder %s267, %s268
      %p282 = scmp.eq.s32.totalorder %s40, 3
      %p283 = por %p281, %p282
      %p285 = scmp.ne.s32.totalorder %s268, %s284
      %p286 = scmp.eq.s32.totalorder %s40, 0
      %p287 = por %p285, %p286
      %s288 = ssub.s32 %s34, %s41
      %p289 = scmp.eq.s32.totalorder %s288, 0
      %s291 = sadd.s32 %s290, 1
      %s292 = scalar_select %p289, %s290, %s291
      %p295 = pneg %p289
      %p296 = scmp.eq.s32.totalorder %s34, 3
      %p297 = por %p295, %p296
      %p298 = scmp.ne.s32.totalorder %s290, %s293
      %p299 = scmp.eq.s32.totalorder %s34, 0
      %p300 = por %p298, %p299
      %p301 = scmp.ne.s32.totalorder %s290, %s293
      %p302 = scmp.eq.s32.totalorder %s39, 3
      %p303 = por %p301, %p302
      %p304 = scmp.ne.s32.totalorder %s293, %s294
      %p305 = scmp.eq.s32.totalorder %s39, 0
      %p306 = por %p304, %p305
      %p307 = scmp.ne.s32.totalorder %s293, %s294
      %p308 = scmp.eq.s32.totalorder %s40, 3
      %p309 = por %p307, %p308
      %p311 = scmp.ne.s32.totalorder %s294, %s310
      %p312 = scmp.eq.s32.totalorder %s40, 0
      %p313 = por %p311, %p312
      %p314 = scmp.le.s32.totalorder 1, %s34
      %p315 = scmp.lt.s32.totalorder %s34, 5
      %p316 = pnand %p314, %p315
      %p317 = pneg %p316
      // Predicated region
      $region9: #{tpu_custom_call.1} parent=5 // pred_check
        _
      $region10: #{tpu_custom_call.1} parent=5 // pred_check_branch
        %319 = sbr.rel (%p316) target = $region12
      $region11: #{tpu_custom_call.1} parent=5 // pred_region
        %s320 = ssub.s32 %s34, 1
        // Predicated region
        $region13: #{tpu_custom_call.1} parent=11 // pred_check
          %p321 = pneg %p107
        $region14: #{tpu_custom_call.1} parent=11 // pred_check_branch
          %323 = sbr.rel (%p321) target = $region16
        $region15: #{tpu_custom_call.1} parent=11 // pred_region
          %s325 = ssub.s32 16384, 16384
          %326 = vsyncadd [#allocation6], %s325
          %s327 = sshll.u32 [#allocation7], 4
          %s328 = int_to_ptr.vmem [resolvable:$true] %s327
          %333 = dma.hbm_to_vmem [thread:$0]  %s2, 16384, %s328, [#allocation6], 128, 128, 8
        $region16: #{tpu_custom_call.1} parent=11 // pred_fallthru
          _
        // Predicated region
        $region17: #{tpu_custom_call.1} parent=11 // pred_check
          %p334 = pneg %p128
        $region18: #{tpu_custom_call.1} parent=11 // pred_check_branch
          %336 = sbr.rel (%p334) target = $region20
        $region19: #{tpu_custom_call.1} parent=11 // pred_region
          %s338 = ssub.s32 32, 32
          %339 = vsyncadd [#allocation9], %s338
          %s341 = sshll.u32 [#allocation8], 4
          %s342 = int_to_ptr.vmem [resolvable:$true] %s341
          %344 = dma.hbm_to_vmem [thread:$0]  %s3, 32, %s342, [#allocation9]
        $region20: #{tpu_custom_call.1} parent=11 // pred_fallthru
          _
        // Predicated region
        $region21: #{tpu_custom_call.1} parent=11 // pred_check
          %p345 = pneg %p149
        $region22: #{tpu_custom_call.1} parent=11 // pred_check_branch
          %347 = sbr.rel (%p345) target = $region24
        $region23: #{tpu_custom_call.1} parent=11 // pred_region
          %s349 = ssub.s32 4096, 4096
          %350 = vsyncadd [#allocation9], %s349
          %s351 = sshll.u32 [#allocation10], 4
          %s352 = int_to_ptr.vmem [resolvable:$true] %s351
          %357 = dma.hbm_to_vmem [thread:$0]  %s4, 4096, %s352, [#allocation9], 128, 128, 8
        $region24: #{tpu_custom_call.1} parent=11 // pred_fallthru
          _
        // Predicated region
        $region25: #{tpu_custom_call.1} parent=11 // pred_check
          %p358 = pneg %p170
        $region26: #{tpu_custom_call.1} parent=11 // pred_check_branch
          %360 = sbr.rel (%p358) target = $region28
        $region27: #{tpu_custom_call.1} parent=11 // pred_region
          %s362 = ssub.s32 32, 32
          %363 = vsyncadd [#allocation12], %s362
          %s365 = sshll.u32 [#allocation11], 4
          %s366 = int_to_ptr.vmem [resolvable:$true] %s365
          %368 = dma.hbm_to_vmem [thread:$0]  %s5, 32, %s366, [#allocation12]
        $region28: #{tpu_custom_call.1} parent=11 // pred_fallthru
          _
        // Predicated region
        $region29: #{tpu_custom_call.1} parent=11 // pred_check
          %p369 = pneg %p191
        $region30: #{tpu_custom_call.1} parent=11 // pred_check_branch
          %371 = sbr.rel (%p369) target = $region32
        $region31: #{tpu_custom_call.1} parent=11 // pred_region
          %s373 = ssub.s32 2048, 2048
          %374 = vsyncadd [#allocation12], %s373
          %s375 = sshll.u32 [#allocation13], 4
          %s376 = int_to_ptr.vmem [resolvable:$true] %s375
          %381 = dma.hbm_to_vmem [thread:$0]  %s6, 2048, %s376, [#allocation12], 128, 128, 8
        $region32: #{tpu_custom_call.1} parent=11 // pred_fallthru
          _
        // Predicated region
        $region33: #{tpu_custom_call.1} parent=11 // pred_check
          %p382 = pneg %p212
        $region34: #{tpu_custom_call.1} parent=11 // pred_check_branch
          %384 = sbr.rel (%p382) target = $region36
        $region35: #{tpu_custom_call.1} parent=11 // pred_region
          %s386 = ssub.s32 32, 32
          %387 = vsyncadd [#allocation15], %s386
          %s389 = sshll.u32 [#allocation14], 4
          %s390 = int_to_ptr.vmem [resolvable:$true] %s389
          %392 = dma.hbm_to_vmem [thread:$0]  %s7, 32, %s390, [#allocation15]
        $region36: #{tpu_custom_call.1} parent=11 // pred_fallthru
          _
        // Predicated region
        $region37: #{tpu_custom_call.1} parent=11 // pred_check
          %p393 = pneg %p233
        $region38: #{tpu_custom_call.1} parent=11 // pred_check_branch
          %395 = sbr.rel (%p393) target = $region40
        $region39: #{tpu_custom_call.1} parent=11 // pred_region
          %s397 = ssub.s32 16384, 16384
          %398 = vsyncadd [#allocation15], %s397
          %s399 = sshll.u32 [#allocation16], 4
          %s400 = int_to_ptr.vmem [resolvable:$true] %s399
          %405 = dma.hbm_to_vmem [thread:$0]  %s8, 16384, %s400, [#allocation15], 512, 512, 32
        $region40: #{tpu_custom_call.1} parent=11 // pred_fallthru
          _
        // Predicated region
        $region41: #{tpu_custom_call.1} parent=11 // pred_check
          %p406 = pneg %p254
        $region42: #{tpu_custom_call.1} parent=11 // pred_check_branch
          %408 = sbr.rel (%p406) target = $region44
        $region43: #{tpu_custom_call.1} parent=11 // pred_region
          %s410 = ssub.s32 128, 128
          %411 = vsyncadd [#allocation18], %s410
          %s413 = sshll.u32 [#allocation17], 4
          %s414 = int_to_ptr.vmem [resolvable:$true] %s413
          %416 = dma.hbm_to_vmem [thread:$0]  %s9, 128, %s414, [#allocation18]
        $region44: #{tpu_custom_call.1} parent=11 // pred_fallthru
          _
      $region12: #{tpu_custom_call.1} parent=5 // pred_fallthru
        _
      %p417 = scmp.lt.s32.totalorder %s34, 4
      // Predicated region
      $region45: #{tpu_custom_call.1} parent=5 // pred_check
        %p418 = pneg %p417
      $region46: #{tpu_custom_call.1} parent=5 // pred_check_branch
        %420 = sbr.rel (%p418) target = $region48
      $region47: #{tpu_custom_call.1} parent=5 // pred_region
        // Predicated region
        $region49: #{tpu_custom_call.1} parent=47 // pred_check
          %p421 = pneg %p54
        $region50: #{tpu_custom_call.1} parent=47 // pred_check_branch
          %423 = sbr.rel (%p421) target = $region52
        $region51: #{tpu_custom_call.1} parent=47 // pred_region
          %s424 = sand.u32 %s44, 1
          %s425 = scalar_lea.sflag [#allocation3], %s424
          %s426 = sand.u32 %s44, 1
          %s427 = smul.addr %s426, 512
          %s428 = scalar_lea.vmem [#allocation2], %s427
          %s429 = smul.u32 16, %s34
          %s431 = ssub.s32 8192, 8192
          %432 = vsyncadd %s425, %s431
          %s433 = smul.addr %s429, 8
          %s434 = smul.addr %s433, 64
          %s435 = scalar_lea.hbm %s0, %s434
          %s436 = sshll.u32 %s428, 4
          %s437 = int_to_ptr.vmem [resolvable:$true] %s436
          %442 = dma.hbm_to_vmem [thread:$0]  %s435, 8192, %s437, %s425, 512, 512, 32
        $region52: #{tpu_custom_call.1} parent=47 // pred_fallthru
          _
        // Predicated region
        $region53: #{tpu_custom_call.1} parent=47 // pred_check
          %p443 = pneg %p80
        $region54: #{tpu_custom_call.1} parent=47 // pred_check_branch
          %445 = sbr.rel (%p443) target = $region56
        $region55: #{tpu_custom_call.1} parent=47 // pred_region
          %s446 = sand.u32 %s34, 1
          %s447 = scalar_lea.sflag [#allocation6], %s446
          %s448 = sand.u32 %s70, 1
          %s449 = smul.addr %s448, 128
          %s450 = scalar_lea.vmem [#allocation5], %s449
          %s451 = smul.u32 16, %s34
          %s453 = ssub.s32 2048, 2048
          %454 = vsyncadd %s447, %s453
          %s455 = smul.addr %s451, 128
          %s456 = scalar_lea.hbm %s1, %s455
          %s457 = sshll.u32 %s450, 4
          %s458 = int_to_ptr.vmem [resolvable:$true] %s457
          %463 = dma.hbm_to_vmem [thread:$0]  %s456, 2048, %s458, %s447, 128, 128, 8
        $region56: #{tpu_custom_call.1} parent=47 // pred_fallthru
          _
      $region48: #{tpu_custom_call.1} parent=5 // pred_fallthru
        _
      %p464 = scmp.le.s32.totalorder 1, %s34
      %p465 = scmp.lt.s32.totalorder %s34, 5
      %p466 = pnand %p464, %p465
      %p467 = pneg %p466
      // Predicated region
      $region57: #{tpu_custom_call.1} parent=5 // pred_check
        _
      $region58: #{tpu_custom_call.1} parent=5 // pred_check_branch
        %469 = sbr.rel (%p466) target = $region60
      $region59: #{tpu_custom_call.1} parent=5 // pred_region
        %s470 = ssub.s32 %s34, 1
        %s471 = sand.u32 %s47, 1
        %s472 = scalar_lea.sflag [#allocation3], %s471
        %s473 = sand.u32 %s47, 1
        %s474 = smul.addr %s473, 512
        %s475 = scalar_lea.vmem [#allocation2], %s474
        // Predicated region
        $region61: #{tpu_custom_call.1} parent=59 // pred_check
          %p476 = pneg %p60
        $region62: #{tpu_custom_call.1} parent=59 // pred_check_branch
          %478 = sbr.rel (%p476) target = $region64
        $region63: #{tpu_custom_call.1} parent=59 // pred_region
          %479 = dma.done %s472, 8192
        $region64: #{tpu_custom_call.1} parent=59 // pred_fallthru
          _
        %s480 = sand.u32 %s39, 1
        %s481 = scalar_lea.sflag [#allocation6], %s480
        %s482 = sand.u32 %s73, 1
        %s483 = smul.addr %s482, 128
        %s484 = scalar_lea.vmem [#allocation5], %s483
        // Predicated region
        $region65: #{tpu_custom_call.1} parent=59 // pred_check
          %p485 = pneg %p86
        $region66: #{tpu_custom_call.1} parent=59 // pred_check_branch
          %487 = sbr.rel (%p485) target = $region68
        $region67: #{tpu_custom_call.1} parent=59 // pred_region
          %488 = dma.done %s481, 2048
        $region68: #{tpu_custom_call.1} parent=59 // pred_fallthru
          _
        // Predicated region
        $region69: #{tpu_custom_call.1} parent=59 // pred_check
          %p489 = pneg %p107
        $region70: #{tpu_custom_call.1} parent=59 // pred_check_branch
          %491 = sbr.rel (%p489) target = $region72
        $region71: #{tpu_custom_call.1} parent=59 // pred_region
          %492 = dma.done [#allocation6], 16384
        $region72: #{tpu_custom_call.1} parent=59 // pred_fallthru
          _
        // Predicated region
        $region73: #{tpu_custom_call.1} parent=59 // pred_check
          %p493 = pneg %p128
        $region74: #{tpu_custom_call.1} parent=59 // pred_check_branch
          %495 = sbr.rel (%p493) target = $region76
        $region75: #{tpu_custom_call.1} parent=59 // pred_region
          %496 = dma.done [#allocation9], 32
        $region76: #{tpu_custom_call.1} parent=59 // pred_fallthru
          _
        // Predicated region
        $region77: #{tpu_custom_call.1} parent=59 // pred_check
          %p497 = pneg %p149
        $region78: #{tpu_custom_call.1} parent=59 // pred_check_branch
          %499 = sbr.rel (%p497) target = $region80
        $region79: #{tpu_custom_call.1} parent=59 // pred_region
          %500 = dma.done [#allocation9], 4096
        $region80: #{tpu_custom_call.1} parent=59 // pred_fallthru
          _
        // Predicated region
        $region81: #{tpu_custom_call.1} parent=59 // pred_check
          %p501 = pneg %p170
        $region82: #{tpu_custom_call.1} parent=59 // pred_check_branch
          %503 = sbr.rel (%p501) target = $region84
        $region83: #{tpu_custom_call.1} parent=59 // pred_region
          %504 = dma.done [#allocation12], 32
        $region84: #{tpu_custom_call.1} parent=59 // pred_fallthru
          _
        // Predicated region
        $region85: #{tpu_custom_call.1} parent=59 // pred_check
          %p505 = pneg %p191
        $region86: #{tpu_custom_call.1} parent=59 // pred_check_branch
          %507 = sbr.rel (%p505) target = $region88
        $region87: #{tpu_custom_call.1} parent=59 // pred_region
          %508 = dma.done [#allocation12], 2048
        $region88: #{tpu_custom_call.1} parent=59 // pred_fallthru
          _
        // Predicated region
        $region89: #{tpu_custom_call.1} parent=59 // pred_check
          %p509 = pneg %p212
        $region90: #{tpu_custom_call.1} parent=59 // pred_check_branch
          %511 = sbr.rel (%p509) target = $region92
        $region91: #{tpu_custom_call.1} parent=59 // pred_region
          %512 = dma.done [#allocation15], 32
        $region92: #{tpu_custom_call.1} parent=59 // pred_fallthru
          _
        // Predicated region
        $region93: #{tpu_custom_call.1} parent=59 // pred_check
          %p513 = pneg %p233
        $region94: #{tpu_custom_call.1} parent=59 // pred_check_branch
          %515 = sbr.rel (%p513) target = $region96
        $region95: #{tpu_custom_call.1} parent=59 // pred_region
          %516 = dma.done [#allocation15], 16384
        $region96: #{tpu_custom_call.1} parent=59 // pred_fallthru
          _
        // Predicated region
        $region97: #{tpu_custom_call.1} parent=59 // pred_check
          %p517 = pneg %p254
        $region98: #{tpu_custom_call.1} parent=59 // pred_check_branch
          %519 = sbr.rel (%p517) target = $region100
        $region99: #{tpu_custom_call.1} parent=59 // pred_region
          %520 = dma.done [#allocation18], 128
        $region100: #{tpu_custom_call.1} parent=59 // pred_fallthru
          _
        %s521 = sand.u32 %s47, 1
        %s522 = scalar_lea.sflag [#allocation3], %s521
        %s523 = sand.u32 %s47, 1
        %s524 = smul.addr %s523, 512
        %s525 = scalar_lea.vmem [#allocation2], %s524
        %p526 = pneg %p60
        %p527 = pneg %p57
        %s528 = sand.u32 %s39, 1
        %s529 = scalar_lea.sflag [#allocation6], %s528
        %s530 = sand.u32 %s73, 1
        %s531 = smul.addr %s530, 128
        %s532 = scalar_lea.vmem [#allocation5], %s531
        %p533 = pneg %p86
        %p534 = pneg %p83
        %p535 = pneg %p107
        %p536 = pneg %p104
        %p537 = pneg %p128
        %p538 = pneg %p125
        %p539 = pneg %p149
        %p540 = pneg %p146
        %p541 = pneg %p170
        %p542 = pneg %p167
        %p543 = pneg %p191
        %p544 = pneg %p188
        %p545 = pneg %p212
        %p546 = pneg %p209
        %p547 = pneg %p233
        %p548 = pneg %p230
        %p549 = pneg %p254
        %p550 = pneg %p251
        %p551 = pneg %p280
        %p552 = pneg %p277
        %s553 = sand.u32 %s267, 1
        %s554 = scalar_lea.sflag [#allocation4], %s553
        %s555 = sand.u32 %s267, 1
        %s556 = smul.addr %s555, 1024
        %s557 = scalar_lea.vmem [#allocation19], %s556
        %p558 = pneg %p306
        %p559 = pneg %p303
        %s560 = sand.u32 %s293, 1
        %s561 = scalar_lea.sflag [#allocation21], %s560
        %s562 = sand.u32 %s293, 1
        %s563 = smul.addr %s562, 256
        %s564 = scalar_lea.vmem [#allocation20], %s563
        %s565 = smul.u32 16, %s39
        %s566 = smul.u32 16, %s39
        %s567 = smul.u32 16, %s39
        %s568 = smul.u32 16, %s39
        %v570 = vld [vmem:[%s475] sm:$0xff]
        %v571 = vld [vmem:[%s475 + $0x8] sm:$0xff]
        %v572 = vld [vmem:[%s475 + $0x10] sm:$0xff]
        %v573 = vld [vmem:[%s475 + $0x18] sm:$0xff]
        %v574 = vld [vmem:[%s475 + $0x20] sm:$0xff]
        %v575 = vld [vmem:[%s475 + $0x28] sm:$0xff]
        %v576 = vld [vmem:[%s475 + $0x30] sm:$0xff]
        %v577 = vld [vmem:[%s475 + $0x38] sm:$0xff]
        %v578 = vld [vmem:[%s475 + $0x40] sm:$0xff]
        %v579 = vld [vmem:[%s475 + $0x48] sm:$0xff]
        %v580 = vld [vmem:[%s475 + $0x50] sm:$0xff]
        %v581 = vld [vmem:[%s475 + $0x58] sm:$0xff]
        %v582 = vld [vmem:[%s475 + $0x60] sm:$0xff]
        %v583 = vld [vmem:[%s475 + $0x68] sm:$0xff]
        %v584 = vld [vmem:[%s475 + $0x70] sm:$0xff]
        %v585 = vld [vmem:[%s475 + $0x78] sm:$0xff]
        %v586 = vld [vmem:[%s475 + $0x80] sm:$0xff]
        %v587 = vld [vmem:[%s475 + $0x88] sm:$0xff]
        %v588 = vld [vmem:[%s475 + $0x90] sm:$0xff]
        %v589 = vld [vmem:[%s475 + $0x98] sm:$0xff]
        %v590 = vld [vmem:[%s475 + $0xa0] sm:$0xff]
        %v591 = vld [vmem:[%s475 + $0xa8] sm:$0xff]
        %v592 = vld [vmem:[%s475 + $0xb0] sm:$0xff]
        %v593 = vld [vmem:[%s475 + $0xb8] sm:$0xff]
        %v594 = vld [vmem:[%s475 + $0xc0] sm:$0xff]
        %v595 = vld [vmem:[%s475 + $0xc8] sm:$0xff]
        %v596 = vld [vmem:[%s475 + $0xd0] sm:$0xff]
        %v597 = vld [vmem:[%s475 + $0xd8] sm:$0xff]
        %v598 = vld [vmem:[%s475 + $0xe0] sm:$0xff]
        %v599 = vld [vmem:[%s475 + $0xe8] sm:$0xff]
        %v600 = vld [vmem:[%s475 + $0xf0] sm:$0xff]
        %v601 = vld [vmem:[%s475 + $0xf8] sm:$0xff]
        %v602 = vld [vmem:[%s475 + $0x100] sm:$0xff]
        %v603 = vld [vmem:[%s475 + $0x108] sm:$0xff]
        %v604 = vld [vmem:[%s475 + $0x110] sm:$0xff]
        %v605 = vld [vmem:[%s475 + $0x118] sm:$0xff]
        %v606 = vld [vmem:[%s475 + $0x120] sm:$0xff]
        %v607 = vld [vmem:[%s475 + $0x128] sm:$0xff]
        %v608 = vld [vmem:[%s475 + $0x130] sm:$0xff]
        %v609 = vld [vmem:[%s475 + $0x138] sm:$0xff]
        %v610 = vld [vmem:[%s475 + $0x140] sm:$0xff]
        %v611 = vld [vmem:[%s475 + $0x148] sm:$0xff]
        %v612 = vld [vmem:[%s475 + $0x150] sm:$0xff]
        %v613 = vld [vmem:[%s475 + $0x158] sm:$0xff]
        %v614 = vld [vmem:[%s475 + $0x160] sm:$0xff]
        %v615 = vld [vmem:[%s475 + $0x168] sm:$0xff]
        %v616 = vld [vmem:[%s475 + $0x170] sm:$0xff]
        %v617 = vld [vmem:[%s475 + $0x178] sm:$0xff]
        %v618 = vld [vmem:[%s475 + $0x180] sm:$0xff]
        %v619 = vld [vmem:[%s475 + $0x188] sm:$0xff]
        %v620 = vld [vmem:[%s475 + $0x190] sm:$0xff]
        %v621 = vld [vmem:[%s475 + $0x198] sm:$0xff]
        %v622 = vld [vmem:[%s475 + $0x1a0] sm:$0xff]
        %v623 = vld [vmem:[%s475 + $0x1a8] sm:$0xff]
        %v624 = vld [vmem:[%s475 + $0x1b0] sm:$0xff]
        %v625 = vld [vmem:[%s475 + $0x1b8] sm:$0xff]
        %v626 = vld [vmem:[%s475 + $0x1c0] sm:$0xff]
        %v627 = vld [vmem:[%s475 + $0x1c8] sm:$0xff]
        %v628 = vld [vmem:[%s475 + $0x1d0] sm:$0xff]
        %v629 = vld [vmem:[%s475 + $0x1d8] sm:$0xff]
        %v630 = vld [vmem:[%s475 + $0x1e0] sm:$0xff]
        %v631 = vld [vmem:[%s475 + $0x1e8] sm:$0xff]
        %v632 = vld [vmem:[%s475 + $0x1f0] sm:$0xff]
        %v633 = vld [vmem:[%s475 + $0x1f8] sm:$0xff]
        %v634 = vld [vmem:[%s484] sm:$0xff]
        %v635 = vld [vmem:[%s484 + $0x8] sm:$0xff]
        %v636 = vld [vmem:[%s484 + $0x10] sm:$0xff]
        %v637 = vld [vmem:[%s484 + $0x18] sm:$0xff]
        %v638 = vld [vmem:[%s484 + $0x20] sm:$0xff]
        %v639 = vld [vmem:[%s484 + $0x28] sm:$0xff]
        %v640 = vld [vmem:[%s484 + $0x30] sm:$0xff]
        %v641 = vld [vmem:[%s484 + $0x38] sm:$0xff]
        %v642 = vld [vmem:[%s484 + $0x40] sm:$0xff]
        %v643 = vld [vmem:[%s484 + $0x48] sm:$0xff]
        %v644 = vld [vmem:[%s484 + $0x50] sm:$0xff]
        %v645 = vld [vmem:[%s484 + $0x58] sm:$0xff]
        %v646 = vld [vmem:[%s484 + $0x60] sm:$0xff]
        %v647 = vld [vmem:[%s484 + $0x68] sm:$0xff]
        %v648 = vld [vmem:[%s484 + $0x70] sm:$0xff]
        %v649 = vld [vmem:[%s484 + $0x78] sm:$0xff]
        %v650 = vld [vmem:[#allocation7] sm:$0xff]
        %v651 = vld [vmem:[#allocation7 + $0x8] sm:$0xff]
        %v652 = vld [vmem:[#allocation7 + $0x10] sm:$0xff]
        %v653 = vld [vmem:[#allocation7 + $0x18] sm:$0xff]
        %v654 = vld [vmem:[#allocation7 + $0x20] sm:$0xff]
        %v655 = vld [vmem:[#allocation7 + $0x28] sm:$0xff]
        %v656 = vld [vmem:[#allocation7 + $0x30] sm:$0xff]
        %v657 = vld [vmem:[#allocation7 + $0x38] sm:$0xff]
        %v658 = vld [vmem:[#allocation7 + $0x40] sm:$0xff]
        %v659 = vld [vmem:[#allocation7 + $0x48] sm:$0xff]
        %v660 = vld [vmem:[#allocation7 + $0x50] sm:$0xff]
        %v661 = vld [vmem:[#allocation7 + $0x58] sm:$0xff]
        %v662 = vld [vmem:[#allocation7 + $0x60] sm:$0xff]
        %v663 = vld [vmem:[#allocation7 + $0x68] sm:$0xff]
        %v664 = vld [vmem:[#allocation7 + $0x70] sm:$0xff]
        %v665 = vld [vmem:[#allocation7 + $0x78] sm:$0xff]
        %v666 = vld [vmem:[#allocation7 + $0x80] sm:$0xff]
        %v667 = vld [vmem:[#allocation7 + $0x88] sm:$0xff]
        %v668 = vld [vmem:[#allocation7 + $0x90] sm:$0xff]
        %v669 = vld [vmem:[#allocation7 + $0x98] sm:$0xff]
        %v670 = vld [vmem:[#allocation7 + $0xa0] sm:$0xff]
        %v671 = vld [vmem:[#allocation7 + $0xa8] sm:$0xff]
        %v672 = vld [vmem:[#allocation7 + $0xb0] sm:$0xff]
        %v673 = vld [vmem:[#allocation7 + $0xb8] sm:$0xff]
        %v674 = vld [vmem:[#allocation7 + $0xc0] sm:$0xff]
        %v675 = vld [vmem:[#allocation7 + $0xc8] sm:$0xff]
        %v676 = vld [vmem:[#allocation7 + $0xd0] sm:$0xff]
        %v677 = vld [vmem:[#allocation7 + $0xd8] sm:$0xff]
        %v678 = vld [vmem:[#allocation7 + $0xe0] sm:$0xff]
        %v679 = vld [vmem:[#allocation7 + $0xe8] sm:$0xff]
        %v680 = vld [vmem:[#allocation7 + $0xf0] sm:$0xff]
        %v681 = vld [vmem:[#allocation7 + $0xf8] sm:$0xff]
        %v682 = vld [vmem:[#allocation7 + $0x100] sm:$0xff]
        %v683 = vld [vmem:[#allocation7 + $0x108] sm:$0xff]
        %v684 = vld [vmem:[#allocation7 + $0x110] sm:$0xff]
        %v685 = vld [vmem:[#allocation7 + $0x118] sm:$0xff]
        %v686 = vld [vmem:[#allocation7 + $0x120] sm:$0xff]
        %v687 = vld [vmem:[#allocation7 + $0x128] sm:$0xff]
        %v688 = vld [vmem:[#allocation7 + $0x130] sm:$0xff]
        %v689 = vld [vmem:[#allocation7 + $0x138] sm:$0xff]
        %v690 = vld [vmem:[#allocation7 + $0x140] sm:$0xff]
        %v691 = vld [vmem:[#allocation7 + $0x148] sm:$0xff]
        %v692 = vld [vmem:[#allocation7 + $0x150] sm:$0xff]
        %v693 = vld [vmem:[#allocation7 + $0x158] sm:$0xff]
        %v694 = vld [vmem:[#allocation7 + $0x160] sm:$0xff]
        %v695 = vld [vmem:[#allocation7 + $0x168] sm:$0xff]
        %v696 = vld [vmem:[#allocation7 + $0x170] sm:$0xff]
        %v697 = vld [vmem:[#allocation7 + $0x178] sm:$0xff]
        %v698 = vld [vmem:[#allocation7 + $0x180] sm:$0xff]
        %v699 = vld [vmem:[#allocation7 + $0x188] sm:$0xff]
        %v700 = vld [vmem:[#allocation7 + $0x190] sm:$0xff]
        %v701 = vld [vmem:[#allocation7 + $0x198] sm:$0xff]
        %v702 = vld [vmem:[#allocation7 + $0x1a0] sm:$0xff]
        %v703 = vld [vmem:[#allocation7 + $0x1a8] sm:$0xff]
        %v704 = vld [vmem:[#allocation7 + $0x1b0] sm:$0xff]
        %v705 = vld [vmem:[#allocation7 + $0x1b8] sm:$0xff]
        %v706 = vld [vmem:[#allocation7 + $0x1c0] sm:$0xff]
        %v707 = vld [vmem:[#allocation7 + $0x1c8] sm:$0xff]
        %v708 = vld [vmem:[#allocation7 + $0x1d0] sm:$0xff]
        %v709 = vld [vmem:[#allocation7 + $0x1d8] sm:$0xff]
        %v710 = vld [vmem:[#allocation7 + $0x1e0] sm:$0xff]
        %v711 = vld [vmem:[#allocation7 + $0x1e8] sm:$0xff]
        %v712 = vld [vmem:[#allocation7 + $0x1f0] sm:$0xff]
        %v713 = vld [vmem:[#allocation7 + $0x1f8] sm:$0xff]
        %v714 = vld [vmem:[#allocation7 + $0x200] sm:$0xff]
        %v715 = vld [vmem:[#allocation7 + $0x208] sm:$0xff]
        %v716 = vld [vmem:[#allocation7 + $0x210] sm:$0xff]
        %v717 = vld [vmem:[#allocation7 + $0x218] sm:$0xff]
        %v718 = vld [vmem:[#allocation7 + $0x220] sm:$0xff]
        %v719 = vld [vmem:[#allocation7 + $0x228] sm:$0xff]
        %v720 = vld [vmem:[#allocation7 + $0x230] sm:$0xff]
        %v721 = vld [vmem:[#allocation7 + $0x238] sm:$0xff]
        %v722 = vld [vmem:[#allocation7 + $0x240] sm:$0xff]
        %v723 = vld [vmem:[#allocation7 + $0x248] sm:$0xff]
        %v724 = vld [vmem:[#allocation7 + $0x250] sm:$0xff]
        %v725 = vld [vmem:[#allocation7 + $0x258] sm:$0xff]
        %v726 = vld [vmem:[#allocation7 + $0x260] sm:$0xff]
        %v727 = vld [vmem:[#allocation7 + $0x268] sm:$0xff]
        %v728 = vld [vmem:[#allocation7 + $0x270] sm:$0xff]
        %v729 = vld [vmem:[#allocation7 + $0x278] sm:$0xff]
        %v730 = vld [vmem:[#allocation7 + $0x280] sm:$0xff]
        %v731 = vld [vmem:[#allocation7 + $0x288] sm:$0xff]
        %v732 = vld [vmem:[#allocation7 + $0x290] sm:$0xff]
        %v733 = vld [vmem:[#allocation7 + $0x298] sm:$0xff]
        %v734 = vld [vmem:[#allocation7 + $0x2a0] sm:$0xff]
        %v735 = vld [vmem:[#allocation7 + $0x2a8] sm:$0xff]
        %v736 = vld [vmem:[#allocation7 + $0x2b0] sm:$0xff]
        %v737 = vld [vmem:[#allocation7 + $0x2b8] sm:$0xff]
        %v738 = vld [vmem:[#allocation7 + $0x2c0] sm:$0xff]
        %v739 = vld [vmem:[#allocation7 + $0x2c8] sm:$0xff]
        %v740 = vld [vmem:[#allocation7 + $0x2d0] sm:$0xff]
        %v741 = vld [vmem:[#allocation7 + $0x2d8] sm:$0xff]
        %v742 = vld [vmem:[#allocation7 + $0x2e0] sm:$0xff]
        %v743 = vld [vmem:[#allocation7 + $0x2e8] sm:$0xff]
        %v744 = vld [vmem:[#allocation7 + $0x2f0] sm:$0xff]
        %v745 = vld [vmem:[#allocation7 + $0x2f8] sm:$0xff]
        %v746 = vld [vmem:[#allocation7 + $0x300] sm:$0xff]
        %v747 = vld [vmem:[#allocation7 + $0x308] sm:$0xff]
        %v748 = vld [vmem:[#allocation7 + $0x310] sm:$0xff]
        %v749 = vld [vmem:[#allocation7 + $0x318] sm:$0xff]
        %v750 = vld [vmem:[#allocation7 + $0x320] sm:$0xff]
        %v751 = vld [vmem:[#allocation7 + $0x328] sm:$0xff]
        %v752 = vld [vmem:[#allocation7 + $0x330] sm:$0xff]
        %v753 = vld [vmem:[#allocation7 + $0x338] sm:$0xff]
        %v754 = vld [vmem:[#allocation7 + $0x340] sm:$0xff]
        %v755 = vld [vmem:[#allocation7 + $0x348] sm:$0xff]
        %v756 = vld [vmem:[#allocation7 + $0x350] sm:$0xff]
        %v757 = vld [vmem:[#allocation7 + $0x358] sm:$0xff]
        %v758 = vld [vmem:[#allocation7 + $0x360] sm:$0xff]
        %v759 = vld [vmem:[#allocation7 + $0x368] sm:$0xff]
        %v760 = vld [vmem:[#allocation7 + $0x370] sm:$0xff]
        %v761 = vld [vmem:[#allocation7 + $0x378] sm:$0xff]
        %v762 = vld [vmem:[#allocation7 + $0x380] sm:$0xff]
        %v763 = vld [vmem:[#allocation7 + $0x388] sm:$0xff]
        %v764 = vld [vmem:[#allocation7 + $0x390] sm:$0xff]
        %v765 = vld [vmem:[#allocation7 + $0x398] sm:$0xff]
        %v766 = vld [vmem:[#allocation7 + $0x3a0] sm:$0xff]
        %v767 = vld [vmem:[#allocation7 + $0x3a8] sm:$0xff]
        %v768 = vld [vmem:[#allocation7 + $0x3b0] sm:$0xff]
        %v769 = vld [vmem:[#allocation7 + $0x3b8] sm:$0xff]
        %v770 = vld [vmem:[#allocation7 + $0x3c0] sm:$0xff]
        %v771 = vld [vmem:[#allocation7 + $0x3c8] sm:$0xff]
        %v772 = vld [vmem:[#allocation7 + $0x3d0] sm:$0xff]
        %v773 = vld [vmem:[#allocation7 + $0x3d8] sm:$0xff]
        %v774 = vld [vmem:[#allocation7 + $0x3e0] sm:$0xff]
        %v775 = vld [vmem:[#allocation7 + $0x3e8] sm:$0xff]
        %v776 = vld [vmem:[#allocation7 + $0x3f0] sm:$0xff]
        %v777 = vld [vmem:[#allocation7 + $0x3f8] sm:$0xff]
        %v778 = vld [vmem:[#allocation8] sm:$0x3]
        %v780 = vlaneseq
        %v781 = vshrl.u32 %v780, 7
        %v782 = vsub.s32 0, %v781
        %v783 = vrot.slane %v778, %v782
        %v784 = vlaneseq
        %v785 = vshrl.u32 %v784, 7
        %v786 = vsub.s32 1, %v785
        %v787 = vrot.slane %v778, %v786
        %v854 = vunpack.c.l.b16 %v570
        %v855 = vunpack.c.h.b16 %v570
        %v856 = vunpack.c.l.b16 %v571
        %v857 = vunpack.c.h.b16 %v571
        %v858 = vunpack.c.l.b16 %v572
        %v859 = vunpack.c.h.b16 %v572
        %v860 = vunpack.c.l.b16 %v573
        %v861 = vunpack.c.h.b16 %v573
        %v862 = vunpack.c.l.b16 %v574
        %v863 = vunpack.c.h.b16 %v574
        %v864 = vunpack.c.l.b16 %v575
        %v865 = vunpack.c.h.b16 %v575
        %v866 = vunpack.c.l.b16 %v576
        %v867 = vunpack.c.h.b16 %v576
        %v868 = vunpack.c.l.b16 %v577
        %v869 = vunpack.c.h.b16 %v577
        %v870 = vunpack.c.l.b16 %v578
        %v871 = vunpack.c.h.b16 %v578
        %v872 = vunpack.c.l.b16 %v579
        %v873 = vunpack.c.h.b16 %v579
        %v874 = vunpack.c.l.b16 %v580
        %v875 = vunpack.c.h.b16 %v580
        %v876 = vunpack.c.l.b16 %v581
        %v877 = vunpack.c.h.b16 %v581
        %v878 = vunpack.c.l.b16 %v582
        %v879 = vunpack.c.h.b16 %v582
        %v880 = vunpack.c.l.b16 %v583
        %v881 = vunpack.c.h.b16 %v583
        %v882 = vunpack.c.l.b16 %v584
        %v883 = vunpack.c.h.b16 %v584
        %v884 = vunpack.c.l.b16 %v585
        %v885 = vunpack.c.h.b16 %v585
        %v886 = vunpack.c.l.b16 %v586
        %v887 = vunpack.c.h.b16 %v586
        %v888 = vunpack.c.l.b16 %v587
        %v889 = vunpack.c.h.b16 %v587
        %v890 = vunpack.c.l.b16 %v588
        %v891 = vunpack.c.h.b16 %v588
        %v892 = vunpack.c.l.b16 %v589
        %v893 = vunpack.c.h.b16 %v589
        %v894 = vunpack.c.l.b16 %v590
        %v895 = vunpack.c.h.b16 %v590
        %v896 = vunpack.c.l.b16 %v591
        %v897 = vunpack.c.h.b16 %v591
        %v898 = vunpack.c.l.b16 %v592
        %v899 = vunpack.c.h.b16 %v592
        %v900 = vunpack.c.l.b16 %v593
        %v901 = vunpack.c.h.b16 %v593
        %v902 = vunpack.c.l.b16 %v594
        %v903 = vunpack.c.h.b16 %v594
        %v904 = vunpack.c.l.b16 %v595
        %v905 = vunpack.c.h.b16 %v595
        %v906 = vunpack.c.l.b16 %v596
        %v907 = vunpack.c.h.b16 %v596
        %v908 = vunpack.c.l.b16 %v597
        %v909 = vunpack.c.h.b16 %v597
        %v910 = vunpack.c.l.b16 %v598
        %v911 = vunpack.c.h.b16 %v598
        %v912 = vunpack.c.l.b16 %v599
        %v913 = vunpack.c.h.b16 %v599
        %v914 = vunpack.c.l.b16 %v600
        %v915 = vunpack.c.h.b16 %v600
        %v916 = vunpack.c.l.b16 %v601
        %v917 = vunpack.c.h.b16 %v601
        %v918 = vunpack.c.l.b16 %v602
        %v919 = vunpack.c.h.b16 %v602
        %v920 = vunpack.c.l.b16 %v603
        %v921 = vunpack.c.h.b16 %v603
        %v922 = vunpack.c.l.b16 %v604
        %v923 = vunpack.c.h.b16 %v604
        %v924 = vunpack.c.l.b16 %v605
        %v925 = vunpack.c.h.b16 %v605
        %v926 = vunpack.c.l.b16 %v606
        %v927 = vunpack.c.h.b16 %v606
        %v928 = vunpack.c.l.b16 %v607
        %v929 = vunpack.c.h.b16 %v607
        %v930 = vunpack.c.l.b16 %v608
        %v931 = vunpack.c.h.b16 %v608
        %v932 = vunpack.c.l.b16 %v609
        %v933 = vunpack.c.h.b16 %v609
        %v934 = vunpack.c.l.b16 %v610
        %v935 = vunpack.c.h.b16 %v610
        %v936 = vunpack.c.l.b16 %v611
        %v937 = vunpack.c.h.b16 %v611
        %v938 = vunpack.c.l.b16 %v612
        %v939 = vunpack.c.h.b16 %v612
        %v940 = vunpack.c.l.b16 %v613
        %v941 = vunpack.c.h.b16 %v613
        %v942 = vunpack.c.l.b16 %v614
        %v943 = vunpack.c.h.b16 %v614
        %v944 = vunpack.c.l.b16 %v615
        %v945 = vunpack.c.h.b16 %v615
        %v946 = vunpack.c.l.b16 %v616
        %v947 = vunpack.c.h.b16 %v616
        %v948 = vunpack.c.l.b16 %v617
        %v949 = vunpack.c.h.b16 %v617
        %v950 = vunpack.c.l.b16 %v618
        %v951 = vunpack.c.h.b16 %v618
        %v952 = vunpack.c.l.b16 %v619
        %v953 = vunpack.c.h.b16 %v619
        %v954 = vunpack.c.l.b16 %v620
        %v955 = vunpack.c.h.b16 %v620
        %v956 = vunpack.c.l.b16 %v621
        %v957 = vunpack.c.h.b16 %v621
        %v958 = vunpack.c.l.b16 %v622
        %v959 = vunpack.c.h.b16 %v622
        %v960 = vunpack.c.l.b16 %v623
        %v961 = vunpack.c.h.b16 %v623
        %v962 = vunpack.c.l.b16 %v624
        %v963 = vunpack.c.h.b16 %v624
        %v964 = vunpack.c.l.b16 %v625
        %v965 = vunpack.c.h.b16 %v625
        %v966 = vunpack.c.l.b16 %v626
        %v967 = vunpack.c.h.b16 %v626
        %v968 = vunpack.c.l.b16 %v627
        %v969 = vunpack.c.h.b16 %v627
        %v970 = vunpack.c.l.b16 %v628
        %v971 = vunpack.c.h.b16 %v628
        %v972 = vunpack.c.l.b16 %v629
        %v973 = vunpack.c.h.b16 %v629
        %v974 = vunpack.c.l.b16 %v630
        %v975 = vunpack.c.h.b16 %v630
        %v976 = vunpack.c.l.b16 %v631
        %v977 = vunpack.c.h.b16 %v631
        %v978 = vunpack.c.l.b16 %v632
        %v979 = vunpack.c.h.b16 %v632
        %v980 = vunpack.c.l.b16 %v633
        %v981 = vunpack.c.h.b16 %v633
        %v982 = vpack.c.b16 %v862, %v854
        %v983 = vpack.c.b16 %v863, %v855
        %v984 = vpack.c.b16 %v864, %v856
        %v985 = vpack.c.b16 %v865, %v857
        %v986 = vpack.c.b16 %v866, %v858
        %v987 = vpack.c.b16 %v867, %v859
        %v988 = vpack.c.b16 %v868, %v860
        %v989 = vpack.c.b16 %v869, %v861
        %v990 = vpack.c.b16 %v878, %v870
        %v991 = vpack.c.b16 %v879, %v871
        %v992 = vpack.c.b16 %v880, %v872
        %v993 = vpack.c.b16 %v881, %v873
        %v994 = vpack.c.b16 %v882, %v874
        %v995 = vpack.c.b16 %v883, %v875
        %v996 = vpack.c.b16 %v884, %v876
        %v997 = vpack.c.b16 %v885, %v877
        %v998 = vpack.c.b16 %v894, %v886
        %v999 = vpack.c.b16 %v895, %v887
        %v1000 = vpack.c.b16 %v896, %v888
        %v1001 = vpack.c.b16 %v897, %v889
        %v1002 = vpack.c.b16 %v898, %v890
        %v1003 = vpack.c.b16 %v899, %v891
        %v1004 = vpack.c.b16 %v900, %v892
        %v1005 = vpack.c.b16 %v901, %v893
        %v1006 = vpack.c.b16 %v910, %v902
        %v1007 = vpack.c.b16 %v911, %v903
        %v1008 = vpack.c.b16 %v912, %v904
        %v1009 = vpack.c.b16 %v913, %v905
        %v1010 = vpack.c.b16 %v914, %v906
        %v1011 = vpack.c.b16 %v915, %v907
        %v1012 = vpack.c.b16 %v916, %v908
        %v1013 = vpack.c.b16 %v917, %v909
        %v1014 = vpack.c.b16 %v926, %v918
        %v1015 = vpack.c.b16 %v927, %v919
        %v1016 = vpack.c.b16 %v928, %v920
        %v1017 = vpack.c.b16 %v929, %v921
        %v1018 = vpack.c.b16 %v930, %v922
        %v1019 = vpack.c.b16 %v931, %v923
        %v1020 = vpack.c.b16 %v932, %v924
        %v1021 = vpack.c.b16 %v933, %v925
        %v1022 = vpack.c.b16 %v942, %v934
        %v1023 = vpack.c.b16 %v943, %v935
        %v1024 = vpack.c.b16 %v944, %v936
        %v1025 = vpack.c.b16 %v945, %v937
        %v1026 = vpack.c.b16 %v946, %v938
        %v1027 = vpack.c.b16 %v947, %v939
        %v1028 = vpack.c.b16 %v948, %v940
        %v1029 = vpack.c.b16 %v949, %v941
        %v1030 = vpack.c.b16 %v958, %v950
        %v1031 = vpack.c.b16 %v959, %v951
        %v1032 = vpack.c.b16 %v960, %v952
        %v1033 = vpack.c.b16 %v961, %v953
        %v1034 = vpack.c.b16 %v962, %v954
        %v1035 = vpack.c.b16 %v963, %v955
        %v1036 = vpack.c.b16 %v964, %v956
        %v1037 = vpack.c.b16 %v965, %v957
        %v1038 = vpack.c.b16 %v974, %v966
        %v1039 = vpack.c.b16 %v975, %v967
        %v1040 = vpack.c.b16 %v976, %v968
        %v1041 = vpack.c.b16 %v977, %v969
        %v1042 = vpack.c.b16 %v978, %v970
        %v1043 = vpack.c.b16 %v979, %v971
        %v1044 = vpack.c.b16 %v980, %v972
        %v1045 = vpack.c.b16 %v981, %v973
        %v1238 = vunpack.c.l.b16 %v650
        %v1239 = vunpack.c.h.b16 %v650
        %v1240 = vunpack.c.l.b16 %v651
        %v1241 = vunpack.c.h.b16 %v651
        %v1242 = vunpack.c.l.b16 %v652
        %v1243 = vunpack.c.h.b16 %v652
        %v1244 = vunpack.c.l.b16 %v653
        %v1245 = vunpack.c.h.b16 %v653
        %v1246 = vunpack.c.l.b16 %v654
        %v1247 = vunpack.c.h.b16 %v654
        %v1248 = vunpack.c.l.b16 %v655
        %v1249 = vunpack.c.h.b16 %v655
        %v1250 = vunpack.c.l.b16 %v656
        %v1251 = vunpack.c.h.b16 %v656
        %v1252 = vunpack.c.l.b16 %v657
        %v1253 = vunpack.c.h.b16 %v657
        %v1254 = vunpack.c.l.b16 %v658
        %v1255 = vunpack.c.h.b16 %v658
        %v1256 = vunpack.c.l.b16 %v659
        %v1257 = vunpack.c.h.b16 %v659
        %v1258 = vunpack.c.l.b16 %v660
        %v1259 = vunpack.c.h.b16 %v660
        %v1260 = vunpack.c.l.b16 %v661
        %v1261 = vunpack.c.h.b16 %v661
        %v1262 = vunpack.c.l.b16 %v662
        %v1263 = vunpack.c.h.b16 %v662
        %v1264 = vunpack.c.l.b16 %v663
        %v1265 = vunpack.c.h.b16 %v663
        %v1266 = vunpack.c.l.b16 %v664
        %v1267 = vunpack.c.h.b16 %v664
        %v1268 = vunpack.c.l.b16 %v665
        %v1269 = vunpack.c.h.b16 %v665
        %v1270 = vunpack.c.l.b16 %v666
        %v1271 = vunpack.c.h.b16 %v666
        %v1272 = vunpack.c.l.b16 %v667
        %v1273 = vunpack.c.h.b16 %v667
        %v1274 = vunpack.c.l.b16 %v668
        %v1275 = vunpack.c.h.b16 %v668
        %v1276 = vunpack.c.l.b16 %v669
        %v1277 = vunpack.c.h.b16 %v669
        %v1278 = vunpack.c.l.b16 %v670
        %v1279 = vunpack.c.h.b16 %v670
        %v1280 = vunpack.c.l.b16 %v671
        %v1281 = vunpack.c.h.b16 %v671
        %v1282 = vunpack.c.l.b16 %v672
        %v1283 = vunpack.c.h.b16 %v672
        %v1284 = vunpack.c.l.b16 %v673
        %v1285 = vunpack.c.h.b16 %v673
        %v1286 = vunpack.c.l.b16 %v674
        %v1287 = vunpack.c.h.b16 %v674
        %v1288 = vunpack.c.l.b16 %v675
        %v1289 = vunpack.c.h.b16 %v675
        %v1290 = vunpack.c.l.b16 %v676
        %v1291 = vunpack.c.h.b16 %v676
        %v1292 = vunpack.c.l.b16 %v677
        %v1293 = vunpack.c.h.b16 %v677
        %v1294 = vunpack.c.l.b16 %v678
        %v1295 = vunpack.c.h.b16 %v678
        %v1296 = vunpack.c.l.b16 %v679
        %v1297 = vunpack.c.h.b16 %v679
        %v1298 = vunpack.c.l.b16 %v680
        %v1299 = vunpack.c.h.b16 %v680
        %v1300 = vunpack.c.l.b16 %v681
        %v1301 = vunpack.c.h.b16 %v681
        %v1302 = vunpack.c.l.b16 %v682
        %v1303 = vunpack.c.h.b16 %v682
        %v1304 = vunpack.c.l.b16 %v683
        %v1305 = vunpack.c.h.b16 %v683
        %v1306 = vunpack.c.l.b16 %v684
        %v1307 = vunpack.c.h.b16 %v684
        %v1308 = vunpack.c.l.b16 %v685
        %v1309 = vunpack.c.h.b16 %v685
        %v1310 = vunpack.c.l.b16 %v686
        %v1311 = vunpack.c.h.b16 %v686
        %v1312 = vunpack.c.l.b16 %v687
        %v1313 = vunpack.c.h.b16 %v687
        %v1314 = vunpack.c.l.b16 %v688
        %v1315 = vunpack.c.h.b16 %v688
        %v1316 = vunpack.c.l.b16 %v689
        %v1317 = vunpack.c.h.b16 %v689
        %v1318 = vunpack.c.l.b16 %v690
        %v1319 = vunpack.c.h.b16 %v690
        %v1320 = vunpack.c.l.b16 %v691
        %v1321 = vunpack.c.h.b16 %v691
        %v1322 = vunpack.c.l.b16 %v692
        %v1323 = vunpack.c.h.b16 %v692
        %v1324 = vunpack.c.l.b16 %v693
        %v1325 = vunpack.c.h.b16 %v693
        %v1326 = vunpack.c.l.b16 %v694
        %v1327 = vunpack.c.h.b16 %v694
        %v1328 = vunpack.c.l.b16 %v695
        %v1329 = vunpack.c.h.b16 %v695
        %v1330 = vunpack.c.l.b16 %v696
        %v1331 = vunpack.c.h.b16 %v696
        %v1332 = vunpack.c.l.b16 %v697
        %v1333 = vunpack.c.h.b16 %v697
        %v1334 = vunpack.c.l.b16 %v698
        %v1335 = vunpack.c.h.b16 %v698
        %v1336 = vunpack.c.l.b16 %v699
        %v1337 = vunpack.c.h.b16 %v699
        %v1338 = vunpack.c.l.b16 %v700
        %v1339 = vunpack.c.h.b16 %v700
        %v1340 = vunpack.c.l.b16 %v701
        %v1341 = vunpack.c.h.b16 %v701
        %v1342 = vunpack.c.l.b16 %v702
        %v1343 = vunpack.c.h.b16 %v702
        %v1344 = vunpack.c.l.b16 %v703
        %v1345 = vunpack.c.h.b16 %v703
        %v1346 = vunpack.c.l.b16 %v704
        %v1347 = vunpack.c.h.b16 %v704
        %v1348 = vunpack.c.l.b16 %v705
        %v1349 = vunpack.c.h.b16 %v705
        %v1350 = vunpack.c.l.b16 %v706
        %v1351 = vunpack.c.h.b16 %v706
        %v1352 = vunpack.c.l.b16 %v707
        %v1353 = vunpack.c.h.b16 %v707
        %v1354 = vunpack.c.l.b16 %v708
        %v1355 = vunpack.c.h.b16 %v708
        %v1356 = vunpack.c.l.b16 %v709
        %v1357 = vunpack.c.h.b16 %v709
        %v1358 = vunpack.c.l.b16 %v710
        %v1359 = vunpack.c.h.b16 %v710
        %v1360 = vunpack.c.l.b16 %v711
        %v1361 = vunpack.c.h.b16 %v711
        %v1362 = vunpack.c.l.b16 %v712
        %v1363 = vunpack.c.h.b16 %v712
        %v1364 = vunpack.c.l.b16 %v713
        %v1365 = vunpack.c.h.b16 %v713
        %v1366 = vunpack.c.l.b16 %v714
        %v1367 = vunpack.c.h.b16 %v714
        %v1368 = vunpack.c.l.b16 %v715
        %v1369 = vunpack.c.h.b16 %v715
        %v1370 = vunpack.c.l.b16 %v716
        %v1371 = vunpack.c.h.b16 %v716
        %v1372 = vunpack.c.l.b16 %v717
        %v1373 = vunpack.c.h.b16 %v717
        %v1374 = vunpack.c.l.b16 %v718
        %v1375 = vunpack.c.h.b16 %v718
        %v1376 = vunpack.c.l.b16 %v719
        %v1377 = vunpack.c.h.b16 %v719
        %v1378 = vunpack.c.l.b16 %v720
        %v1379 = vunpack.c.h.b16 %v720
        %v1380 = vunpack.c.l.b16 %v721
        %v1381 = vunpack.c.h.b16 %v721
        %v1382 = vunpack.c.l.b16 %v722
        %v1383 = vunpack.c.h.b16 %v722
        %v1384 = vunpack.c.l.b16 %v723
        %v1385 = vunpack.c.h.b16 %v723
        %v1386 = vunpack.c.l.b16 %v724
        %v1387 = vunpack.c.h.b16 %v724
        %v1388 = vunpack.c.l.b16 %v725
        %v1389 = vunpack.c.h.b16 %v725
        %v1390 = vunpack.c.l.b16 %v726
        %v1391 = vunpack.c.h.b16 %v726
        %v1392 = vunpack.c.l.b16 %v727
        %v1393 = vunpack.c.h.b16 %v727
        %v1394 = vunpack.c.l.b16 %v728
        %v1395 = vunpack.c.h.b16 %v728
        %v1396 = vunpack.c.l.b16 %v729
        %v1397 = vunpack.c.h.b16 %v729
        %v1398 = vunpack.c.l.b16 %v730
        %v1399 = vunpack.c.h.b16 %v730
        %v1400 = vunpack.c.l.b16 %v731
        %v1401 = vunpack.c.h.b16 %v731
        %v1402 = vunpack.c.l.b16 %v732
        %v1403 = vunpack.c.h.b16 %v732
        %v1404 = vunpack.c.l.b16 %v733
        %v1405 = vunpack.c.h.b16 %v733
        %v1406 = vunpack.c.l.b16 %v734
        %v1407 = vunpack.c.h.b16 %v734
        %v1408 = vunpack.c.l.b16 %v735
        %v1409 = vunpack.c.h.b16 %v735
        %v1410 = vunpack.c.l.b16 %v736
        %v1411 = vunpack.c.h.b16 %v736
        %v1412 = vunpack.c.l.b16 %v737
        %v1413 = vunpack.c.h.b16 %v737
        %v1414 = vunpack.c.l.b16 %v738
        %v1415 = vunpack.c.h.b16 %v738
        %v1416 = vunpack.c.l.b16 %v739
        %v1417 = vunpack.c.h.b16 %v739
        %v1418 = vunpack.c.l.b16 %v740
        %v1419 = vunpack.c.h.b16 %v740
        %v1420 = vunpack.c.l.b16 %v741
        %v1421 = vunpack.c.h.b16 %v741
        %v1422 = vunpack.c.l.b16 %v742
        %v1423 = vunpack.c.h.b16 %v742
        %v1424 = vunpack.c.l.b16 %v743
        %v1425 = vunpack.c.h.b16 %v743
        %v1426 = vunpack.c.l.b16 %v744
        %v1427 = vunpack.c.h.b16 %v744
        %v1428 = vunpack.c.l.b16 %v745
        %v1429 = vunpack.c.h.b16 %v745
        %v1430 = vunpack.c.l.b16 %v746
        %v1431 = vunpack.c.h.b16 %v746
        %v1432 = vunpack.c.l.b16 %v747
        %v1433 = vunpack.c.h.b16 %v747
        %v1434 = vunpack.c.l.b16 %v748
        %v1435 = vunpack.c.h.b16 %v748
        %v1436 = vunpack.c.l.b16 %v749
        %v1437 = vunpack.c.h.b16 %v749
        %v1438 = vunpack.c.l.b16 %v750
        %v1439 = vunpack.c.h.b16 %v750
        %v1440 = vunpack.c.l.b16 %v751
        %v1441 = vunpack.c.h.b16 %v751
        %v1442 = vunpack.c.l.b16 %v752
        %v1443 = vunpack.c.h.b16 %v752
        %v1444 = vunpack.c.l.b16 %v753
        %v1445 = vunpack.c.h.b16 %v753
        %v1446 = vunpack.c.l.b16 %v754
        %v1447 = vunpack.c.h.b16 %v754
        %v1448 = vunpack.c.l.b16 %v755
        %v1449 = vunpack.c.h.b16 %v755
        %v1450 = vunpack.c.l.b16 %v756
        %v1451 = vunpack.c.h.b16 %v756
        %v1452 = vunpack.c.l.b16 %v757
        %v1453 = vunpack.c.h.b16 %v757
        %v1454 = vunpack.c.l.b16 %v758
        %v1455 = vunpack.c.h.b16 %v758
        %v1456 = vunpack.c.l.b16 %v759
        %v1457 = vunpack.c.h.b16 %v759
        %v1458 = vunpack.c.l.b16 %v760
        %v1459 = vunpack.c.h.b16 %v760
        %v1460 = vunpack.c.l.b16 %v761
        %v1461 = vunpack.c.h.b16 %v761
        %v1462 = vunpack.c.l.b16 %v762
        %v1463 = vunpack.c.h.b16 %v762
        %v1464 = vunpack.c.l.b16 %v763
        %v1465 = vunpack.c.h.b16 %v763
        %v1466 = vunpack.c.l.b16 %v764
        %v1467 = vunpack.c.h.b16 %v764
        %v1468 = vunpack.c.l.b16 %v765
        %v1469 = vunpack.c.h.b16 %v765
        %v1470 = vunpack.c.l.b16 %v766
        %v1471 = vunpack.c.h.b16 %v766
        %v1472 = vunpack.c.l.b16 %v767
        %v1473 = vunpack.c.h.b16 %v767
        %v1474 = vunpack.c.l.b16 %v768
        %v1475 = vunpack.c.h.b16 %v768
        %v1476 = vunpack.c.l.b16 %v769
        %v1477 = vunpack.c.h.b16 %v769
        %v1478 = vunpack.c.l.b16 %v770
        %v1479 = vunpack.c.h.b16 %v770
        %v1480 = vunpack.c.l.b16 %v771
        %v1481 = vunpack.c.h.b16 %v771
        %v1482 = vunpack.c.l.b16 %v772
        %v1483 = vunpack.c.h.b16 %v772
        %v1484 = vunpack.c.l.b16 %v773
        %v1485 = vunpack.c.h.b16 %v773
        %v1486 = vunpack.c.l.b16 %v774
        %v1487 = vunpack.c.h.b16 %v774
        %v1488 = vunpack.c.l.b16 %v775
        %v1489 = vunpack.c.h.b16 %v775
        %v1490 = vunpack.c.l.b16 %v776
        %v1491 = vunpack.c.h.b16 %v776
        %v1492 = vunpack.c.l.b16 %v777
        %v1493 = vunpack.c.h.b16 %v777
        %v1494 = vpack.c.b16 %v1240, %v1238
        %v1495 = vpack.c.b16 %v1241, %v1239
        %v1496 = vpack.c.b16 %v1244, %v1242
        %v1497 = vpack.c.b16 %v1245, %v1243
        %v1498 = vpack.c.b16 %v1248, %v1246
        %v1499 = vpack.c.b16 %v1249, %v1247
        %v1500 = vpack.c.b16 %v1252, %v1250
        %v1501 = vpack.c.b16 %v1253, %v1251
        %v1502 = vpack.c.b16 %v1256, %v1254
        %v1503 = vpack.c.b16 %v1257, %v1255
        %v1504 = vpack.c.b16 %v1260, %v1258
        %v1505 = vpack.c.b16 %v1261, %v1259
        %v1506 = vpack.c.b16 %v1264, %v1262
        %v1507 = vpack.c.b16 %v1265, %v1263
        %v1508 = vpack.c.b16 %v1268, %v1266
        %v1509 = vpack.c.b16 %v1269, %v1267
        %v1510 = vpack.c.b16 %v1272, %v1270
        %v1511 = vpack.c.b16 %v1273, %v1271
        %v1512 = vpack.c.b16 %v1276, %v1274
        %v1513 = vpack.c.b16 %v1277, %v1275
        %v1514 = vpack.c.b16 %v1280, %v1278
        %v1515 = vpack.c.b16 %v1281, %v1279
        %v1516 = vpack.c.b16 %v1284, %v1282
        %v1517 = vpack.c.b16 %v1285, %v1283
        %v1518 = vpack.c.b16 %v1288, %v1286
        %v1519 = vpack.c.b16 %v1289, %v1287
        %v1520 = vpack.c.b16 %v1292, %v1290
        %v1521 = vpack.c.b16 %v1293, %v1291
        %v1522 = vpack.c.b16 %v1296, %v1294
        %v1523 = vpack.c.b16 %v1297, %v1295
        %v1524 = vpack.c.b16 %v1300, %v1298
        %v1525 = vpack.c.b16 %v1301, %v1299
        %v1526 = vpack.c.b16 %v1304, %v1302
        %v1527 = vpack.c.b16 %v1305, %v1303
        %v1528 = vpack.c.b16 %v1308, %v1306
        %v1529 = vpack.c.b16 %v1309, %v1307
        %v1530 = vpack.c.b16 %v1312, %v1310
        %v1531 = vpack.c.b16 %v1313, %v1311
        %v1532 = vpack.c.b16 %v1316, %v1314
        %v1533 = vpack.c.b16 %v1317, %v1315
        %v1534 = vpack.c.b16 %v1320, %v1318
        %v1535 = vpack.c.b16 %v1321, %v1319
        %v1536 = vpack.c.b16 %v1324, %v1322
        %v1537 = vpack.c.b16 %v1325, %v1323
        %v1538 = vpack.c.b16 %v1328, %v1326
        %v1539 = vpack.c.b16 %v1329, %v1327
        %v1540 = vpack.c.b16 %v1332, %v1330
        %v1541 = vpack.c.b16 %v1333, %v1331
        %v1542 = vpack.c.b16 %v1336, %v1334
        %v1543 = vpack.c.b16 %v1337, %v1335
        %v1544 = vpack.c.b16 %v1340, %v1338
        %v1545 = vpack.c.b16 %v1341, %v1339
        %v1546 = vpack.c.b16 %v1344, %v1342
        %v1547 = vpack.c.b16 %v1345, %v1343
        %v1548 = vpack.c.b16 %v1348, %v1346
        %v1549 = vpack.c.b16 %v1349, %v1347
        %v1550 = vpack.c.b16 %v1352, %v1350
        %v1551 = vpack.c.b16 %v1353, %v1351
        %v1552 = vpack.c.b16 %v1356, %v1354
        %v1553 = vpack.c.b16 %v1357, %v1355
        %v1554 = vpack.c.b16 %v1360, %v1358
        %v1555 = vpack.c.b16 %v1361, %v1359
        %v1556 = vpack.c.b16 %v1364, %v1362
        %v1557 = vpack.c.b16 %v1365, %v1363
        %v1558 = vpack.c.b16 %v1368, %v1366
        %v1559 = vpack.c.b16 %v1369, %v1367
        %v1560 = vpack.c.b16 %v1372, %v1370
        %v1561 = vpack.c.b16 %v1373, %v1371
        %v1562 = vpack.c.b16 %v1376, %v1374
        %v1563 = vpack.c.b16 %v1377, %v1375
        %v1564 = vpack.c.b16 %v1380, %v1378
        %v1565 = vpack.c.b16 %v1381, %v1379
        %v1566 = vpack.c.b16 %v1384, %v1382
        %v1567 = vpack.c.b16 %v1385, %v1383
        %v1568 = vpack.c.b16 %v1388, %v1386
        %v1569 = vpack.c.b16 %v1389, %v1387
        %v1570 = vpack.c.b16 %v1392, %v1390
        %v1571 = vpack.c.b16 %v1393, %v1391
        %v1572 = vpack.c.b16 %v1396, %v1394
        %v1573 = vpack.c.b16 %v1397, %v1395
        %v1574 = vpack.c.b16 %v1400, %v1398
        %v1575 = vpack.c.b16 %v1401, %v1399
        %v1576 = vpack.c.b16 %v1404, %v1402
        %v1577 = vpack.c.b16 %v1405, %v1403
        %v1578 = vpack.c.b16 %v1408, %v1406
        %v1579 = vpack.c.b16 %v1409, %v1407
        %v1580 = vpack.c.b16 %v1412, %v1410
        %v1581 = vpack.c.b16 %v1413, %v1411
        %v1582 = vpack.c.b16 %v1416, %v1414
        %v1583 = vpack.c.b16 %v1417, %v1415
        %v1584 = vpack.c.b16 %v1420, %v1418
        %v1585 = vpack.c.b16 %v1421, %v1419
        %v1586 = vpack.c.b16 %v1424, %v1422
        %v1587 = vpack.c.b16 %v1425, %v1423
        %v1588 = vpack.c.b16 %v1428, %v1426
        %v1589 = vpack.c.b16 %v1429, %v1427
        %v1590 = vpack.c.b16 %v1432, %v1430
        %v1591 = vpack.c.b16 %v1433, %v1431
        %v1592 = vpack.c.b16 %v1436, %v1434
        %v1593 = vpack.c.b16 %v1437, %v1435
        %v1594 = vpack.c.b16 %v1440, %v1438
        %v1595 = vpack.c.b16 %v1441, %v1439
        %v1596 = vpack.c.b16 %v1444, %v1442
        %v1597 = vpack.c.b16 %v1445, %v1443
        %v1598 = vpack.c.b16 %v1448, %v1446
        %v1599 = vpack.c.b16 %v1449, %v1447
        %v1600 = vpack.c.b16 %v1452, %v1450
        %v1601 = vpack.c.b16 %v1453, %v1451
        %v1602 = vpack.c.b16 %v1456, %v1454
        %v1603 = vpack.c.b16 %v1457, %v1455
        %v1604 = vpack.c.b16 %v1460, %v1458
        %v1605 = vpack.c.b16 %v1461, %v1459
        %v1606 = vpack.c.b16 %v1464, %v1462
        %v1607 = vpack.c.b16 %v1465, %v1463
        %v1608 = vpack.c.b16 %v1468, %v1466
        %v1609 = vpack.c.b16 %v1469, %v1467
        %v1610 = vpack.c.b16 %v1472, %v1470
        %v1611 = vpack.c.b16 %v1473, %v1471
        %v1612 = vpack.c.b16 %v1476, %v1474
        %v1613 = vpack.c.b16 %v1477, %v1475
        %v1614 = vpack.c.b16 %v1480, %v1478
        %v1615 = vpack.c.b16 %v1481, %v1479
        %v1616 = vpack.c.b16 %v1484, %v1482
        %v1617 = vpack.c.b16 %v1485, %v1483
        %v1618 = vpack.c.b16 %v1488, %v1486
        %v1619 = vpack.c.b16 %v1489, %v1487
        %v1620 = vpack.c.b16 %v1492, %v1490
        %v1621 = vpack.c.b16 %v1493, %v1491
        %1750 = vmatprep.subr.bf16.mxu0 %v1495
        %1751 = vmatpush1.bf16.msra.mxu0 %v1494
        %1752 = vmatprep.subr.bf16.mxu0 %v1497
        %1753 = vmatpush1.bf16.msra.mxu0 %v1496
        %1754 = vmatprep.subr.bf16.mxu0 %v1499
        %1755 = vmatpush1.bf16.msra.mxu0 %v1498
        %1756 = vmatprep.subr.bf16.mxu0 %v1501
        %1757 = vmatpush1.bf16.msra.mxu0 %v1500
        %1758 = vmatprep.subr.bf16.mxu0 %v1503
        %1759 = vmatpush1.bf16.msra.mxu0 %v1502
        %1760 = vmatprep.subr.bf16.mxu0 %v1505
        %1761 = vmatpush1.bf16.msra.mxu0 %v1504
        %1762 = vmatprep.subr.bf16.mxu0 %v1507
        %1763 = vmatpush1.bf16.msra.mxu0 %v1506
        %1764 = vmatprep.subr.bf16.mxu0 %v1509
        %1765 = vmatpush1.bf16.msra.mxu0 %v1508
        %1766 = vmatprep.subr.bf16.mxu0 %v1511
        %1767 = vmatpush1.bf16.msra.mxu0 %v1510
        %1768 = vmatprep.subr.bf16.mxu0 %v1513
        %1769 = vmatpush1.bf16.msra.mxu0 %v1512
        %1770 = vmatprep.subr.bf16.mxu0 %v1515
        %1771 = vmatpush1.bf16.msra.mxu0 %v1514
        %1772 = vmatprep.subr.bf16.mxu0 %v1517
        %1773 = vmatpush1.bf16.msra.mxu0 %v1516
        %1774 = vmatprep.subr.bf16.mxu0 %v1519
        %1775 = vmatpush1.bf16.msra.mxu0 %v1518
        %1776 = vmatprep.subr.bf16.mxu0 %v1521
        %1777 = vmatpush1.bf16.msra.mxu0 %v1520
        %1778 = vmatprep.subr.bf16.mxu0 %v1523
        %1779 = vmatpush1.bf16.msra.mxu0 %v1522
        %1780 = vmatprep.subr.bf16.mxu0 %v1525
        %1781 = vmatpush1.bf16.msra.mxu0 %v1524
        %1782 = vmatprep.mubr.bf16.mxu0 %v983
        %1783 = vmatmul.mubr.bf16.gmra.mrb[0].mxu0 %v982
        %v1784 = vpop.f32.mrb[0].mxu0
        %v1785 = vadd.f32 %v783, %v1784
        %v1786 = vpop.f32.mrb[0].mxu0
        %v1787 = vadd.f32 %v787, %v1786
        %v1788 = vpop.f32.mrb[0].mxu0
        %v1789 = vadd.f32 %v783, %v1788
        %v1790 = vpop.f32.mrb[0].mxu0
        %v1791 = vadd.f32 %v787, %v1790
        %1792 = vmatprep.mubr.bf16.mxu0 %v991
        %1793 = vmatmul.mubr.bf16.gmra.mrb[0].mxu0 %v990
        %v1794 = vpop.f32.mrb[0].mxu0
        %v1795 = vadd.f32 %v783, %v1794
        %v1796 = vpop.f32.mrb[0].mxu0
        %v1797 = vadd.f32 %v787, %v1796
        %v1798 = vpop.f32.mrb[0].mxu0
        %v1799 = vadd.f32 %v783, %v1798
        %v1800 = vpop.f32.mrb[0].mxu0
        %v1801 = vadd.f32 %v787, %v1800
        %1802 = vmatprep.mubr.bf16.mxu0 %v999
        %1803 = vmatmul.mubr.bf16.gmra.mrb[0].mxu0 %v998
        %v1804 = vpop.f32.mrb[0].mxu0
        %v1805 = vadd.f32 %v783, %v1804
        %v1806 = vpop.f32.mrb[0].mxu0
        %v1807 = vadd.f32 %v787, %v1806
        %v1808 = vpop.f32.mrb[0].mxu0
        %v1809 = vadd.f32 %v783, %v1808
        %v1810 = vpop.f32.mrb[0].mxu0
        %v1811 = vadd.f32 %v787, %v1810
        %1812 = vmatprep.mubr.bf16.mxu0 %v1007
        %1813 = vmatmul.mubr.bf16.gmra.mrb[0].mxu0 %v1006
        %v1814 = vpop.f32.mrb[0].mxu0
        %v1815 = vadd.f32 %v783, %v1814
        %v1816 = vpop.f32.mrb[0].mxu0
        %v1817 = vadd.f32 %v787, %v1816
        %v1818 = vpop.f32.mrb[0].mxu0
        %v1819 = vadd.f32 %v783, %v1818
        %v1820 = vpop.f32.mrb[0].mxu0
        %v1821 = vadd.f32 %v787, %v1820
        %1822 = vmatprep.mubr.bf16.mxu0 %v1015
        %1823 = vmatmul.mubr.bf16.gmra.mrb[0].mxu0 %v1014
        %v1824 = vpop.f32.mrb[0].mxu0
        %v1825 = vadd.f32 %v783, %v1824
        %v1826 = vpop.f32.mrb[0].mxu0
        %v1827 = vadd.f32 %v787, %v1826
        %v1828 = vpop.f32.mrb[0].mxu0
        %v1829 = vadd.f32 %v783, %v1828
        %v1830 = vpop.f32.mrb[0].mxu0
        %v1831 = vadd.f32 %v787, %v1830
        %1832 = vmatprep.mubr.bf16.mxu0 %v1023
        %1833 = vmatmul.mubr.bf16.gmra.mrb[0].mxu0 %v1022
        %v1834 = vpop.f32.mrb[0].mxu0
        %v1835 = vadd.f32 %v783, %v1834
        %v1836 = vpop.f32.mrb[0].mxu0
        %v1837 = vadd.f32 %v787, %v1836
        %v1838 = vpop.f32.mrb[0].mxu0
        %v1839 = vadd.f32 %v783, %v1838
        %v1840 = vpop.f32.mrb[0].mxu0
        %v1841 = vadd.f32 %v787, %v1840
        %1842 = vmatprep.mubr.bf16.mxu0 %v1031
        %1843 = vmatmul.mubr.bf16.gmra.mrb[0].mxu0 %v1030
        %v1844 = vpop.f32.mrb[0].mxu0
        %v1845 = vadd.f32 %v783, %v1844
        %v1846 = vpop.f32.mrb[0].mxu0
        %v1847 = vadd.f32 %v787, %v1846
        %v1848 = vpop.f32.mrb[0].mxu0
        %v1849 = vadd.f32 %v783, %v1848
        %v1850 = vpop.f32.mrb[0].mxu0
        %v1851 = vadd.f32 %v787, %v1850
        %1852 = vmatprep.mubr.bf16.mxu0 %v1039
        %1853 = vmatmul.mubr.bf16.gmra.mrb[0].mxu0 %v1038
        %v1854 = vpop.f32.mrb[0].mxu0
        %v1855 = vadd.f32 %v783, %v1854
        %v1856 = vpop.f32.mrb[0].mxu0
        %v1857 = vadd.f32 %v787, %v1856
        %v1858 = vpop.f32.mrb[0].mxu0
        %v1859 = vadd.f32 %v783, %v1858
        %v1860 = vpop.f32.mrb[0].mxu0
        %v1861 = vadd.f32 %v787, %v1860
        %1862 = vdwg.mxu0
        %1863 = vmatprep.subr.bf16.mxu0 %v1527
        %1864 = vmatpush1.bf16.msra.mxu0 %v1526
        %1865 = vmatprep.subr.bf16.mxu0 %v1529
        %1866 = vmatpush1.bf16.msra.mxu0 %v1528
        %1867 = vmatprep.subr.bf16.mxu0 %v1531
        %1868 = vmatpush1.bf16.msra.mxu0 %v1530
        %1869 = vmatprep.subr.bf16.mxu0 %v1533
        %1870 = vmatpush1.bf16.msra.mxu0 %v1532
        %1871 = vmatprep.subr.bf16.mxu0 %v1535
        %1872 = vmatpush1.bf16.msra.mxu0 %v1534
        %1873 = vmatprep.subr.bf16.mxu0 %v1537
        %1874 = vmatpush1.bf16.msra.mxu0 %v1536
        %1875 = vmatprep.subr.bf16.mxu0 %v1539
        %1876 = vmatpush1.bf16.msra.mxu0 %v1538
        %1877 = vmatprep.subr.bf16.mxu0 %v1541
        %1878 = vmatpush1.bf16.msra.mxu0 %v1540
        %1879 = vmatprep.subr.bf16.mxu0 %v1543
        %1880 = vmatpush1.bf16.msra.mxu0 %v1542
        %1881 = vmatprep.subr.bf16.mxu0 %v1545
        %1882 = vmatpush1.bf16.msra.mxu0 %v1544
        %1883 = vmatprep.subr.bf16.mxu0 %v1547
        %1884 = vmatpush1.bf16.msra.mxu0 %v1546
        %1885 = vmatprep.subr.bf16.mxu0 %v1549
        %1886 = vmatpush1.bf16.msra.mxu0 %v1548
        %1887 = vmatprep.subr.bf16.mxu0 %v1551
        %1888 = vmatpush1.bf16.msra.mxu0 %v1550
        %1889 = vmatprep.subr.bf16.mxu0 %v1553
        %1890 = vmatpush1.bf16.msra.mxu0 %v1552
        %1891 = vmatprep.subr.bf16.mxu0 %v1555
        %1892 = vmatpush1.bf16.msra.mxu0 %v1554
        %1893 = vmatprep.subr.bf16.mxu0 %v1557
        %1894 = vmatpush1.bf16.msra.mxu0 %v1556
        %1895 = vmatprep.mubr.bf16.mxu0 %v985
        %1896 = vmatmul.mubr.bf16.gmra.mrb[0].mxu0 %v984
        %v1897 = vpop.f32.mrb[0].mxu0
        %v1898 = vadd.f32 %v1785, %v1897
        %v1899 = vpop.f32.mrb[0].mxu0
        %v1900 = vadd.f32 %v1787, %v1899
        %v1901 = vpop.f32.mrb[0].mxu0
        %v1902 = vadd.f32 %v1789, %v1901
        %v1903 = vpop.f32.mrb[0].mxu0
        %v1904 = vadd.f32 %v1791, %v1903
        %1905 = vmatprep.mubr.bf16.mxu0 %v993
        %1906 = vmatmul.mubr.bf16.gmra.mrb[0].mxu0 %v992
        %v1907 = vpop.f32.mrb[0].mxu0
        %v1908 = vadd.f32 %v1795, %v1907
        %v1909 = vpop.f32.mrb[0].mxu0
        %v1910 = vadd.f32 %v1797, %v1909
        %v1911 = vpop.f32.mrb[0].mxu0
        %v1912 = vadd.f32 %v1799, %v1911
        %v1913 = vpop.f32.mrb[0].mxu0
        %v1914 = vadd.f32 %v1801, %v1913
        %1915 = vmatprep.mubr.bf16.mxu0 %v1001
        %1916 = vmatmul.mubr.bf16.gmra.mrb[0].mxu0 %v1000
        %v1917 = vpop.f32.mrb[0].mxu0
        %v1918 = vadd.f32 %v1805, %v1917
        %v1919 = vpop.f32.mrb[0].mxu0
        %v1920 = vadd.f32 %v1807, %v1919
        %v1921 = vpop.f32.mrb[0].mxu0
        %v1922 = vadd.f32 %v1809, %v1921
        %v1923 = vpop.f32.mrb[0].mxu0
        %v1924 = vadd.f32 %v1811, %v1923
        %1925 = vmatprep.mubr.bf16.mxu0 %v1009
        %1926 = vmatmul.mubr.bf16.gmra.mrb[0].mxu0 %v1008
        %v1927 = vpop.f32.mrb[0].mxu0
        %v1928 = vadd.f32 %v1815, %v1927
        %v1929 = vpop.f32.mrb[0].mxu0
        %v1930 = vadd.f32 %v1817, %v1929
        %v1931 = vpop.f32.mrb[0].mxu0
        %v1932 = vadd.f32 %v1819, %v1931
        %v1933 = vpop.f32.mrb[0].mxu0
        %v1934 = vadd.f32 %v1821, %v1933
        %1935 = vmatprep.mubr.bf16.mxu0 %v1017
        %1936 = vmatmul.mubr.bf16.gmra.mrb[0].mxu0 %v1016
        %v1937 = vpop.f32.mrb[0].mxu0
        %v1938 = vadd.f32 %v1825, %v1937
        %v1939 = vpop.f32.mrb[0].mxu0
        %v1940 = vadd.f32 %v1827, %v1939
        %v1941 = vpop.f32.mrb[0].mxu0
        %v1942 = vadd.f32 %v1829, %v1941
        %v1943 = vpop.f32.mrb[0].mxu0
        %v1944 = vadd.f32 %v1831, %v1943
        %1945 = vmatprep.mubr.bf16.mxu0 %v1025
        %1946 = vmatmul.mubr.bf16.gmra.mrb[0].mxu0 %v1024
        %v1947 = vpop.f32.mrb[0].mxu0
        %v1948 = vadd.f32 %v1835, %v1947
        %v1949 = vpop.f32.mrb[0].mxu0
        %v1950 = vadd.f32 %v1837, %v1949
        %v1951 = vpop.f32.mrb[0].mxu0
        %v1952 = vadd.f32 %v1839, %v1951
        %v1953 = vpop.f32.mrb[0].mxu0
        %v1954 = vadd.f32 %v1841, %v1953
        %1955 = vmatprep.mubr.bf16.mxu0 %v1033
        %1956 = vmatmul.mubr.bf16.gmra.mrb[0].mxu0 %v1032
        %v1957 = vpop.f32.mrb[0].mxu0
        %v1958 = vadd.f32 %v1845, %v1957
        %v1959 = vpop.f32.mrb[0].mxu0
        %v1960 = vadd.f32 %v1847, %v1959
        %v1961 = vpop.f32.mrb[0].mxu0
        %v1962 = vadd.f32 %v1849, %v1961
        %v1963 = vpop.f32.mrb[0].mxu0
        %v1964 = vadd.f32 %v1851, %v1963
        %1965 = vmatprep.mubr.bf16.mxu0 %v1041
        %1966 = vmatmul.mubr.bf16.gmra.mrb[0].mxu0 %v1040
        %v1967 = vpop.f32.mrb[0].mxu0
        %v1968 = vadd.f32 %v1855, %v1967
        %v1969 = vpop.f32.mrb[0].mxu0
        %v1970 = vadd.f32 %v1857, %v1969
        %v1971 = vpop.f32.mrb[0].mxu0
        %v1972 = vadd.f32 %v1859, %v1971
        %v1973 = vpop.f32.mrb[0].mxu0
        %v1974 = vadd.f32 %v1861, %v1973
        %1975 = vdwg.mxu0
        %1976 = vmatprep.subr.bf16.mxu0 %v1559
        %1977 = vmatpush1.bf16.msra.mxu0 %v1558
        %1978 = vmatprep.subr.bf16.mxu0 %v1561
        %1979 = vmatpush1.bf16.msra.mxu0 %v1560
        %1980 = vmatprep.subr.bf16.mxu0 %v1563
        %1981 = vmatpush1.bf16.msra.mxu0 %v1562
        %1982 = vmatprep.subr.bf16.mxu0 %v1565
        %1983 = vmatpush1.bf16.msra.mxu0 %v1564
        %1984 = vmatprep.subr.bf16.mxu0 %v1567
        %1985 = vmatpush1.bf16.msra.mxu0 %v1566
        %1986 = vmatprep.subr.bf16.mxu0 %v1569
        %1987 = vmatpush1.bf16.msra.mxu0 %v1568
        %1988 = vmatprep.subr.bf16.mxu0 %v1571
        %1989 = vmatpush1.bf16.msra.mxu0 %v1570
        %1990 = vmatprep.subr.bf16.mxu0 %v1573
        %1991 = vmatpush1.bf16.msra.mxu0 %v1572
        %1992 = vmatprep.subr.bf16.mxu0 %v1575
        %1993 = vmatpush1.bf16.msra.mxu0 %v1574
        %1994 = vmatprep.subr.bf16.mxu0 %v1577
        %1995 = vmatpush1.bf16.msra.mxu0 %v1576
        %1996 = vmatprep.subr.bf16.mxu0 %v1579
        %1997 = vmatpush1.bf16.msra.mxu0 %v1578
        %1998 = vmatprep.subr.bf16.mxu0 %v1581
        %1999 = vmatpush1.bf16.msra.mxu0 %v1580
        %2000 = vmatprep.subr.bf16.mxu0 %v1583
        %2001 = vmatpush1.bf16.msra.mxu0 %v1582
        %2002 = vmatprep.subr.bf16.mxu0 %v1585
        %2003 = vmatpush1.bf16.msra.mxu0 %v1584
        %2004 = vmatprep.subr.bf16.mxu0 %v1587
        %2005 = vmatpush1.bf16.msra.mxu0 %v1586
        %2006 = vmatprep.subr.bf16.mxu0 %v1589
        %2007 = vmatpush1.bf16.msra.mxu0 %v1588
        %2008 = vmatprep.mubr.bf16.mxu0 %v987
        %2009 = vmatmul.mubr.bf16.gmra.mrb[0].mxu0 %v986
        %v2010 = vpop.f32.mrb[0].mxu0
        %v2011 = vadd.f32 %v1898, %v2010
        %v2012 = vpop.f32.mrb[0].mxu0
        %v2013 = vadd.f32 %v1900, %v2012
        %v2014 = vpop.f32.mrb[0].mxu0
        %v2015 = vadd.f32 %v1902, %v2014
        %v2016 = vpop.f32.mrb[0].mxu0
        %v2017 = vadd.f32 %v1904, %v2016
        %2018 = vmatprep.mubr.bf16.mxu0 %v995
        %2019 = vmatmul.mubr.bf16.gmra.mrb[0].mxu0 %v994
        %v2020 = vpop.f32.mrb[0].mxu0
        %v2021 = vadd.f32 %v1908, %v2020
        %v2022 = vpop.f32.mrb[0].mxu0
        %v2023 = vadd.f32 %v1910, %v2022
        %v2024 = vpop.f32.mrb[0].mxu0
        %v2025 = vadd.f32 %v1912, %v2024
        %v2026 = vpop.f32.mrb[0].mxu0
        %v2027 = vadd.f32 %v1914, %v2026
        %2028 = vmatprep.mubr.bf16.mxu0 %v1003
        %2029 = vmatmul.mubr.bf16.gmra.mrb[0].mxu0 %v1002
        %v2030 = vpop.f32.mrb[0].mxu0
        %v2031 = vadd.f32 %v1918, %v2030
        %v2032 = vpop.f32.mrb[0].mxu0
        %v2033 = vadd.f32 %v1920, %v2032
        %v2034 = vpop.f32.mrb[0].mxu0
        %v2035 = vadd.f32 %v1922, %v2034
        %v2036 = vpop.f32.mrb[0].mxu0
        %v2037 = vadd.f32 %v1924, %v2036
        %2038 = vmatprep.mubr.bf16.mxu0 %v1011
        %2039 = vmatmul.mubr.bf16.gmra.mrb[0].mxu0 %v1010
        %v2040 = vpop.f32.mrb[0].mxu0
        %v2041 = vadd.f32 %v1928, %v2040
        %v2042 = vpop.f32.mrb[0].mxu0
        %v2043 = vadd.f32 %v1930, %v2042
        %v2044 = vpop.f32.mrb[0].mxu0
        %v2045 = vadd.f32 %v1932, %v2044
        %v2046 = vpop.f32.mrb[0].mxu0
        %v2047 = vadd.f32 %v1934, %v2046
        %2048 = vmatprep.mubr.bf16.mxu0 %v1019
        %2049 = vmatmul.mubr.bf16.gmra.mrb[0].mxu0 %v1018
        %v2050 = vpop.f32.mrb[0].mxu0
        %v2051 = vadd.f32 %v1938, %v2050
        %v2052 = vpop.f32.mrb[0].mxu0
        %v2053 = vadd.f32 %v1940, %v2052
        %v2054 = vpop.f32.mrb[0].mxu0
        %v2055 = vadd.f32 %v1942, %v2054
        %v2056 = vpop.f32.mrb[0].mxu0
        %v2057 = vadd.f32 %v1944, %v2056
        %2058 = vmatprep.mubr.bf16.mxu0 %v1027
        %2059 = vmatmul.mubr.bf16.gmra.mrb[0].mxu0 %v1026
        %v2060 = vpop.f32.mrb[0].mxu0
        %v2061 = vadd.f32 %v1948, %v2060
        %v2062 = vpop.f32.mrb[0].mxu0
        %v2063 = vadd.f32 %v1950, %v2062
        %v2064 = vpop.f32.mrb[0].mxu0
        %v2065 = vadd.f32 %v1952, %v2064
        %v2066 = vpop.f32.mrb[0].mxu0
        %v2067 = vadd.f32 %v1954, %v2066
        %2068 = vmatprep.mubr.bf16.mxu0 %v1035
        %2069 = vmatmul.mubr.bf16.gmra.mrb[0].mxu0 %v1034
        %v2070 = vpop.f32.mrb[0].mxu0
        %v2071 = vadd.f32 %v1958, %v2070
        %v2072 = vpop.f32.mrb[0].mxu0
        %v2073 = vadd.f32 %v1960, %v2072
        %v2074 = vpop.f32.mrb[0].mxu0
        %v2075 = vadd.f32 %v1962, %v2074
        %v2076 = vpop.f32.mrb[0].mxu0
        %v2077 = vadd.f32 %v1964, %v2076
        %2078 = vmatprep.mubr.bf16.mxu0 %v1043
        %2079 = vmatmul.mubr.bf16.gmra.mrb[0].mxu0 %v1042
        %v2080 = vpop.f32.mrb[0].mxu0
        %v2081 = vadd.f32 %v1968, %v2080
        %v2082 = vpop.f32.mrb[0].mxu0
        %v2083 = vadd.f32 %v1970, %v2082
        %v2084 = vpop.f32.mrb[0].mxu0
        %v2085 = vadd.f32 %v1972, %v2084
        %v2086 = vpop.f32.mrb[0].mxu0
        %v2087 = vadd.f32 %v1974, %v2086
        %2088 = vdwg.mxu0
        %2089 = vmatprep.subr.bf16.mxu0 %v1591
        %2090 = vmatpush1.bf16.msra.mxu0 %v1590
        %2091 = vmatprep.subr.bf16.mxu0 %v1593
        %2092 = vmatpush1.bf16.msra.mxu0 %v1592
        %2093 = vmatprep.subr.bf16.mxu0 %v1595
        %2094 = vmatpush1.bf16.msra.mxu0 %v1594
        %2095 = vmatprep.subr.bf16.mxu0 %v1597
        %2096 = vmatpush1.bf16.msra.mxu0 %v1596
        %2097 = vmatprep.subr.bf16.mxu0 %v1599
        %2098 = vmatpush1.bf16.msra.mxu0 %v1598
        %2099 = vmatprep.subr.bf16.mxu0 %v1601
        %2100 = vmatpush1.bf16.msra.mxu0 %v1600
        %2101 = vmatprep.subr.bf16.mxu0 %v1603
        %2102 = vmatpush1.bf16.msra.mxu0 %v1602
        %2103 = vmatprep.subr.bf16.mxu0 %v1605
        %2104 = vmatpush1.bf16.msra.mxu0 %v1604
        %2105 = vmatprep.subr.bf16.mxu0 %v1607
        %2106 = vmatpush1.bf16.msra.mxu0 %v1606
        %2107 = vmatprep.subr.bf16.mxu0 %v1609
        %2108 = vmatpush1.bf16.msra.mxu0 %v1608
        %2109 = vmatprep.subr.bf16.mxu0 %v1611
        %2110 = vmatpush1.bf16.msra.mxu0 %v1610
        %2111 = vmatprep.subr.bf16.mxu0 %v1613
        %2112 = vmatpush1.bf16.msra.mxu0 %v1612
        %2113 = vmatprep.subr.bf16.mxu0 %v1615
        %2114 = vmatpush1.bf16.msra.mxu0 %v1614
        %2115 = vmatprep.subr.bf16.mxu0 %v1617
        %2116 = vmatpush1.bf16.msra.mxu0 %v1616
        %2117 = vmatprep.subr.bf16.mxu0 %v1619
        %2118 = vmatpush1.bf16.msra.mxu0 %v1618
        %2119 = vmatprep.subr.bf16.mxu0 %v1621
        %2120 = vmatpush1.bf16.msra.mxu0 %v1620
        %2121 = vmatprep.mubr.bf16.mxu0 %v989
        %2122 = vmatmul.mubr.bf16.gmra.mrb[0].mxu0 %v988
        %v2123 = vpop.f32.mrb[0].mxu0
        %v2124 = vadd.f32 %v2011, %v2123
        %v2125 = vpop.f32.mrb[0].mxu0
        %v2126 = vadd.f32 %v2013, %v2125
        %v2127 = vpop.f32.mrb[0].mxu0
        %v2128 = vadd.f32 %v2015, %v2127
        %v2129 = vpop.f32.mrb[0].mxu0
        %v2130 = vadd.f32 %v2017, %v2129
        %2131 = vmatprep.mubr.bf16.mxu0 %v997
        %2132 = vmatmul.mubr.bf16.gmra.mrb[0].mxu0 %v996
        %v2133 = vpop.f32.mrb[0].mxu0
        %v2134 = vadd.f32 %v2021, %v2133
        %v2135 = vpop.f32.mrb[0].mxu0
        %v2136 = vadd.f32 %v2023, %v2135
        %v2137 = vpop.f32.mrb[0].mxu0
        %v2138 = vadd.f32 %v2025, %v2137
        %v2139 = vpop.f32.mrb[0].mxu0
        %v2140 = vadd.f32 %v2027, %v2139
        %2141 = vmatprep.mubr.bf16.mxu0 %v1005
        %2142 = vmatmul.mubr.bf16.gmra.mrb[0].mxu0 %v1004
        %v2143 = vpop.f32.mrb[0].mxu0
        %v2144 = vadd.f32 %v2031, %v2143
        %v2145 = vpop.f32.mrb[0].mxu0
        %v2146 = vadd.f32 %v2033, %v2145
        %v2147 = vpop.f32.mrb[0].mxu0
        %v2148 = vadd.f32 %v2035, %v2147
        %v2149 = vpop.f32.mrb[0].mxu0
        %v2150 = vadd.f32 %v2037, %v2149
        %2151 = vmatprep.mubr.bf16.mxu0 %v1013
        %2152 = vmatmul.mubr.bf16.gmra.mrb[0].mxu0 %v1012
        %v2153 = vpop.f32.mrb[0].mxu0
        %v2154 = vadd.f32 %v2041, %v2153
        %v2155 = vpop.f32.mrb[0].mxu0
        %v2156 = vadd.f32 %v2043, %v2155
        %v2157 = vpop.f32.mrb[0].mxu0
        %v2158 = vadd.f32 %v2045, %v2157
        %v2159 = vpop.f32.mrb[0].mxu0
        %v2160 = vadd.f32 %v2047, %v2159
        %2161 = vmatprep.mubr.bf16.mxu0 %v1021
        %2162 = vmatmul.mubr.bf16.gmra.mrb[0].mxu0 %v1020
        %v2163 = vpop.f32.mrb[0].mxu0
        %v2164 = vadd.f32 %v2051, %v2163
        %v2165 = vpop.f32.mrb[0].mxu0
        %v2166 = vadd.f32 %v2053, %v2165
        %v2167 = vpop.f32.mrb[0].mxu0
        %v2168 = vadd.f32 %v2055, %v2167
        %v2169 = vpop.f32.mrb[0].mxu0
        %v2170 = vadd.f32 %v2057, %v2169
        %2171 = vmatprep.mubr.bf16.mxu0 %v1029
        %2172 = vmatmul.mubr.bf16.gmra.mrb[0].mxu0 %v1028
        %v2173 = vpop.f32.mrb[0].mxu0
        %v2174 = vadd.f32 %v2061, %v2173
        %v2175 = vpop.f32.mrb[0].mxu0
        %v2176 = vadd.f32 %v2063, %v2175
        %v2177 = vpop.f32.mrb[0].mxu0
        %v2178 = vadd.f32 %v2065, %v2177
        %v2179 = vpop.f32.mrb[0].mxu0
        %v2180 = vadd.f32 %v2067, %v2179
        %2181 = vmatprep.mubr.bf16.mxu0 %v1037
        %2182 = vmatmul.mubr.bf16.gmra.mrb[0].mxu0 %v1036
        %v2183 = vpop.f32.mrb[0].mxu0
        %v2184 = vadd.f32 %v2071, %v2183
        %v2185 = vpop.f32.mrb[0].mxu0
        %v2186 = vadd.f32 %v2073, %v2185
        %v2187 = vpop.f32.mrb[0].mxu0
        %v2188 = vadd.f32 %v2075, %v2187
        %v2189 = vpop.f32.mrb[0].mxu0
        %v2190 = vadd.f32 %v2077, %v2189
        %2191 = vmatprep.mubr.bf16.mxu0 %v1045
        %2192 = vmatmul.mubr.bf16.gmra.mrb[0].mxu0 %v1044
        %v2193 = vpop.f32.mrb[0].mxu0
        %v2194 = vadd.f32 %v2081, %v2193
        %v2195 = vpop.f32.mrb[0].mxu0
        %v2196 = vadd.f32 %v2083, %v2195
        %v2197 = vpop.f32.mrb[0].mxu0
        %v2198 = vadd.f32 %v2085, %v2197
        %v2199 = vpop.f32.mrb[0].mxu0
        %v2200 = vadd.f32 %v2087, %v2199
        %2201 = vdwg.mxu0
        %v2202 = vmax.f32 %v2124, 0.0
        %v2203 = vmax.f32 %v2126, 0.0
        %v2204 = vmax.f32 %v2128, 0.0
        %v2205 = vmax.f32 %v2130, 0.0
        %v2206 = vmax.f32 %v2134, 0.0
        %v2207 = vmax.f32 %v2136, 0.0
        %v2208 = vmax.f32 %v2138, 0.0
        %v2209 = vmax.f32 %v2140, 0.0
        %v2210 = vmax.f32 %v2144, 0.0
        %v2211 = vmax.f32 %v2146, 0.0
        %v2212 = vmax.f32 %v2148, 0.0
        %v2213 = vmax.f32 %v2150, 0.0
        %v2214 = vmax.f32 %v2154, 0.0
        %v2215 = vmax.f32 %v2156, 0.0
        %v2216 = vmax.f32 %v2158, 0.0
        %v2217 = vmax.f32 %v2160, 0.0
        %v2218 = vmax.f32 %v2164, 0.0
        %v2219 = vmax.f32 %v2166, 0.0
        %v2220 = vmax.f32 %v2168, 0.0
        %v2221 = vmax.f32 %v2170, 0.0
        %v2222 = vmax.f32 %v2174, 0.0
        %v2223 = vmax.f32 %v2176, 0.0
        %v2224 = vmax.f32 %v2178, 0.0
        %v2225 = vmax.f32 %v2180, 0.0
        %v2226 = vmax.f32 %v2184, 0.0
        %v2227 = vmax.f32 %v2186, 0.0
        %v2228 = vmax.f32 %v2188, 0.0
        %v2229 = vmax.f32 %v2190, 0.0
        %v2230 = vmax.f32 %v2194, 0.0
        %v2231 = vmax.f32 %v2196, 0.0
        %v2232 = vmax.f32 %v2198, 0.0
        %v2233 = vmax.f32 %v2200, 0.0
        %v2234 = vpack.c.bf16 %v2204, %v2202
        %v2235 = vpack.c.bf16 %v2205, %v2203
        %v2236 = vpack.c.bf16 %v2208, %v2206
        %v2237 = vpack.c.bf16 %v2209, %v2207
        %v2238 = vpack.c.bf16 %v2212, %v2210
        %v2239 = vpack.c.bf16 %v2213, %v2211
        %v2240 = vpack.c.bf16 %v2216, %v2214
        %v2241 = vpack.c.bf16 %v2217, %v2215
        %v2242 = vpack.c.bf16 %v2220, %v2218
        %v2243 = vpack.c.bf16 %v2221, %v2219
        %v2244 = vpack.c.bf16 %v2224, %v2222
        %v2245 = vpack.c.bf16 %v2225, %v2223
        %v2246 = vpack.c.bf16 %v2228, %v2226
        %v2247 = vpack.c.bf16 %v2229, %v2227
        %v2248 = vpack.c.bf16 %v2232, %v2230
        %v2249 = vpack.c.bf16 %v2233, %v2231
        %v2250 = vld [vmem:[#allocation10] sm:$0xff]
        %v2251 = vld [vmem:[#allocation10 + $0x8] sm:$0xff]
        %v2252 = vld [vmem:[#allocation10 + $0x10] sm:$0xff]
        %v2253 = vld [vmem:[#allocation10 + $0x18] sm:$0xff]
        %v2254 = vld [vmem:[#allocation10 + $0x20] sm:$0xff]
        %v2255 = vld [vmem:[#allocation10 + $0x28] sm:$0xff]
        %v2256 = vld [vmem:[#allocation10 + $0x30] sm:$0xff]
        %v2257 = vld [vmem:[#allocation10 + $0x38] sm:$0xff]
        %v2258 = vld [vmem:[#allocation10 + $0x40] sm:$0xff]
        %v2259 = vld [vmem:[#allocation10 + $0x48] sm:$0xff]
        %v2260 = vld [vmem:[#allocation10 + $0x50] sm:$0xff]
        %v2261 = vld [vmem:[#allocation10 + $0x58] sm:$0xff]
        %v2262 = vld [vmem:[#allocation10 + $0x60] sm:$0xff]
        %v2263 = vld [vmem:[#allocation10 + $0x68] sm:$0xff]
        %v2264 = vld [vmem:[#allocation10 + $0x70] sm:$0xff]
        %v2265 = vld [vmem:[#allocation10 + $0x78] sm:$0xff]
        %v2266 = vld [vmem:[#allocation10 + $0x80] sm:$0xff]
        %v2267 = vld [vmem:[#allocation10 + $0x88] sm:$0xff]
        %v2268 = vld [vmem:[#allocation10 + $0x90] sm:$0xff]
        %v2269 = vld [vmem:[#allocation10 + $0x98] sm:$0xff]
        %v2270 = vld [vmem:[#allocation10 + $0xa0] sm:$0xff]
        %v2271 = vld [vmem:[#allocation10 + $0xa8] sm:$0xff]
        %v2272 = vld [vmem:[#allocation10 + $0xb0] sm:$0xff]
        %v2273 = vld [vmem:[#allocation10 + $0xb8] sm:$0xff]
        %v2274 = vld [vmem:[#allocation10 + $0xc0] sm:$0xff]
        %v2275 = vld [vmem:[#allocation10 + $0xc8] sm:$0xff]
        %v2276 = vld [vmem:[#allocation10 + $0xd0] sm:$0xff]
        %v2277 = vld [vmem:[#allocation10 + $0xd8] sm:$0xff]
        %v2278 = vld [vmem:[#allocation10 + $0xe0] sm:$0xff]
        %v2279 = vld [vmem:[#allocation10 + $0xe8] sm:$0xff]
        %v2280 = vld [vmem:[#allocation10 + $0xf0] sm:$0xff]
        %v2281 = vld [vmem:[#allocation10 + $0xf8] sm:$0xff]
        %v2282 = vld [vmem:[#allocation11] sm:$0x3]
        %v2284 = vlaneseq
        %v2285 = vshrl.u32 %v2284, 7
        %v2286 = vsub.s32 0, %v2285
        %v2287 = vrot.slane %v2282, %v2286
        %v2288 = vlaneseq
        %v2289 = vshrl.u32 %v2288, 7
        %v2290 = vsub.s32 1, %v2289
        %v2291 = vrot.slane %v2282, %v2290
        %v2326 = vunpack.c.l.b16 %v2250
        %v2327 = vunpack.c.h.b16 %v2250
        %v2328 = vunpack.c.l.b16 %v2251
        %v2329 = vunpack.c.h.b16 %v2251
        %v2330 = vunpack.c.l.b16 %v2252
        %v2331 = vunpack.c.h.b16 %v2252
        %v2332 = vunpack.c.l.b16 %v2253
        %v2333 = vunpack.c.h.b16 %v2253
        %v2334 = vunpack.c.l.b16 %v2254
        %v2335 = vunpack.c.h.b16 %v2254
        %v2336 = vunpack.c.l.b16 %v2255
        %v2337 = vunpack.c.h.b16 %v2255
        %v2338 = vunpack.c.l.b16 %v2256
        %v2339 = vunpack.c.h.b16 %v2256
        %v2340 = vunpack.c.l.b16 %v2257
        %v2341 = vunpack.c.h.b16 %v2257
        %v2342 = vunpack.c.l.b16 %v2258
        %v2343 = vunpack.c.h.b16 %v2258
        %v2344 = vunpack.c.l.b16 %v2259
        %v2345 = vunpack.c.h.b16 %v2259
        %v2346 = vunpack.c.l.b16 %v2260
        %v2347 = vunpack.c.h.b16 %v2260
        %v2348 = vunpack.c.l.b16 %v2261
        %v2349 = vunpack.c.h.b16 %v2261
        %v2350 = vunpack.c.l.b16 %v2262
        %v2351 = vunpack.c.h.b16 %v2262
        %v2352 = vunpack.c.l.b16 %v2263
        %v2353 = vunpack.c.h.b16 %v2263
        %v2354 = vunpack.c.l.b16 %v2264
        %v2355 = vunpack.c.h.b16 %v2264
        %v2356 = vunpack.c.l.b16 %v2265
        %v2357 = vunpack.c.h.b16 %v2265
        %v2358 = vunpack.c.l.b16 %v2266
        %v2359 = vunpack.c.h.b16 %v2266
        %v2360 = vunpack.c.l.b16 %v2267
        %v2361 = vunpack.c.h.b16 %v2267
        %v2362 = vunpack.c.l.b16 %v2268
        %v2363 = vunpack.c.h.b16 %v2268
        %v2364 = vunpack.c.l.b16 %v2269
        %v2365 = vunpack.c.h.b16 %v2269
        %v2366 = vunpack.c.l.b16 %v2270
        %v2367 = vunpack.c.h.b16 %v2270
        %v2368 = vunpack.c.l.b16 %v2271
        %v2369 = vunpack.c.h.b16 %v2271
        %v2370 = vunpack.c.l.b16 %v2272
        %v2371 = vunpack.c.h.b16 %v2272
        %v2372 = vunpack.c.l.b16 %v2273
        %v2373 = vunpack.c.h.b16 %v2273
        %v2374 = vunpack.c.l.b16 %v2274
        %v2375 = vunpack.c.h.b16 %v2274
        %v2376 = vunpack.c.l.b16 %v2275
        %v2377 = vunpack.c.h.b16 %v2275
        %v2378 = vunpack.c.l.b16 %v2276
        %v2379 = vunpack.c.h.b16 %v2276
        %v2380 = vunpack.c.l.b16 %v2277
        %v2381 = vunpack.c.h.b16 %v2277
        %v2382 = vunpack.c.l.b16 %v2278
        %v2383 = vunpack.c.h.b16 %v2278
        %v2384 = vunpack.c.l.b16 %v2279
        %v2385 = vunpack.c.h.b16 %v2279
        %v2386 = vunpack.c.l.b16 %v2280
        %v2387 = vunpack.c.h.b16 %v2280
        %v2388 = vunpack.c.l.b16 %v2281
        %v2389 = vunpack.c.h.b16 %v2281
        %v2390 = vpack.c.b16 %v2328, %v2326
        %v2391 = vpack.c.b16 %v2329, %v2327
        %v2392 = vpack.c.b16 %v2332, %v2330
        %v2393 = vpack.c.b16 %v2333, %v2331
        %v2394 = vpack.c.b16 %v2336, %v2334
        %v2395 = vpack.c.b16 %v2337, %v2335
        %v2396 = vpack.c.b16 %v2340, %v2338
        %v2397 = vpack.c.b16 %v2341, %v2339
        %v2398 = vpack.c.b16 %v2344, %v2342
        %v2399 = vpack.c.b16 %v2345, %v2343
        %v2400 = vpack.c.b16 %v2348, %v2346
        %v2401 = vpack.c.b16 %v2349, %v2347
        %v2402 = vpack.c.b16 %v2352, %v2350
        %v2403 = vpack.c.b16 %v2353, %v2351
        %v2404 = vpack.c.b16 %v2356, %v2354
        %v2405 = vpack.c.b16 %v2357, %v2355
        %v2406 = vpack.c.b16 %v2360, %v2358
        %v2407 = vpack.c.b16 %v2361, %v2359
        %v2408 = vpack.c.b16 %v2364, %v2362
        %v2409 = vpack.c.b16 %v2365, %v2363
        %v2410 = vpack.c.b16 %v2368, %v2366
        %v2411 = vpack.c.b16 %v2369, %v2367
        %v2412 = vpack.c.b16 %v2372, %v2370
        %v2413 = vpack.c.b16 %v2373, %v2371
        %v2414 = vpack.c.b16 %v2376, %v2374
        %v2415 = vpack.c.b16 %v2377, %v2375
        %v2416 = vpack.c.b16 %v2380, %v2378
        %v2417 = vpack.c.b16 %v2381, %v2379
        %v2418 = vpack.c.b16 %v2384, %v2382
        %v2419 = vpack.c.b16 %v2385, %v2383
        %v2420 = vpack.c.b16 %v2388, %v2386
        %v2421 = vpack.c.b16 %v2389, %v2387
        %2454 = vmatprep.subr.bf16.mxu0 %v2391
        %2455 = vmatpush1.bf16.msra.mxu0 %v2390
        %2456 = vmatprep.subr.bf16.mxu0 %v2393
        %2457 = vmatpush1.bf16.msra.mxu0 %v2392
        %2458 = vmatprep.subr.bf16.mxu0 %v2395
        %2459 = vmatpush1.bf16.msra.mxu0 %v2394
        %2460 = vmatprep.subr.bf16.mxu0 %v2397
        %2461 = vmatpush1.bf16.msra.mxu0 %v2396
        %2462 = vmatprep.subr.bf16.mxu0 %v2399
        %2463 = vmatpush1.bf16.msra.mxu0 %v2398
        %2464 = vmatprep.subr.bf16.mxu0 %v2401
        %2465 = vmatpush1.bf16.msra.mxu0 %v2400
        %2466 = vmatprep.subr.bf16.mxu0 %v2403
        %2467 = vmatpush1.bf16.msra.mxu0 %v2402
        %2468 = vmatprep.subr.bf16.mxu0 %v2405
        %2469 = vmatpush1.bf16.msra.mxu0 %v2404
        %2470 = vmatprep.subr.bf16.mxu0 %v2407
        %2471 = vmatpush1.bf16.msra.mxu0 %v2406
        %2472 = vmatprep.subr.bf16.mxu0 %v2409
        %2473 = vmatpush1.bf16.msra.mxu0 %v2408
        %2474 = vmatprep.subr.bf16.mxu0 %v2411
        %2475 = vmatpush1.bf16.msra.mxu0 %v2410
        %2476 = vmatprep.subr.bf16.mxu0 %v2413
        %2477 = vmatpush1.bf16.msra.mxu0 %v2412
        %2478 = vmatprep.subr.bf16.mxu0 %v2415
        %2479 = vmatpush1.bf16.msra.mxu0 %v2414
        %2480 = vmatprep.subr.bf16.mxu0 %v2417
        %2481 = vmatpush1.bf16.msra.mxu0 %v2416
        %2482 = vmatprep.subr.bf16.mxu0 %v2419
        %2483 = vmatpush1.bf16.msra.mxu0 %v2418
        %2484 = vmatprep.subr.bf16.mxu0 %v2421
        %2485 = vmatpush1.bf16.msra.mxu0 %v2420
        %2486 = vmatprep.mubr.bf16.mxu0 %v2235
        %2487 = vmatmul.mubr.bf16.gmra.mrb[0].mxu0 %v2234
        %v2488 = vpop.f32.mrb[0].mxu0
        %v2489 = vadd.f32 %v2287, %v2488
        %v2490 = vpop.f32.mrb[0].mxu0
        %v2491 = vadd.f32 %v2291, %v2490
        %v2492 = vpop.f32.mrb[0].mxu0
        %v2493 = vadd.f32 %v2287, %v2492
        %v2494 = vpop.f32.mrb[0].mxu0
        %v2495 = vadd.f32 %v2291, %v2494
        %2496 = vmatprep.mubr.bf16.mxu0 %v2237
        %2497 = vmatmul.mubr.bf16.gmra.mrb[0].mxu0 %v2236
        %v2498 = vpop.f32.mrb[0].mxu0
        %v2499 = vadd.f32 %v2287, %v2498
        %v2500 = vpop.f32.mrb[0].mxu0
        %v2501 = vadd.f32 %v2291, %v2500
        %v2502 = vpop.f32.mrb[0].mxu0
        %v2503 = vadd.f32 %v2287, %v2502
        %v2504 = vpop.f32.mrb[0].mxu0
        %v2505 = vadd.f32 %v2291, %v2504
        %2506 = vmatprep.mubr.bf16.mxu0 %v2239
        %2507 = vmatmul.mubr.bf16.gmra.mrb[0].mxu0 %v2238
        %v2508 = vpop.f32.mrb[0].mxu0
        %v2509 = vadd.f32 %v2287, %v2508
        %v2510 = vpop.f32.mrb[0].mxu0
        %v2511 = vadd.f32 %v2291, %v2510
        %v2512 = vpop.f32.mrb[0].mxu0
        %v2513 = vadd.f32 %v2287, %v2512
        %v2514 = vpop.f32.mrb[0].mxu0
        %v2515 = vadd.f32 %v2291, %v2514
        %2516 = vmatprep.mubr.bf16.mxu0 %v2241
        %2517 = vmatmul.mubr.bf16.gmra.mrb[0].mxu0 %v2240
        %v2518 = vpop.f32.mrb[0].mxu0
        %v2519 = vadd.f32 %v2287, %v2518
        %v2520 = vpop.f32.mrb[0].mxu0
        %v2521 = vadd.f32 %v2291, %v2520
        %v2522 = vpop.f32.mrb[0].mxu0
        %v2523 = vadd.f32 %v2287, %v2522
        %v2524 = vpop.f32.mrb[0].mxu0
        %v2525 = vadd.f32 %v2291, %v2524
        %2526 = vmatprep.mubr.bf16.mxu0 %v2243
        %2527 = vmatmul.mubr.bf16.gmra.mrb[0].mxu0 %v2242
        %v2528 = vpop.f32.mrb[0].mxu0
        %v2529 = vadd.f32 %v2287, %v2528
        %v2530 = vpop.f32.mrb[0].mxu0
        %v2531 = vadd.f32 %v2291, %v2530
        %v2532 = vpop.f32.mrb[0].mxu0
        %v2533 = vadd.f32 %v2287, %v2532
        %v2534 = vpop.f32.mrb[0].mxu0
        %v2535 = vadd.f32 %v2291, %v2534
        %2536 = vmatprep.mubr.bf16.mxu0 %v2245
        %2537 = vmatmul.mubr.bf16.gmra.mrb[0].mxu0 %v2244
        %v2538 = vpop.f32.mrb[0].mxu0
        %v2539 = vadd.f32 %v2287, %v2538
        %v2540 = vpop.f32.mrb[0].mxu0
        %v2541 = vadd.f32 %v2291, %v2540
        %v2542 = vpop.f32.mrb[0].mxu0
        %v2543 = vadd.f32 %v2287, %v2542
        %v2544 = vpop.f32.mrb[0].mxu0
        %v2545 = vadd.f32 %v2291, %v2544
        %2546 = vmatprep.mubr.bf16.mxu0 %v2247
        %2547 = vmatmul.mubr.bf16.gmra.mrb[0].mxu0 %v2246
        %v2548 = vpop.f32.mrb[0].mxu0
        %v2549 = vadd.f32 %v2287, %v2548
        %v2550 = vpop.f32.mrb[0].mxu0
        %v2551 = vadd.f32 %v2291, %v2550
        %v2552 = vpop.f32.mrb[0].mxu0
        %v2553 = vadd.f32 %v2287, %v2552
        %v2554 = vpop.f32.mrb[0].mxu0
        %v2555 = vadd.f32 %v2291, %v2554
        %2556 = vmatprep.mubr.bf16.mxu0 %v2249
        %2557 = vmatmul.mubr.bf16.gmra.mrb[0].mxu0 %v2248
        %v2558 = vpop.f32.mrb[0].mxu0
        %v2559 = vadd.f32 %v2287, %v2558
        %v2560 = vpop.f32.mrb[0].mxu0
        %v2561 = vadd.f32 %v2291, %v2560
        %v2562 = vpop.f32.mrb[0].mxu0
        %v2563 = vadd.f32 %v2287, %v2562
        %v2564 = vpop.f32.mrb[0].mxu0
        %v2565 = vadd.f32 %v2291, %v2564
        %2566 = vdwg.mxu0
        %v2567 = vmul.f32 %v2491, 0.5
        %v2568 = vmul.f32 %v2495, 0.5
        %v2569 = vmul.f32 %v2501, 0.5
        %v2570 = vmul.f32 %v2505, 0.5
        %v2571 = vmul.f32 %v2511, 0.5
        %v2572 = vmul.f32 %v2515, 0.5
        %v2573 = vmul.f32 %v2521, 0.5
        %v2574 = vmul.f32 %v2525, 0.5
        %v2575 = vmul.f32 %v2531, 0.5
        %v2576 = vmul.f32 %v2535, 0.5
        %v2577 = vmul.f32 %v2541, 0.5
        %v2578 = vmul.f32 %v2545, 0.5
        %v2579 = vmul.f32 %v2551, 0.5
        %v2580 = vmul.f32 %v2555, 0.5
        %v2581 = vmul.f32 %v2561, 0.5
        %v2582 = vmul.f32 %v2565, 0.5
        %v2583 = vmul.f32 %v2567, 1.442695
        %v2584 = vpow.pop %v2583
        %v2585 = vmul.f32 %v2568, 1.442695
        %v2586 = vpow.pop %v2585
        %v2587 = vmul.f32 %v2569, 1.442695
        %v2588 = vpow.pop %v2587
        %v2589 = vmul.f32 %v2570, 1.442695
        %v2590 = vpow.pop %v2589
        %v2591 = vmul.f32 %v2571, 1.442695
        %v2592 = vpow.pop %v2591
        %v2593 = vmul.f32 %v2572, 1.442695
        %v2594 = vpow.pop %v2593
        %v2595 = vmul.f32 %v2573, 1.442695
        %v2596 = vpow.pop %v2595
        %v2597 = vmul.f32 %v2574, 1.442695
        %v2598 = vpow.pop %v2597
        %v2599 = vmul.f32 %v2575, 1.442695
        %v2600 = vpow.pop %v2599
        %v2601 = vmul.f32 %v2576, 1.442695
        %v2602 = vpow.pop %v2601
        %v2603 = vmul.f32 %v2577, 1.442695
        %v2604 = vpow.pop %v2603
        %v2605 = vmul.f32 %v2578, 1.442695
        %v2606 = vpow.pop %v2605
        %v2607 = vmul.f32 %v2579, 1.442695
        %v2608 = vpow.pop %v2607
        %v2609 = vmul.f32 %v2580, 1.442695
        %v2610 = vpow.pop %v2609
        %v2611 = vmul.f32 %v2581, 1.442695
        %v2612 = vpow.pop %v2611
        %v2613 = vmul.f32 %v2582, 1.442695
        %v2614 = vpow.pop %v2613
        %v2615 = vmul.f32 %v634, %v2584
        %v2616 = vmul.f32 %v635, %v2586
        %v2617 = vmul.f32 %v636, %v2588
        %v2618 = vmul.f32 %v637, %v2590
        %v2619 = vmul.f32 %v638, %v2592
        %v2620 = vmul.f32 %v639, %v2594
        %v2621 = vmul.f32 %v640, %v2596
        %v2622 = vmul.f32 %v641, %v2598
        %v2623 = vmul.f32 %v642, %v2600
        %v2624 = vmul.f32 %v643, %v2602
        %v2625 = vmul.f32 %v644, %v2604
        %v2626 = vmul.f32 %v645, %v2606
        %v2627 = vmul.f32 %v646, %v2608
        %v2628 = vmul.f32 %v647, %v2610
        %v2629 = vmul.f32 %v648, %v2612
        %v2630 = vmul.f32 %v649, %v2614
        %v2631 = vadd.f32 %v2489, %v2615
        %v2632 = vadd.f32 %v2493, %v2616
        %v2633 = vadd.f32 %v2499, %v2617
        %v2634 = vadd.f32 %v2503, %v2618
        %v2635 = vadd.f32 %v2509, %v2619
        %v2636 = vadd.f32 %v2513, %v2620
        %v2637 = vadd.f32 %v2519, %v2621
        %v2638 = vadd.f32 %v2523, %v2622
        %v2639 = vadd.f32 %v2529, %v2623
        %v2640 = vadd.f32 %v2533, %v2624
        %v2641 = vadd.f32 %v2539, %v2625
        %v2642 = vadd.f32 %v2543, %v2626
        %v2643 = vadd.f32 %v2549, %v2627
        %v2644 = vadd.f32 %v2553, %v2628
        %v2645 = vadd.f32 %v2559, %v2629
        %v2646 = vadd.f32 %v2563, %v2630
        %v2647 = vpack.c.bf16 %v2632, %v2631
        %v2648 = vpack.c.bf16 %v2634, %v2633
        %v2649 = vpack.c.bf16 %v2636, %v2635
        %v2650 = vpack.c.bf16 %v2638, %v2637
        %v2651 = vpack.c.bf16 %v2640, %v2639
        %v2652 = vpack.c.bf16 %v2642, %v2641
        %v2653 = vpack.c.bf16 %v2644, %v2643
        %v2654 = vpack.c.bf16 %v2646, %v2645
        %v2655 = vld [vmem:[#allocation13] sm:$0xff]
        %v2656 = vld [vmem:[#allocation13 + $0x8] sm:$0xff]
        %v2657 = vld [vmem:[#allocation13 + $0x10] sm:$0xff]
        %v2658 = vld [vmem:[#allocation13 + $0x18] sm:$0xff]
        %v2659 = vld [vmem:[#allocation13 + $0x20] sm:$0xff]
        %v2660 = vld [vmem:[#allocation13 + $0x28] sm:$0xff]
        %v2661 = vld [vmem:[#allocation13 + $0x30] sm:$0xff]
        %v2662 = vld [vmem:[#allocation13 + $0x38] sm:$0xff]
        %v2663 = vld [vmem:[#allocation13 + $0x40] sm:$0xff]
        %v2664 = vld [vmem:[#allocation13 + $0x48] sm:$0xff]
        %v2665 = vld [vmem:[#allocation13 + $0x50] sm:$0xff]
        %v2666 = vld [vmem:[#allocation13 + $0x58] sm:$0xff]
        %v2667 = vld [vmem:[#allocation13 + $0x60] sm:$0xff]
        %v2668 = vld [vmem:[#allocation13 + $0x68] sm:$0xff]
        %v2669 = vld [vmem:[#allocation13 + $0x70] sm:$0xff]
        %v2670 = vld [vmem:[#allocation13 + $0x78] sm:$0xff]
        %v2671 = vld [vmem:[#allocation14] sm:$0x3]
        %v2673 = vlaneseq
        %v2674 = vshrl.u32 %v2673, 7
        %v2675 = vsub.s32 0, %v2674
        %v2676 = vrot.slane %v2671, %v2675
        %v2677 = vlaneseq
        %v2678 = vshrl.u32 %v2677, 7
        %v2679 = vsub.s32 1, %v2678
        %v2680 = vrot.slane %v2671, %v2679
        %v2699 = vunpack.c.l.b16 %v2655
        %v2700 = vunpack.c.h.b16 %v2655
        %v2701 = vunpack.c.l.b16 %v2656
        %v2702 = vunpack.c.h.b16 %v2656
        %v2703 = vunpack.c.l.b16 %v2657
        %v2704 = vunpack.c.h.b16 %v2657
        %v2705 = vunpack.c.l.b16 %v2658
        %v2706 = vunpack.c.h.b16 %v2658
        %v2707 = vunpack.c.l.b16 %v2659
        %v2708 = vunpack.c.h.b16 %v2659
        %v2709 = vunpack.c.l.b16 %v2660
        %v2710 = vunpack.c.h.b16 %v2660
        %v2711 = vunpack.c.l.b16 %v2661
        %v2712 = vunpack.c.h.b16 %v2661
        %v2713 = vunpack.c.l.b16 %v2662
        %v2714 = vunpack.c.h.b16 %v2662
        %v2715 = vunpack.c.l.b16 %v2663
        %v2716 = vunpack.c.h.b16 %v2663
        %v2717 = vunpack.c.l.b16 %v2664
        %v2718 = vunpack.c.h.b16 %v2664
        %v2719 = vunpack.c.l.b16 %v2665
        %v2720 = vunpack.c.h.b16 %v2665
        %v2721 = vunpack.c.l.b16 %v2666
        %v2722 = vunpack.c.h.b16 %v2666
        %v2723 = vunpack.c.l.b16 %v2667
        %v2724 = vunpack.c.h.b16 %v2667
        %v2725 = vunpack.c.l.b16 %v2668
        %v2726 = vunpack.c.h.b16 %v2668
        %v2727 = vunpack.c.l.b16 %v2669
        %v2728 = vunpack.c.h.b16 %v2669
        %v2729 = vunpack.c.l.b16 %v2670
        %v2730 = vunpack.c.h.b16 %v2670
        %v2731 = vpack.c.b16 %v2701, %v2699
        %v2732 = vpack.c.b16 %v2702, %v2700
        %v2733 = vpack.c.b16 %v2705, %v2703
        %v2734 = vpack.c.b16 %v2706, %v2704
        %v2735 = vpack.c.b16 %v2709, %v2707
        %v2736 = vpack.c.b16 %v2710, %v2708
        %v2737 = vpack.c.b16 %v2713, %v2711
        %v2738 = vpack.c.b16 %v2714, %v2712
        %v2739 = vpack.c.b16 %v2717, %v2715
        %v2740 = vpack.c.b16 %v2718, %v2716
        %v2741 = vpack.c.b16 %v2721, %v2719
        %v2742 = vpack.c.b16 %v2722, %v2720
        %v2743 = vpack.c.b16 %v2725, %v2723
        %v2744 = vpack.c.b16 %v2726, %v2724
        %v2745 = vpack.c.b16 %v2729, %v2727
        %v2746 = vpack.c.b16 %v2730, %v2728
        %2763 = vmatprep.subr.bf16.mxu0 %v2732
        %2764 = vmatpush1.bf16.msra.mxu0 %v2731
        %2765 = vmatprep.subr.bf16.mxu0 %v2734
        %2766 = vmatpush1.bf16.msra.mxu0 %v2733
        %2767 = vmatprep.subr.bf16.mxu0 %v2736
        %2768 = vmatpush1.bf16.msra.mxu0 %v2735
        %2769 = vmatprep.subr.bf16.mxu0 %v2738
        %2770 = vmatpush1.bf16.msra.mxu0 %v2737
        %2771 = vmatprep.subr.bf16.mxu0 %v2740
        %2772 = vmatpush1.bf16.msra.mxu0 %v2739
        %2773 = vmatprep.subr.bf16.mxu0 %v2742
        %2774 = vmatpush1.bf16.msra.mxu0 %v2741
        %2775 = vmatprep.subr.bf16.mxu0 %v2744
        %2776 = vmatpush1.bf16.msra.mxu0 %v2743
        %2777 = vmatprep.subr.bf16.mxu0 %v2746
        %2778 = vmatpush1.bf16.msra.mxu0 %v2745
        %2779 = vmatprep.subr.bf16.mxu0 0
        %2780 = vmatpush1.bf16.msra.mxu0 0
        %2781 = vmatprep.subr.bf16.mxu0 0
        %2782 = vmatpush1.bf16.msra.mxu0 0
        %2783 = vmatprep.subr.bf16.mxu0 0
        %2784 = vmatpush1.bf16.msra.mxu0 0
        %2785 = vmatprep.subr.bf16.mxu0 0
        %2786 = vmatpush1.bf16.msra.mxu0 0
        %2787 = vmatprep.subr.bf16.mxu0 0
        %2788 = vmatpush1.bf16.msra.mxu0 0
        %2789 = vmatprep.subr.bf16.mxu0 0
        %2790 = vmatpush1.bf16.msra.mxu0 0
        %2791 = vmatprep.subr.bf16.mxu0 0
        %2792 = vmatpush1.bf16.msra.mxu0 0
        %2793 = vmatprep.subr.bf16.mxu0 0
        %2794 = vmatpush1.bf16.msra.mxu0 0
        %2795 = vmatprep.mubr.bf16.mxu0 0
        %2796 = vmatmul.mubr.bf16.gmra.mrb[0].mxu0 %v2647
        %v2797 = vpop.f32.mrb[0].mxu0
        %v2798 = vadd.f32 %v2676, %v2797
        %v2799 = vpop.f32.mrb[0].mxu0
        %v2800 = vadd.f32 %v2680, %v2799
        %v2801 = vpop.f32.mrb[0].mxu0
        %v2802 = vadd.f32 %v2676, %v2801
        %v2803 = vpop.f32.mrb[0].mxu0
        %v2804 = vadd.f32 %v2680, %v2803
        %2805 = vmatprep.mubr.bf16.mxu0 0
        %2806 = vmatmul.mubr.bf16.gmra.mrb[0].mxu0 %v2648
        %v2807 = vpop.f32.mrb[0].mxu0
        %v2808 = vadd.f32 %v2676, %v2807
        %v2809 = vpop.f32.mrb[0].mxu0
        %v2810 = vadd.f32 %v2680, %v2809
        %v2811 = vpop.f32.mrb[0].mxu0
        %v2812 = vadd.f32 %v2676, %v2811
        %v2813 = vpop.f32.mrb[0].mxu0
        %v2814 = vadd.f32 %v2680, %v2813
        %2815 = vmatprep.mubr.bf16.mxu0 0
        %2816 = vmatmul.mubr.bf16.gmra.mrb[0].mxu0 %v2649
        %v2817 = vpop.f32.mrb[0].mxu0
        %v2818 = vadd.f32 %v2676, %v2817
        %v2819 = vpop.f32.mrb[0].mxu0
        %v2820 = vadd.f32 %v2680, %v2819
        %v2821 = vpop.f32.mrb[0].mxu0
        %v2822 = vadd.f32 %v2676, %v2821
        %v2823 = vpop.f32.mrb[0].mxu0
        %v2824 = vadd.f32 %v2680, %v2823
        %2825 = vmatprep.mubr.bf16.mxu0 0
        %2826 = vmatmul.mubr.bf16.gmra.mrb[0].mxu0 %v2650
        %v2827 = vpop.f32.mrb[0].mxu0
        %v2828 = vadd.f32 %v2676, %v2827
        %v2829 = vpop.f32.mrb[0].mxu0
        %v2830 = vadd.f32 %v2680, %v2829
        %v2831 = vpop.f32.mrb[0].mxu0
        %v2832 = vadd.f32 %v2676, %v2831
        %v2833 = vpop.f32.mrb[0].mxu0
        %v2834 = vadd.f32 %v2680, %v2833
        %2835 = vmatprep.mubr.bf16.mxu0 0
        %2836 = vmatmul.mubr.bf16.gmra.mrb[0].mxu0 %v2651
        %v2837 = vpop.f32.mrb[0].mxu0
        %v2838 = vadd.f32 %v2676, %v2837
        %v2839 = vpop.f32.mrb[0].mxu0
        %v2840 = vadd.f32 %v2680, %v2839
        %v2841 = vpop.f32.mrb[0].mxu0
        %v2842 = vadd.f32 %v2676, %v2841
        %v2843 = vpop.f32.mrb[0].mxu0
        %v2844 = vadd.f32 %v2680, %v2843
        %2845 = vmatprep.mubr.bf16.mxu0 0
        %2846 = vmatmul.mubr.bf16.gmra.mrb[0].mxu0 %v2652
        %v2847 = vpop.f32.mrb[0].mxu0
        %v2848 = vadd.f32 %v2676, %v2847
        %v2849 = vpop.f32.mrb[0].mxu0
        %v2850 = vadd.f32 %v2680, %v2849
        %v2851 = vpop.f32.mrb[0].mxu0
        %v2852 = vadd.f32 %v2676, %v2851
        %v2853 = vpop.f32.mrb[0].mxu0
        %v2854 = vadd.f32 %v2680, %v2853
        %2855 = vmatprep.mubr.bf16.mxu0 0
        %2856 = vmatmul.mubr.bf16.gmra.mrb[0].mxu0 %v2653
        %v2857 = vpop.f32.mrb[0].mxu0
        %v2858 = vadd.f32 %v2676, %v2857
        %v2859 = vpop.f32.mrb[0].mxu0
        %v2860 = vadd.f32 %v2680, %v2859
        %v2861 = vpop.f32.mrb[0].mxu0
        %v2862 = vadd.f32 %v2676, %v2861
        %v2863 = vpop.f32.mrb[0].mxu0
        %v2864 = vadd.f32 %v2680, %v2863
        %2865 = vmatprep.mubr.bf16.mxu0 0
        %2866 = vmatmul.mubr.bf16.gmra.mrb[0].mxu0 %v2654
        %v2867 = vpop.f32.mrb[0].mxu0
        %v2868 = vadd.f32 %v2676, %v2867
        %v2869 = vpop.f32.mrb[0].mxu0
        %v2870 = vadd.f32 %v2680, %v2869
        %v2871 = vpop.f32.mrb[0].mxu0
        %v2872 = vadd.f32 %v2676, %v2871
        %v2873 = vpop.f32.mrb[0].mxu0
        %v2874 = vadd.f32 %v2680, %v2873
        %2875 = vdwg.mxu0
        %v2876 = vmax.f32 %v2798, 0.0
        %v2877 = vmax.f32 %v2800, 0.0
        %v2878 = vmax.f32 %v2802, 0.0
        %v2879 = vmax.f32 %v2804, 0.0
        %v2880 = vmax.f32 %v2808, 0.0
        %v2881 = vmax.f32 %v2810, 0.0
        %v2882 = vmax.f32 %v2812, 0.0
        %v2883 = vmax.f32 %v2814, 0.0
        %v2884 = vmax.f32 %v2818, 0.0
        %v2885 = vmax.f32 %v2820, 0.0
        %v2886 = vmax.f32 %v2822, 0.0
        %v2887 = vmax.f32 %v2824, 0.0
        %v2888 = vmax.f32 %v2828, 0.0
        %v2889 = vmax.f32 %v2830, 0.0
        %v2890 = vmax.f32 %v2832, 0.0
        %v2891 = vmax.f32 %v2834, 0.0
        %v2892 = vmax.f32 %v2838, 0.0
        %v2893 = vmax.f32 %v2840, 0.0
        %v2894 = vmax.f32 %v2842, 0.0
        %v2895 = vmax.f32 %v2844, 0.0
        %v2896 = vmax.f32 %v2848, 0.0
        %v2897 = vmax.f32 %v2850, 0.0
        %v2898 = vmax.f32 %v2852, 0.0
        %v2899 = vmax.f32 %v2854, 0.0
        %v2900 = vmax.f32 %v2858, 0.0
        %v2901 = vmax.f32 %v2860, 0.0
        %v2902 = vmax.f32 %v2862, 0.0
        %v2903 = vmax.f32 %v2864, 0.0
        %v2904 = vmax.f32 %v2868, 0.0
        %v2905 = vmax.f32 %v2870, 0.0
        %v2906 = vmax.f32 %v2872, 0.0
        %v2907 = vmax.f32 %v2874, 0.0
        %v2908 = vpack.c.bf16 %v2878, %v2876
        %v2909 = vpack.c.bf16 %v2879, %v2877
        %v2910 = vpack.c.bf16 %v2882, %v2880
        %v2911 = vpack.c.bf16 %v2883, %v2881
        %v2912 = vpack.c.bf16 %v2886, %v2884
        %v2913 = vpack.c.bf16 %v2887, %v2885
        %v2914 = vpack.c.bf16 %v2890, %v2888
        %v2915 = vpack.c.bf16 %v2891, %v2889
        %v2916 = vpack.c.bf16 %v2894, %v2892
        %v2917 = vpack.c.bf16 %v2895, %v2893
        %v2918 = vpack.c.bf16 %v2898, %v2896
        %v2919 = vpack.c.bf16 %v2899, %v2897
        %v2920 = vpack.c.bf16 %v2902, %v2900
        %v2921 = vpack.c.bf16 %v2903, %v2901
        %v2922 = vpack.c.bf16 %v2906, %v2904
        %v2923 = vpack.c.bf16 %v2907, %v2905
        %v2924 = vld [vmem:[#allocation16] sm:$0xff]
        %v2925 = vld [vmem:[#allocation16 + $0x8] sm:$0xff]
        %v2926 = vld [vmem:[#allocation16 + $0x10] sm:$0xff]
        %v2927 = vld [vmem:[#allocation16 + $0x18] sm:$0xff]
        %v2928 = vld [vmem:[#allocation16 + $0x20] sm:$0xff]
        %v2929 = vld [vmem:[#allocation16 + $0x28] sm:$0xff]
        %v2930 = vld [vmem:[#allocation16 + $0x30] sm:$0xff]
        %v2931 = vld [vmem:[#allocation16 + $0x38] sm:$0xff]
        %v2932 = vld [vmem:[#allocation16 + $0x40] sm:$0xff]
        %v2933 = vld [vmem:[#allocation16 + $0x48] sm:$0xff]
        %v2934 = vld [vmem:[#allocation16 + $0x50] sm:$0xff]
        %v2935 = vld [vmem:[#allocation16 + $0x58] sm:$0xff]
        %v2936 = vld [vmem:[#allocation16 + $0x60] sm:$0xff]
        %v2937 = vld [vmem:[#allocation16 + $0x68] sm:$0xff]
        %v2938 = vld [vmem:[#allocation16 + $0x70] sm:$0xff]
        %v2939 = vld [vmem:[#allocation16 + $0x78] sm:$0xff]
        %v2940 = vld [vmem:[#allocation16 + $0x80] sm:$0xff]
        %v2941 = vld [vmem:[#allocation16 + $0x88] sm:$0xff]
        %v2942 = vld [vmem:[#allocation16 + $0x90] sm:$0xff]
        %v2943 = vld [vmem:[#allocation16 + $0x98] sm:$0xff]
        %v2944 = vld [vmem:[#allocation16 + $0xa0] sm:$0xff]
        %v2945 = vld [vmem:[#allocation16 + $0xa8] sm:$0xff]
        %v2946 = vld [vmem:[#allocation16 + $0xb0] sm:$0xff]
        %v2947 = vld [vmem:[#allocation16 + $0xb8] sm:$0xff]
        %v2948 = vld [vmem:[#allocation16 + $0xc0] sm:$0xff]
        %v2949 = vld [vmem:[#allocation16 + $0xc8] sm:$0xff]
        %v2950 = vld [vmem:[#allocation16 + $0xd0] sm:$0xff]
        %v2951 = vld [vmem:[#allocation16 + $0xd8] sm:$0xff]
        %v2952 = vld [vmem:[#allocation16 + $0xe0] sm:$0xff]
        %v2953 = vld [vmem:[#allocation16 + $0xe8] sm:$0xff]
        %v2954 = vld [vmem:[#allocation16 + $0xf0] sm:$0xff]
        %v2955 = vld [vmem:[#allocation16 + $0xf8] sm:$0xff]
        %v2956 = vld [vmem:[#allocation16 + $0x100] sm:$0xff]
        %v2957 = vld [vmem:[#allocation16 + $0x108] sm:$0xff]
        %v2958 = vld [vmem:[#allocation16 + $0x110] sm:$0xff]
        %v2959 = vld [vmem:[#allocation16 + $0x118] sm:$0xff]
        %v2960 = vld [vmem:[#allocation16 + $0x120] sm:$0xff]
        %v2961 = vld [vmem:[#allocation16 + $0x128] sm:$0xff]
        %v2962 = vld [vmem:[#allocation16 + $0x130] sm:$0xff]
        %v2963 = vld [vmem:[#allocation16 + $0x138] sm:$0xff]
        %v2964 = vld [vmem:[#allocation16 + $0x140] sm:$0xff]
        %v2965 = vld [vmem:[#allocation16 + $0x148] sm:$0xff]
        %v2966 = vld [vmem:[#allocation16 + $0x150] sm:$0xff]
        %v2967 = vld [vmem:[#allocation16 + $0x158] sm:$0xff]
        %v2968 = vld [vmem:[#allocation16 + $0x160] sm:$0xff]
        %v2969 = vld [vmem:[#allocation16 + $0x168] sm:$0xff]
        %v2970 = vld [vmem:[#allocation16 + $0x170] sm:$0xff]
        %v2971 = vld [vmem:[#allocation16 + $0x178] sm:$0xff]
        %v2972 = vld [vmem:[#allocation16 + $0x180] sm:$0xff]
        %v2973 = vld [vmem:[#allocation16 + $0x188] sm:$0xff]
        %v2974 = vld [vmem:[#allocation16 + $0x190] sm:$0xff]
        %v2975 = vld [vmem:[#allocation16 + $0x198] sm:$0xff]
        %v2976 = vld [vmem:[#allocation16 + $0x1a0] sm:$0xff]
        %v2977 = vld [vmem:[#allocation16 + $0x1a8] sm:$0xff]
        %v2978 = vld [vmem:[#allocation16 + $0x1b0] sm:$0xff]
        %v2979 = vld [vmem:[#allocation16 + $0x1b8] sm:$0xff]
        %v2980 = vld [vmem:[#allocation16 + $0x1c0] sm:$0xff]
        %v2981 = vld [vmem:[#allocation16 + $0x1c8] sm:$0xff]
        %v2982 = vld [vmem:[#allocation16 + $0x1d0] sm:$0xff]
        %v2983 = vld [vmem:[#allocation16 + $0x1d8] sm:$0xff]
        %v2984 = vld [vmem:[#allocation16 + $0x1e0] sm:$0xff]
        %v2985 = vld [vmem:[#allocation16 + $0x1e8] sm:$0xff]
        %v2986 = vld [vmem:[#allocation16 + $0x1f0] sm:$0xff]
        %v2987 = vld [vmem:[#allocation16 + $0x1f8] sm:$0xff]
        %v2988 = vld [vmem:[#allocation16 + $0x200] sm:$0xff]
        %v2989 = vld [vmem:[#allocation16 + $0x208] sm:$0xff]
        %v2990 = vld [vmem:[#allocation16 + $0x210] sm:$0xff]
        %v2991 = vld [vmem:[#allocation16 + $0x218] sm:$0xff]
        %v2992 = vld [vmem:[#allocation16 + $0x220] sm:$0xff]
        %v2993 = vld [vmem:[#allocation16 + $0x228] sm:$0xff]
        %v2994 = vld [vmem:[#allocation16 + $0x230] sm:$0xff]
        %v2995 = vld [vmem:[#allocation16 + $0x238] sm:$0xff]
        %v2996 = vld [vmem:[#allocation16 + $0x240] sm:$0xff]
        %v2997 = vld [vmem:[#allocation16 + $0x248] sm:$0xff]
        %v2998 = vld [vmem:[#allocation16 + $0x250] sm:$0xff]
        %v2999 = vld [vmem:[#allocation16 + $0x258] sm:$0xff]
        %v3000 = vld [vmem:[#allocation16 + $0x260] sm:$0xff]
        %v3001 = vld [vmem:[#allocation16 + $0x268] sm:$0xff]
        %v3002 = vld [vmem:[#allocation16 + $0x270] sm:$0xff]
        %v3003 = vld [vmem:[#allocation16 + $0x278] sm:$0xff]
        %v3004 = vld [vmem:[#allocation16 + $0x280] sm:$0xff]
        %v3005 = vld [vmem:[#allocation16 + $0x288] sm:$0xff]
        %v3006 = vld [vmem:[#allocation16 + $0x290] sm:$0xff]
        %v3007 = vld [vmem:[#allocation16 + $0x298] sm:$0xff]
        %v3008 = vld [vmem:[#allocation16 + $0x2a0] sm:$0xff]
        %v3009 = vld [vmem:[#allocation16 + $0x2a8] sm:$0xff]
        %v3010 = vld [vmem:[#allocation16 + $0x2b0] sm:$0xff]
        %v3011 = vld [vmem:[#allocation16 + $0x2b8] sm:$0xff]
        %v3012 = vld [vmem:[#allocation16 + $0x2c0] sm:$0xff]
        %v3013 = vld [vmem:[#allocation16 + $0x2c8] sm:$0xff]
        %v3014 = vld [vmem:[#allocation16 + $0x2d0] sm:$0xff]
        %v3015 = vld [vmem:[#allocation16 + $0x2d8] sm:$0xff]
        %v3016 = vld [vmem:[#allocation16 + $0x2e0] sm:$0xff]
        %v3017 = vld [vmem:[#allocation16 + $0x2e8] sm:$0xff]
        %v3018 = vld [vmem:[#allocation16 + $0x2f0] sm:$0xff]
        %v3019 = vld [vmem:[#allocation16 + $0x2f8] sm:$0xff]
        %v3020 = vld [vmem:[#allocation16 + $0x300] sm:$0xff]
        %v3021 = vld [vmem:[#allocation16 + $0x308] sm:$0xff]
        %v3022 = vld [vmem:[#allocation16 + $0x310] sm:$0xff]
        %v3023 = vld [vmem:[#allocation16 + $0x318] sm:$0xff]
        %v3024 = vld [vmem:[#allocation16 + $0x320] sm:$0xff]
        %v3025 = vld [vmem:[#allocation16 + $0x328] sm:$0xff]
        %v3026 = vld [vmem:[#allocation16 + $0x330] sm:$0xff]
        %v3027 = vld [vmem:[#allocation16 + $0x338] sm:$0xff]
        %v3028 = vld [vmem:[#allocation16 + $0x340] sm:$0xff]
        %v3029 = vld [vmem:[#allocation16 + $0x348] sm:$0xff]
        %v3030 = vld [vmem:[#allocation16 + $0x350] sm:$0xff]
        %v3031 = vld [vmem:[#allocation16 + $0x358] sm:$0xff]
        %v3032 = vld [vmem:[#allocation16 + $0x360] sm:$0xff]
        %v3033 = vld [vmem:[#allocation16 + $0x368] sm:$0xff]
        %v3034 = vld [vmem:[#allocation16 + $0x370] sm:$0xff]
        %v3035 = vld [vmem:[#allocation16 + $0x378] sm:$0xff]
        %v3036 = vld [vmem:[#allocation16 + $0x380] sm:$0xff]
        %v3037 = vld [vmem:[#allocation16 + $0x388] sm:$0xff]
        %v3038 = vld [vmem:[#allocation16 + $0x390] sm:$0xff]
        %v3039 = vld [vmem:[#allocation16 + $0x398] sm:$0xff]
        %v3040 = vld [vmem:[#allocation16 + $0x3a0] sm:$0xff]
        %v3041 = vld [vmem:[#allocation16 + $0x3a8] sm:$0xff]
        %v3042 = vld [vmem:[#allocation16 + $0x3b0] sm:$0xff]
        %v3043 = vld [vmem:[#allocation16 + $0x3b8] sm:$0xff]
        %v3044 = vld [vmem:[#allocation16 + $0x3c0] sm:$0xff]
        %v3045 = vld [vmem:[#allocation16 + $0x3c8] sm:$0xff]
        %v3046 = vld [vmem:[#allocation16 + $0x3d0] sm:$0xff]
        %v3047 = vld [vmem:[#allocation16 + $0x3d8] sm:$0xff]
        %v3048 = vld [vmem:[#allocation16 + $0x3e0] sm:$0xff]
        %v3049 = vld [vmem:[#allocation16 + $0x3e8] sm:$0xff]
        %v3050 = vld [vmem:[#allocation16 + $0x3f0] sm:$0xff]
        %v3051 = vld [vmem:[#allocation16 + $0x3f8] sm:$0xff]
        %v3052 = vld [vmem:[#allocation17] sm:$0xff]
        %v3054 = vlaneseq
        %v3055 = vshrl.u32 %v3054, 7
        %v3056 = vsub.s32 0, %v3055
        %v3057 = vrot.slane %v3052, %v3056
        %v3058 = vlaneseq
        %v3059 = vshrl.u32 %v3058, 7
        %v3060 = vsub.s32 1, %v3059
        %v3061 = vrot.slane %v3052, %v3060
        %v3062 = vlaneseq
        %v3063 = vshrl.u32 %v3062, 7
        %v3064 = vsub.s32 2, %v3063
        %v3065 = vrot.slane %v3052, %v3064
        %v3066 = vlaneseq
        %v3067 = vshrl.u32 %v3066, 7
        %v3068 = vsub.s32 3, %v3067
        %v3069 = vrot.slane %v3052, %v3068
        %v3070 = vlaneseq
        %v3071 = vshrl.u32 %v3070, 7
        %v3072 = vsub.s32 4, %v3071
        %v3073 = vrot.slane %v3052, %v3072
        %v3074 = vlaneseq
        %v3075 = vshrl.u32 %v3074, 7
        %v3076 = vsub.s32 5, %v3075
        %v3077 = vrot.slane %v3052, %v3076
        %v3078 = vlaneseq
        %v3079 = vshrl.u32 %v3078, 7
        %v3080 = vsub.s32 6, %v3079
        %v3081 = vrot.slane %v3052, %v3080
        %v3082 = vlaneseq
        %v3083 = vshrl.u32 %v3082, 7
        %v3084 = vsub.s32 7, %v3083
        %v3085 = vrot.slane %v3052, %v3084
        %v3222 = vunpack.c.l.b16 %v2924
        %v3223 = vunpack.c.h.b16 %v2924
        %v3224 = vunpack.c.l.b16 %v2925
        %v3225 = vunpack.c.h.b16 %v2925
        %v3226 = vunpack.c.l.b16 %v2926
        %v3227 = vunpack.c.h.b16 %v2926
        %v3228 = vunpack.c.l.b16 %v2927
        %v3229 = vunpack.c.h.b16 %v2927
        %v3230 = vunpack.c.l.b16 %v2928
        %v3231 = vunpack.c.h.b16 %v2928
        %v3232 = vunpack.c.l.b16 %v2929
        %v3233 = vunpack.c.h.b16 %v2929
        %v3234 = vunpack.c.l.b16 %v2930
        %v3235 = vunpack.c.h.b16 %v2930
        %v3236 = vunpack.c.l.b16 %v2931
        %v3237 = vunpack.c.h.b16 %v2931
        %v3238 = vunpack.c.l.b16 %v2932
        %v3239 = vunpack.c.h.b16 %v2932
        %v3240 = vunpack.c.l.b16 %v2933
        %v3241 = vunpack.c.h.b16 %v2933
        %v3242 = vunpack.c.l.b16 %v2934
        %v3243 = vunpack.c.h.b16 %v2934
        %v3244 = vunpack.c.l.b16 %v2935
        %v3245 = vunpack.c.h.b16 %v2935
        %v3246 = vunpack.c.l.b16 %v2936
        %v3247 = vunpack.c.h.b16 %v2936
        %v3248 = vunpack.c.l.b16 %v2937
        %v3249 = vunpack.c.h.b16 %v2937
        %v3250 = vunpack.c.l.b16 %v2938
        %v3251 = vunpack.c.h.b16 %v2938
        %v3252 = vunpack.c.l.b16 %v2939
        %v3253 = vunpack.c.h.b16 %v2939
        %v3254 = vunpack.c.l.b16 %v2940
        %v3255 = vunpack.c.h.b16 %v2940
        %v3256 = vunpack.c.l.b16 %v2941
        %v3257 = vunpack.c.h.b16 %v2941
        %v3258 = vunpack.c.l.b16 %v2942
        %v3259 = vunpack.c.h.b16 %v2942
        %v3260 = vunpack.c.l.b16 %v2943
        %v3261 = vunpack.c.h.b16 %v2943
        %v3262 = vunpack.c.l.b16 %v2944
        %v3263 = vunpack.c.h.b16 %v2944
        %v3264 = vunpack.c.l.b16 %v2945
        %v3265 = vunpack.c.h.b16 %v2945
        %v3266 = vunpack.c.l.b16 %v2946
        %v3267 = vunpack.c.h.b16 %v2946
        %v3268 = vunpack.c.l.b16 %v2947
        %v3269 = vunpack.c.h.b16 %v2947
        %v3270 = vunpack.c.l.b16 %v2948
        %v3271 = vunpack.c.h.b16 %v2948
        %v3272 = vunpack.c.l.b16 %v2949
        %v3273 = vunpack.c.h.b16 %v2949
        %v3274 = vunpack.c.l.b16 %v2950
        %v3275 = vunpack.c.h.b16 %v2950
        %v3276 = vunpack.c.l.b16 %v2951
        %v3277 = vunpack.c.h.b16 %v2951
        %v3278 = vunpack.c.l.b16 %v2952
        %v3279 = vunpack.c.h.b16 %v2952
        %v3280 = vunpack.c.l.b16 %v2953
        %v3281 = vunpack.c.h.b16 %v2953
        %v3282 = vunpack.c.l.b16 %v2954
        %v3283 = vunpack.c.h.b16 %v2954
        %v3284 = vunpack.c.l.b16 %v2955
        %v3285 = vunpack.c.h.b16 %v2955
        %v3286 = vunpack.c.l.b16 %v2956
        %v3287 = vunpack.c.h.b16 %v2956
        %v3288 = vunpack.c.l.b16 %v2957
        %v3289 = vunpack.c.h.b16 %v2957
        %v3290 = vunpack.c.l.b16 %v2958
        %v3291 = vunpack.c.h.b16 %v2958
        %v3292 = vunpack.c.l.b16 %v2959
        %v3293 = vunpack.c.h.b16 %v2959
        %v3294 = vunpack.c.l.b16 %v2960
        %v3295 = vunpack.c.h.b16 %v2960
        %v3296 = vunpack.c.l.b16 %v2961
        %v3297 = vunpack.c.h.b16 %v2961
        %v3298 = vunpack.c.l.b16 %v2962
        %v3299 = vunpack.c.h.b16 %v2962
        %v3300 = vunpack.c.l.b16 %v2963
        %v3301 = vunpack.c.h.b16 %v2963
        %v3302 = vunpack.c.l.b16 %v2964
        %v3303 = vunpack.c.h.b16 %v2964
        %v3304 = vunpack.c.l.b16 %v2965
        %v3305 = vunpack.c.h.b16 %v2965
        %v3306 = vunpack.c.l.b16 %v2966
        %v3307 = vunpack.c.h.b16 %v2966
        %v3308 = vunpack.c.l.b16 %v2967
        %v3309 = vunpack.c.h.b16 %v2967
        %v3310 = vunpack.c.l.b16 %v2968
        %v3311 = vunpack.c.h.b16 %v2968
        %v3312 = vunpack.c.l.b16 %v2969
        %v3313 = vunpack.c.h.b16 %v2969
        %v3314 = vunpack.c.l.b16 %v2970
        %v3315 = vunpack.c.h.b16 %v2970
        %v3316 = vunpack.c.l.b16 %v2971
        %v3317 = vunpack.c.h.b16 %v2971
        %v3318 = vunpack.c.l.b16 %v2972
        %v3319 = vunpack.c.h.b16 %v2972
        %v3320 = vunpack.c.l.b16 %v2973
        %v3321 = vunpack.c.h.b16 %v2973
        %v3322 = vunpack.c.l.b16 %v2974
        %v3323 = vunpack.c.h.b16 %v2974
        %v3324 = vunpack.c.l.b16 %v2975
        %v3325 = vunpack.c.h.b16 %v2975
        %v3326 = vunpack.c.l.b16 %v2976
        %v3327 = vunpack.c.h.b16 %v2976
        %v3328 = vunpack.c.l.b16 %v2977
        %v3329 = vunpack.c.h.b16 %v2977
        %v3330 = vunpack.c.l.b16 %v2978
        %v3331 = vunpack.c.h.b16 %v2978
        %v3332 = vunpack.c.l.b16 %v2979
        %v3333 = vunpack.c.h.b16 %v2979
        %v3334 = vunpack.c.l.b16 %v2980
        %v3335 = vunpack.c.h.b16 %v2980
        %v3336 = vunpack.c.l.b16 %v2981
        %v3337 = vunpack.c.h.b16 %v2981
        %v3338 = vunpack.c.l.b16 %v2982
        %v3339 = vunpack.c.h.b16 %v2982
        %v3340 = vunpack.c.l.b16 %v2983
        %v3341 = vunpack.c.h.b16 %v2983
        %v3342 = vunpack.c.l.b16 %v2984
        %v3343 = vunpack.c.h.b16 %v2984
        %v3344 = vunpack.c.l.b16 %v2985
        %v3345 = vunpack.c.h.b16 %v2985
        %v3346 = vunpack.c.l.b16 %v2986
        %v3347 = vunpack.c.h.b16 %v2986
        %v3348 = vunpack.c.l.b16 %v2987
        %v3349 = vunpack.c.h.b16 %v2987
        %v3350 = vunpack.c.l.b16 %v2988
        %v3351 = vunpack.c.h.b16 %v2988
        %v3352 = vunpack.c.l.b16 %v2989
        %v3353 = vunpack.c.h.b16 %v2989
        %v3354 = vunpack.c.l.b16 %v2990
        %v3355 = vunpack.c.h.b16 %v2990
        %v3356 = vunpack.c.l.b16 %v2991
        %v3357 = vunpack.c.h.b16 %v2991
        %v3358 = vunpack.c.l.b16 %v2992
        %v3359 = vunpack.c.h.b16 %v2992
        %v3360 = vunpack.c.l.b16 %v2993
        %v3361 = vunpack.c.h.b16 %v2993
        %v3362 = vunpack.c.l.b16 %v2994
        %v3363 = vunpack.c.h.b16 %v2994
        %v3364 = vunpack.c.l.b16 %v2995
        %v3365 = vunpack.c.h.b16 %v2995
        %v3366 = vunpack.c.l.b16 %v2996
        %v3367 = vunpack.c.h.b16 %v2996
        %v3368 = vunpack.c.l.b16 %v2997
        %v3369 = vunpack.c.h.b16 %v2997
        %v3370 = vunpack.c.l.b16 %v2998
        %v3371 = vunpack.c.h.b16 %v2998
        %v3372 = vunpack.c.l.b16 %v2999
        %v3373 = vunpack.c.h.b16 %v2999
        %v3374 = vunpack.c.l.b16 %v3000
        %v3375 = vunpack.c.h.b16 %v3000
        %v3376 = vunpack.c.l.b16 %v3001
        %v3377 = vunpack.c.h.b16 %v3001
        %v3378 = vunpack.c.l.b16 %v3002
        %v3379 = vunpack.c.h.b16 %v3002
        %v3380 = vunpack.c.l.b16 %v3003
        %v3381 = vunpack.c.h.b16 %v3003
        %v3382 = vunpack.c.l.b16 %v3004
        %v3383 = vunpack.c.h.b16 %v3004
        %v3384 = vunpack.c.l.b16 %v3005
        %v3385 = vunpack.c.h.b16 %v3005
        %v3386 = vunpack.c.l.b16 %v3006
        %v3387 = vunpack.c.h.b16 %v3006
        %v3388 = vunpack.c.l.b16 %v3007
        %v3389 = vunpack.c.h.b16 %v3007
        %v3390 = vunpack.c.l.b16 %v3008
        %v3391 = vunpack.c.h.b16 %v3008
        %v3392 = vunpack.c.l.b16 %v3009
        %v3393 = vunpack.c.h.b16 %v3009
        %v3394 = vunpack.c.l.b16 %v3010
        %v3395 = vunpack.c.h.b16 %v3010
        %v3396 = vunpack.c.l.b16 %v3011
        %v3397 = vunpack.c.h.b16 %v3011
        %v3398 = vunpack.c.l.b16 %v3012
        %v3399 = vunpack.c.h.b16 %v3012
        %v3400 = vunpack.c.l.b16 %v3013
        %v3401 = vunpack.c.h.b16 %v3013
        %v3402 = vunpack.c.l.b16 %v3014
        %v3403 = vunpack.c.h.b16 %v3014
        %v3404 = vunpack.c.l.b16 %v3015
        %v3405 = vunpack.c.h.b16 %v3015
        %v3406 = vunpack.c.l.b16 %v3016
        %v3407 = vunpack.c.h.b16 %v3016
        %v3408 = vunpack.c.l.b16 %v3017
        %v3409 = vunpack.c.h.b16 %v3017
        %v3410 = vunpack.c.l.b16 %v3018
        %v3411 = vunpack.c.h.b16 %v3018
        %v3412 = vunpack.c.l.b16 %v3019
        %v3413 = vunpack.c.h.b16 %v3019
        %v3414 = vunpack.c.l.b16 %v3020
        %v3415 = vunpack.c.h.b16 %v3020
        %v3416 = vunpack.c.l.b16 %v3021
        %v3417 = vunpack.c.h.b16 %v3021
        %v3418 = vunpack.c.l.b16 %v3022
        %v3419 = vunpack.c.h.b16 %v3022
        %v3420 = vunpack.c.l.b16 %v3023
        %v3421 = vunpack.c.h.b16 %v3023
        %v3422 = vunpack.c.l.b16 %v3024
        %v3423 = vunpack.c.h.b16 %v3024
        %v3424 = vunpack.c.l.b16 %v3025
        %v3425 = vunpack.c.h.b16 %v3025
        %v3426 = vunpack.c.l.b16 %v3026
        %v3427 = vunpack.c.h.b16 %v3026
        %v3428 = vunpack.c.l.b16 %v3027
        %v3429 = vunpack.c.h.b16 %v3027
        %v3430 = vunpack.c.l.b16 %v3028
        %v3431 = vunpack.c.h.b16 %v3028
        %v3432 = vunpack.c.l.b16 %v3029
        %v3433 = vunpack.c.h.b16 %v3029
        %v3434 = vunpack.c.l.b16 %v3030
        %v3435 = vunpack.c.h.b16 %v3030
        %v3436 = vunpack.c.l.b16 %v3031
        %v3437 = vunpack.c.h.b16 %v3031
        %v3438 = vunpack.c.l.b16 %v3032
        %v3439 = vunpack.c.h.b16 %v3032
        %v3440 = vunpack.c.l.b16 %v3033
        %v3441 = vunpack.c.h.b16 %v3033
        %v3442 = vunpack.c.l.b16 %v3034
        %v3443 = vunpack.c.h.b16 %v3034
        %v3444 = vunpack.c.l.b16 %v3035
        %v3445 = vunpack.c.h.b16 %v3035
        %v3446 = vunpack.c.l.b16 %v3036
        %v3447 = vunpack.c.h.b16 %v3036
        %v3448 = vunpack.c.l.b16 %v3037
        %v3449 = vunpack.c.h.b16 %v3037
        %v3450 = vunpack.c.l.b16 %v3038
        %v3451 = vunpack.c.h.b16 %v3038
        %v3452 = vunpack.c.l.b16 %v3039
        %v3453 = vunpack.c.h.b16 %v3039
        %v3454 = vunpack.c.l.b16 %v3040
        %v3455 = vunpack.c.h.b16 %v3040
        %v3456 = vunpack.c.l.b16 %v3041
        %v3457 = vunpack.c.h.b16 %v3041
        %v3458 = vunpack.c.l.b16 %v3042
        %v3459 = vunpack.c.h.b16 %v3042
        %v3460 = vunpack.c.l.b16 %v3043
        %v3461 = vunpack.c.h.b16 %v3043
        %v3462 = vunpack.c.l.b16 %v3044
        %v3463 = vunpack.c.h.b16 %v3044
        %v3464 = vunpack.c.l.b16 %v3045
        %v3465 = vunpack.c.h.b16 %v3045
        %v3466 = vunpack.c.l.b16 %v3046
        %v3467 = vunpack.c.h.b16 %v3046
        %v3468 = vunpack.c.l.b16 %v3047
        %v3469 = vunpack.c.h.b16 %v3047
        %v3470 = vunpack.c.l.b16 %v3048
        %v3471 = vunpack.c.h.b16 %v3048
        %v3472 = vunpack.c.l.b16 %v3049
        %v3473 = vunpack.c.h.b16 %v3049
        %v3474 = vunpack.c.l.b16 %v3050
        %v3475 = vunpack.c.h.b16 %v3050
        %v3476 = vunpack.c.l.b16 %v3051
        %v3477 = vunpack.c.h.b16 %v3051
        %v3478 = vpack.c.b16 %v3230, %v3222
        %v3479 = vpack.c.b16 %v3231, %v3223
        %v3480 = vpack.c.b16 %v3232, %v3224
        %v3481 = vpack.c.b16 %v3233, %v3225
        %v3482 = vpack.c.b16 %v3234, %v3226
        %v3483 = vpack.c.b16 %v3235, %v3227
        %v3484 = vpack.c.b16 %v3236, %v3228
        %v3485 = vpack.c.b16 %v3237, %v3229
        %v3486 = vpack.c.b16 %v3246, %v3238
        %v3487 = vpack.c.b16 %v3247, %v3239
        %v3488 = vpack.c.b16 %v3248, %v3240
        %v3489 = vpack.c.b16 %v3249, %v3241
        %v3490 = vpack.c.b16 %v3250, %v3242
        %v3491 = vpack.c.b16 %v3251, %v3243
        %v3492 = vpack.c.b16 %v3252, %v3244
        %v3493 = vpack.c.b16 %v3253, %v3245
        %v3494 = vpack.c.b16 %v3262, %v3254
        %v3495 = vpack.c.b16 %v3263, %v3255
        %v3496 = vpack.c.b16 %v3264, %v3256
        %v3497 = vpack.c.b16 %v3265, %v3257
        %v3498 = vpack.c.b16 %v3266, %v3258
        %v3499 = vpack.c.b16 %v3267, %v3259
        %v3500 = vpack.c.b16 %v3268, %v3260
        %v3501 = vpack.c.b16 %v3269, %v3261
        %v3502 = vpack.c.b16 %v3278, %v3270
        %v3503 = vpack.c.b16 %v3279, %v3271
        %v3504 = vpack.c.b16 %v3280, %v3272
        %v3505 = vpack.c.b16 %v3281, %v3273
        %v3506 = vpack.c.b16 %v3282, %v3274
        %v3507 = vpack.c.b16 %v3283, %v3275
        %v3508 = vpack.c.b16 %v3284, %v3276
        %v3509 = vpack.c.b16 %v3285, %v3277
        %v3510 = vpack.c.b16 %v3294, %v3286
        %v3511 = vpack.c.b16 %v3295, %v3287
        %v3512 = vpack.c.b16 %v3296, %v3288
        %v3513 = vpack.c.b16 %v3297, %v3289
        %v3514 = vpack.c.b16 %v3298, %v3290
        %v3515 = vpack.c.b16 %v3299, %v3291
        %v3516 = vpack.c.b16 %v3300, %v3292
        %v3517 = vpack.c.b16 %v3301, %v3293
        %v3518 = vpack.c.b16 %v3310, %v3302
        %v3519 = vpack.c.b16 %v3311, %v3303
        %v3520 = vpack.c.b16 %v3312, %v3304
        %v3521 = vpack.c.b16 %v3313, %v3305
        %v3522 = vpack.c.b16 %v3314, %v3306
        %v3523 = vpack.c.b16 %v3315, %v3307
        %v3524 = vpack.c.b16 %v3316, %v3308
        %v3525 = vpack.c.b16 %v3317, %v3309
        %v3526 = vpack.c.b16 %v3326, %v3318
        %v3527 = vpack.c.b16 %v3327, %v3319
        %v3528 = vpack.c.b16 %v3328, %v3320
        %v3529 = vpack.c.b16 %v3329, %v3321
        %v3530 = vpack.c.b16 %v3330, %v3322
        %v3531 = vpack.c.b16 %v3331, %v3323
        %v3532 = vpack.c.b16 %v3332, %v3324
        %v3533 = vpack.c.b16 %v3333, %v3325
        %v3534 = vpack.c.b16 %v3342, %v3334
        %v3535 = vpack.c.b16 %v3343, %v3335
        %v3536 = vpack.c.b16 %v3344, %v3336
        %v3537 = vpack.c.b16 %v3345, %v3337
        %v3538 = vpack.c.b16 %v3346, %v3338
        %v3539 = vpack.c.b16 %v3347, %v3339
        %v3540 = vpack.c.b16 %v3348, %v3340
        %v3541 = vpack.c.b16 %v3349, %v3341
        %v3542 = vpack.c.b16 %v3358, %v3350
        %v3543 = vpack.c.b16 %v3359, %v3351
        %v3544 = vpack.c.b16 %v3360, %v3352
        %v3545 = vpack.c.b16 %v3361, %v3353
        %v3546 = vpack.c.b16 %v3362, %v3354
        %v3547 = vpack.c.b16 %v3363, %v3355
        %v3548 = vpack.c.b16 %v3364, %v3356
        %v3549 = vpack.c.b16 %v3365, %v3357
        %v3550 = vpack.c.b16 %v3374, %v3366
        %v3551 = vpack.c.b16 %v3375, %v3367
        %v3552 = vpack.c.b16 %v3376, %v3368
        %v3553 = vpack.c.b16 %v3377, %v3369
        %v3554 = vpack.c.b16 %v3378, %v3370
        %v3555 = vpack.c.b16 %v3379, %v3371
        %v3556 = vpack.c.b16 %v3380, %v3372
        %v3557 = vpack.c.b16 %v3381, %v3373
        %v3558 = vpack.c.b16 %v3390, %v3382
        %v3559 = vpack.c.b16 %v3391, %v3383
        %v3560 = vpack.c.b16 %v3392, %v3384
        %v3561 = vpack.c.b16 %v3393, %v3385
        %v3562 = vpack.c.b16 %v3394, %v3386
        %v3563 = vpack.c.b16 %v3395, %v3387
        %v3564 = vpack.c.b16 %v3396, %v3388
        %v3565 = vpack.c.b16 %v3397, %v3389
        %v3566 = vpack.c.b16 %v3406, %v3398
        %v3567 = vpack.c.b16 %v3407, %v3399
        %v3568 = vpack.c.b16 %v3408, %v3400
        %v3569 = vpack.c.b16 %v3409, %v3401
        %v3570 = vpack.c.b16 %v3410, %v3402
        %v3571 = vpack.c.b16 %v3411, %v3403
        %v3572 = vpack.c.b16 %v3412, %v3404
        %v3573 = vpack.c.b16 %v3413, %v3405
        %v3574 = vpack.c.b16 %v3422, %v3414
        %v3575 = vpack.c.b16 %v3423, %v3415
        %v3576 = vpack.c.b16 %v3424, %v3416
        %v3577 = vpack.c.b16 %v3425, %v3417
        %v3578 = vpack.c.b16 %v3426, %v3418
        %v3579 = vpack.c.b16 %v3427, %v3419
        %v3580 = vpack.c.b16 %v3428, %v3420
        %v3581 = vpack.c.b16 %v3429, %v3421
        %v3582 = vpack.c.b16 %v3438, %v3430
        %v3583 = vpack.c.b16 %v3439, %v3431
        %v3584 = vpack.c.b16 %v3440, %v3432
        %v3585 = vpack.c.b16 %v3441, %v3433
        %v3586 = vpack.c.b16 %v3442, %v3434
        %v3587 = vpack.c.b16 %v3443, %v3435
        %v3588 = vpack.c.b16 %v3444, %v3436
        %v3589 = vpack.c.b16 %v3445, %v3437
        %v3590 = vpack.c.b16 %v3454, %v3446
        %v3591 = vpack.c.b16 %v3455, %v3447
        %v3592 = vpack.c.b16 %v3456, %v3448
        %v3593 = vpack.c.b16 %v3457, %v3449
        %v3594 = vpack.c.b16 %v3458, %v3450
        %v3595 = vpack.c.b16 %v3459, %v3451
        %v3596 = vpack.c.b16 %v3460, %v3452
        %v3597 = vpack.c.b16 %v3461, %v3453
        %v3598 = vpack.c.b16 %v3470, %v3462
        %v3599 = vpack.c.b16 %v3471, %v3463
        %v3600 = vpack.c.b16 %v3472, %v3464
        %v3601 = vpack.c.b16 %v3473, %v3465
        %v3602 = vpack.c.b16 %v3474, %v3466
        %v3603 = vpack.c.b16 %v3475, %v3467
        %v3604 = vpack.c.b16 %v3476, %v3468
        %v3605 = vpack.c.b16 %v3477, %v3469
        %3734 = vmatprep.subr.bf16.mxu0 %v3479
        %3735 = vmatpush1.bf16.msra.mxu0 %v3478
        %3736 = vmatprep.subr.bf16.mxu0 %v3487
        %3737 = vmatpush1.bf16.msra.mxu0 %v3486
        %3738 = vmatprep.subr.bf16.mxu0 %v3495
        %3739 = vmatpush1.bf16.msra.mxu0 %v3494
        %3740 = vmatprep.subr.bf16.mxu0 %v3503
        %3741 = vmatpush1.bf16.msra.mxu0 %v3502
        %3742 = vmatprep.subr.bf16.mxu0 %v3511
        %3743 = vmatpush1.bf16.msra.mxu0 %v3510
        %3744 = vmatprep.subr.bf16.mxu0 %v3519
        %3745 = vmatpush1.bf16.msra.mxu0 %v3518
        %3746 = vmatprep.subr.bf16.mxu0 %v3527
        %3747 = vmatpush1.bf16.msra.mxu0 %v3526
        %3748 = vmatprep.subr.bf16.mxu0 %v3535
        %3749 = vmatpush1.bf16.msra.mxu0 %v3534
        %3750 = vmatprep.subr.bf16.mxu0 %v3543
        %3751 = vmatpush1.bf16.msra.mxu0 %v3542
        %3752 = vmatprep.subr.bf16.mxu0 %v3551
        %3753 = vmatpush1.bf16.msra.mxu0 %v3550
        %3754 = vmatprep.subr.bf16.mxu0 %v3559
        %3755 = vmatpush1.bf16.msra.mxu0 %v3558
        %3756 = vmatprep.subr.bf16.mxu0 %v3567
        %3757 = vmatpush1.bf16.msra.mxu0 %v3566
        %3758 = vmatprep.subr.bf16.mxu0 %v3575
        %3759 = vmatpush1.bf16.msra.mxu0 %v3574
        %3760 = vmatprep.subr.bf16.mxu0 %v3583
        %3761 = vmatpush1.bf16.msra.mxu0 %v3582
        %3762 = vmatprep.subr.bf16.mxu0 %v3591
        %3763 = vmatpush1.bf16.msra.mxu0 %v3590
        %3764 = vmatprep.subr.bf16.mxu0 %v3599
        %3765 = vmatpush1.bf16.msra.mxu0 %v3598
        %3766 = vmatprep.mubr.bf16.mxu0 %v2909
        %3767 = vmatmul.mubr.bf16.gmra.mrb[0].mxu0 %v2908
        %v3768 = vpop.f32.mrb[0].mxu0
        %v3769 = vadd.f32 %v3057, %v3768
        %v3770 = vpop.f32.mrb[0].mxu0
        %v3771 = vadd.f32 %v3061, %v3770
        %v3772 = vpop.f32.mrb[0].mxu0
        %v3773 = vadd.f32 %v3057, %v3772
        %v3774 = vpop.f32.mrb[0].mxu0
        %v3775 = vadd.f32 %v3061, %v3774
        %3776 = vmatprep.mubr.bf16.mxu0 %v2911
        %3777 = vmatmul.mubr.bf16.gmra.mrb[0].mxu0 %v2910
        %v3778 = vpop.f32.mrb[0].mxu0
        %v3779 = vadd.f32 %v3057, %v3778
        %v3780 = vpop.f32.mrb[0].mxu0
        %v3781 = vadd.f32 %v3061, %v3780
        %v3782 = vpop.f32.mrb[0].mxu0
        %v3783 = vadd.f32 %v3057, %v3782
        %v3784 = vpop.f32.mrb[0].mxu0
        %v3785 = vadd.f32 %v3061, %v3784
        %3786 = vmatprep.mubr.bf16.mxu0 %v2913
        %3787 = vmatmul.mubr.bf16.gmra.mrb[0].mxu0 %v2912
        %v3788 = vpop.f32.mrb[0].mxu0
        %v3789 = vadd.f32 %v3057, %v3788
        %v3790 = vpop.f32.mrb[0].mxu0
        %v3791 = vadd.f32 %v3061, %v3790
        %v3792 = vpop.f32.mrb[0].mxu0
        %v3793 = vadd.f32 %v3057, %v3792
        %v3794 = vpop.f32.mrb[0].mxu0
        %v3795 = vadd.f32 %v3061, %v3794
        %3796 = vmatprep.mubr.bf16.mxu0 %v2915
        %3797 = vmatmul.mubr.bf16.gmra.mrb[0].mxu0 %v2914
        %v3798 = vpop.f32.mrb[0].mxu0
        %v3799 = vadd.f32 %v3057, %v3798
        %v3800 = vpop.f32.mrb[0].mxu0
        %v3801 = vadd.f32 %v3061, %v3800
        %v3802 = vpop.f32.mrb[0].mxu0
        %v3803 = vadd.f32 %v3057, %v3802
        %v3804 = vpop.f32.mrb[0].mxu0
        %v3805 = vadd.f32 %v3061, %v3804
        %3806 = vmatprep.mubr.bf16.mxu0 %v2917
        %3807 = vmatmul.mubr.bf16.gmra.mrb[0].mxu0 %v2916
        %v3808 = vpop.f32.mrb[0].mxu0
        %v3809 = vadd.f32 %v3057, %v3808
        %v3810 = vpop.f32.mrb[0].mxu0
        %v3811 = vadd.f32 %v3061, %v3810
        %v3812 = vpop.f32.mrb[0].mxu0
        %v3813 = vadd.f32 %v3057, %v3812
        %v3814 = vpop.f32.mrb[0].mxu0
        %v3815 = vadd.f32 %v3061, %v3814
        %3816 = vmatprep.mubr.bf16.mxu0 %v2919
        %3817 = vmatmul.mubr.bf16.gmra.mrb[0].mxu0 %v2918
        %v3818 = vpop.f32.mrb[0].mxu0
        %v3819 = vadd.f32 %v3057, %v3818
        %v3820 = vpop.f32.mrb[0].mxu0
        %v3821 = vadd.f32 %v3061, %v3820
        %v3822 = vpop.f32.mrb[0].mxu0
        %v3823 = vadd.f32 %v3057, %v3822
        %v3824 = vpop.f32.mrb[0].mxu0
        %v3825 = vadd.f32 %v3061, %v3824
        %3826 = vmatprep.mubr.bf16.mxu0 %v2921
        %3827 = vmatmul.mubr.bf16.gmra.mrb[0].mxu0 %v2920
        %v3828 = vpop.f32.mrb[0].mxu0
        %v3829 = vadd.f32 %v3057, %v3828
        %v3830 = vpop.f32.mrb[0].mxu0
        %v3831 = vadd.f32 %v3061, %v3830
        %v3832 = vpop.f32.mrb[0].mxu0
        %v3833 = vadd.f32 %v3057, %v3832
        %v3834 = vpop.f32.mrb[0].mxu0
        %v3835 = vadd.f32 %v3061, %v3834
        %3836 = vmatprep.mubr.bf16.mxu0 %v2923
        %3837 = vmatmul.mubr.bf16.gmra.mrb[0].mxu0 %v2922
        %v3838 = vpop.f32.mrb[0].mxu0
        %v3839 = vadd.f32 %v3057, %v3838
        %v3840 = vpop.f32.mrb[0].mxu0
        %v3841 = vadd.f32 %v3061, %v3840
        %v3842 = vpop.f32.mrb[0].mxu0
        %v3843 = vadd.f32 %v3057, %v3842
        %v3844 = vpop.f32.mrb[0].mxu0
        %v3845 = vadd.f32 %v3061, %v3844
        %3846 = vdwg.mxu0
        %3847 = vmatprep.subr.bf16.mxu0 %v3481
        %3848 = vmatpush1.bf16.msra.mxu0 %v3480
        %3849 = vmatprep.subr.bf16.mxu0 %v3489
        %3850 = vmatpush1.bf16.msra.mxu0 %v3488
        %3851 = vmatprep.subr.bf16.mxu0 %v3497
        %3852 = vmatpush1.bf16.msra.mxu0 %v3496
        %3853 = vmatprep.subr.bf16.mxu0 %v3505
        %3854 = vmatpush1.bf16.msra.mxu0 %v3504
        %3855 = vmatprep.subr.bf16.mxu0 %v3513
        %3856 = vmatpush1.bf16.msra.mxu0 %v3512
        %3857 = vmatprep.subr.bf16.mxu0 %v3521
        %3858 = vmatpush1.bf16.msra.mxu0 %v3520
        %3859 = vmatprep.subr.bf16.mxu0 %v3529
        %3860 = vmatpush1.bf16.msra.mxu0 %v3528
        %3861 = vmatprep.subr.bf16.mxu0 %v3537
        %3862 = vmatpush1.bf16.msra.mxu0 %v3536
        %3863 = vmatprep.subr.bf16.mxu0 %v3545
        %3864 = vmatpush1.bf16.msra.mxu0 %v3544
        %3865 = vmatprep.subr.bf16.mxu0 %v3553
        %3866 = vmatpush1.bf16.msra.mxu0 %v3552
        %3867 = vmatprep.subr.bf16.mxu0 %v3561
        %3868 = vmatpush1.bf16.msra.mxu0 %v3560
        %3869 = vmatprep.subr.bf16.mxu0 %v3569
        %3870 = vmatpush1.bf16.msra.mxu0 %v3568
        %3871 = vmatprep.subr.bf16.mxu0 %v3577
        %3872 = vmatpush1.bf16.msra.mxu0 %v3576
        %3873 = vmatprep.subr.bf16.mxu0 %v3585
        %3874 = vmatpush1.bf16.msra.mxu0 %v3584
        %3875 = vmatprep.subr.bf16.mxu0 %v3593
        %3876 = vmatpush1.bf16.msra.mxu0 %v3592
        %3877 = vmatprep.subr.bf16.mxu0 %v3601
        %3878 = vmatpush1.bf16.msra.mxu0 %v3600
        %3879 = vmatprep.mubr.bf16.mxu0 %v2909
        %3880 = vmatmul.mubr.bf16.gmra.mrb[0].mxu0 %v2908
        %v3881 = vpop.f32.mrb[0].mxu0
        %v3882 = vadd.f32 %v3065, %v3881
        %v3883 = vpop.f32.mrb[0].mxu0
        %v3884 = vadd.f32 %v3069, %v3883
        %v3885 = vpop.f32.mrb[0].mxu0
        %v3886 = vadd.f32 %v3065, %v3885
        %v3887 = vpop.f32.mrb[0].mxu0
        %v3888 = vadd.f32 %v3069, %v3887
        %3889 = vmatprep.mubr.bf16.mxu0 %v2911
        %3890 = vmatmul.mubr.bf16.gmra.mrb[0].mxu0 %v2910
        %v3891 = vpop.f32.mrb[0].mxu0
        %v3892 = vadd.f32 %v3065, %v3891
        %v3893 = vpop.f32.mrb[0].mxu0
        %v3894 = vadd.f32 %v3069, %v3893
        %v3895 = vpop.f32.mrb[0].mxu0
        %v3896 = vadd.f32 %v3065, %v3895
        %v3897 = vpop.f32.mrb[0].mxu0
        %v3898 = vadd.f32 %v3069, %v3897
        %3899 = vmatprep.mubr.bf16.mxu0 %v2913
        %3900 = vmatmul.mubr.bf16.gmra.mrb[0].mxu0 %v2912
        %v3901 = vpop.f32.mrb[0].mxu0
        %v3902 = vadd.f32 %v3065, %v3901
        %v3903 = vpop.f32.mrb[0].mxu0
        %v3904 = vadd.f32 %v3069, %v3903
        %v3905 = vpop.f32.mrb[0].mxu0
        %v3906 = vadd.f32 %v3065, %v3905
        %v3907 = vpop.f32.mrb[0].mxu0
        %v3908 = vadd.f32 %v3069, %v3907
        %3909 = vmatprep.mubr.bf16.mxu0 %v2915
        %3910 = vmatmul.mubr.bf16.gmra.mrb[0].mxu0 %v2914
        %v3911 = vpop.f32.mrb[0].mxu0
        %v3912 = vadd.f32 %v3065, %v3911
        %v3913 = vpop.f32.mrb[0].mxu0
        %v3914 = vadd.f32 %v3069, %v3913
        %v3915 = vpop.f32.mrb[0].mxu0
        %v3916 = vadd.f32 %v3065, %v3915
        %v3917 = vpop.f32.mrb[0].mxu0
        %v3918 = vadd.f32 %v3069, %v3917
        %3919 = vmatprep.mubr.bf16.mxu0 %v2917
        %3920 = vmatmul.mubr.bf16.gmra.mrb[0].mxu0 %v2916
        %v3921 = vpop.f32.mrb[0].mxu0
        %v3922 = vadd.f32 %v3065, %v3921
        %v3923 = vpop.f32.mrb[0].mxu0
        %v3924 = vadd.f32 %v3069, %v3923
        %v3925 = vpop.f32.mrb[0].mxu0
        %v3926 = vadd.f32 %v3065, %v3925
        %v3927 = vpop.f32.mrb[0].mxu0
        %v3928 = vadd.f32 %v3069, %v3927
        %3929 = vmatprep.mubr.bf16.mxu0 %v2919
        %3930 = vmatmul.mubr.bf16.gmra.mrb[0].mxu0 %v2918
        %v3931 = vpop.f32.mrb[0].mxu0
        %v3932 = vadd.f32 %v3065, %v3931
        %v3933 = vpop.f32.mrb[0].mxu0
        %v3934 = vadd.f32 %v3069, %v3933
        %v3935 = vpop.f32.mrb[0].mxu0
        %v3936 = vadd.f32 %v3065, %v3935
        %v3937 = vpop.f32.mrb[0].mxu0
        %v3938 = vadd.f32 %v3069, %v3937
        %3939 = vmatprep.mubr.bf16.mxu0 %v2921
        %3940 = vmatmul.mubr.bf16.gmra.mrb[0].mxu0 %v2920
        %v3941 = vpop.f32.mrb[0].mxu0
        %v3942 = vadd.f32 %v3065, %v3941
        %v3943 = vpop.f32.mrb[0].mxu0
        %v3944 = vadd.f32 %v3069, %v3943
        %v3945 = vpop.f32.mrb[0].mxu0
        %v3946 = vadd.f32 %v3065, %v3945
        %v3947 = vpop.f32.mrb[0].mxu0
        %v3948 = vadd.f32 %v3069, %v3947
        %3949 = vmatprep.mubr.bf16.mxu0 %v2923
        %3950 = vmatmul.mubr.bf16.gmra.mrb[0].mxu0 %v2922
        %v3951 = vpop.f32.mrb[0].mxu0
        %v3952 = vadd.f32 %v3065, %v3951
        %v3953 = vpop.f32.mrb[0].mxu0
        %v3954 = vadd.f32 %v3069, %v3953
        %v3955 = vpop.f32.mrb[0].mxu0
        %v3956 = vadd.f32 %v3065, %v3955
        %v3957 = vpop.f32.mrb[0].mxu0
        %v3958 = vadd.f32 %v3069, %v3957
        %3959 = vdwg.mxu0
        %3960 = vmatprep.subr.bf16.mxu0 %v3483
        %3961 = vmatpush1.bf16.msra.mxu0 %v3482
        %3962 = vmatprep.subr.bf16.mxu0 %v3491
        %3963 = vmatpush1.bf16.msra.mxu0 %v3490
        %3964 = vmatprep.subr.bf16.mxu0 %v3499
        %3965 = vmatpush1.bf16.msra.mxu0 %v3498
        %3966 = vmatprep.subr.bf16.mxu0 %v3507
        %3967 = vmatpush1.bf16.msra.mxu0 %v3506
        %3968 = vmatprep.subr.bf16.mxu0 %v3515
        %3969 = vmatpush1.bf16.msra.mxu0 %v3514
        %3970 = vmatprep.subr.bf16.mxu0 %v3523
        %3971 = vmatpush1.bf16.msra.mxu0 %v3522
        %3972 = vmatprep.subr.bf16.mxu0 %v3531
        %3973 = vmatpush1.bf16.msra.mxu0 %v3530
        %3974 = vmatprep.subr.bf16.mxu0 %v3539
        %3975 = vmatpush1.bf16.msra.mxu0 %v3538
        %3976 = vmatprep.subr.bf16.mxu0 %v3547
        %3977 = vmatpush1.bf16.msra.mxu0 %v3546
        %3978 = vmatprep.subr.bf16.mxu0 %v3555
        %3979 = vmatpush1.bf16.msra.mxu0 %v3554
        %3980 = vmatprep.subr.bf16.mxu0 %v3563
        %3981 = vmatpush1.bf16.msra.mxu0 %v3562
        %3982 = vmatprep.subr.bf16.mxu0 %v3571
        %3983 = vmatpush1.bf16.msra.mxu0 %v3570
        %3984 = vmatprep.subr.bf16.mxu0 %v3579
        %3985 = vmatpush1.bf16.msra.mxu0 %v3578
        %3986 = vmatprep.subr.bf16.mxu0 %v3587
        %3987 = vmatpush1.bf16.msra.mxu0 %v3586
        %3988 = vmatprep.subr.bf16.mxu0 %v3595
        %3989 = vmatpush1.bf16.msra.mxu0 %v3594
        %3990 = vmatprep.subr.bf16.mxu0 %v3603
        %3991 = vmatpush1.bf16.msra.mxu0 %v3602
        %3992 = vmatprep.mubr.bf16.mxu0 %v2909
        %3993 = vmatmul.mubr.bf16.gmra.mrb[0].mxu0 %v2908
        %v3994 = vpop.f32.mrb[0].mxu0
        %v3995 = vadd.f32 %v3073, %v3994
        %v3996 = vpop.f32.mrb[0].mxu0
        %v3997 = vadd.f32 %v3077, %v3996
        %v3998 = vpop.f32.mrb[0].mxu0
        %v3999 = vadd.f32 %v3073, %v3998
        %v4000 = vpop.f32.mrb[0].mxu0
        %v4001 = vadd.f32 %v3077, %v4000
        %4002 = vmatprep.mubr.bf16.mxu0 %v2911
        %4003 = vmatmul.mubr.bf16.gmra.mrb[0].mxu0 %v2910
        %v4004 = vpop.f32.mrb[0].mxu0
        %v4005 = vadd.f32 %v3073, %v4004
        %v4006 = vpop.f32.mrb[0].mxu0
        %v4007 = vadd.f32 %v3077, %v4006
        %v4008 = vpop.f32.mrb[0].mxu0
        %v4009 = vadd.f32 %v3073, %v4008
        %v4010 = vpop.f32.mrb[0].mxu0
        %v4011 = vadd.f32 %v3077, %v4010
        %4012 = vmatprep.mubr.bf16.mxu0 %v2913
        %4013 = vmatmul.mubr.bf16.gmra.mrb[0].mxu0 %v2912
        %v4014 = vpop.f32.mrb[0].mxu0
        %v4015 = vadd.f32 %v3073, %v4014
        %v4016 = vpop.f32.mrb[0].mxu0
        %v4017 = vadd.f32 %v3077, %v4016
        %v4018 = vpop.f32.mrb[0].mxu0
        %v4019 = vadd.f32 %v3073, %v4018
        %v4020 = vpop.f32.mrb[0].mxu0
        %v4021 = vadd.f32 %v3077, %v4020
        %4022 = vmatprep.mubr.bf16.mxu0 %v2915
        %4023 = vmatmul.mubr.bf16.gmra.mrb[0].mxu0 %v2914
        %v4024 = vpop.f32.mrb[0].mxu0
        %v4025 = vadd.f32 %v3073, %v4024
        %v4026 = vpop.f32.mrb[0].mxu0
        %v4027 = vadd.f32 %v3077, %v4026
        %v4028 = vpop.f32.mrb[0].mxu0
        %v4029 = vadd.f32 %v3073, %v4028
        %v4030 = vpop.f32.mrb[0].mxu0
        %v4031 = vadd.f32 %v3077, %v4030
        %4032 = vmatprep.mubr.bf16.mxu0 %v2917
        %4033 = vmatmul.mubr.bf16.gmra.mrb[0].mxu0 %v2916
        %v4034 = vpop.f32.mrb[0].mxu0
        %v4035 = vadd.f32 %v3073, %v4034
        %v4036 = vpop.f32.mrb[0].mxu0
        %v4037 = vadd.f32 %v3077, %v4036
        %v4038 = vpop.f32.mrb[0].mxu0
        %v4039 = vadd.f32 %v3073, %v4038
        %v4040 = vpop.f32.mrb[0].mxu0
        %v4041 = vadd.f32 %v3077, %v4040
        %4042 = vmatprep.mubr.bf16.mxu0 %v2919
        %4043 = vmatmul.mubr.bf16.gmra.mrb[0].mxu0 %v2918
        %v4044 = vpop.f32.mrb[0].mxu0
        %v4045 = vadd.f32 %v3073, %v4044
        %v4046 = vpop.f32.mrb[0].mxu0
        %v4047 = vadd.f32 %v3077, %v4046
        %v4048 = vpop.f32.mrb[0].mxu0
        %v4049 = vadd.f32 %v3073, %v4048
        %v4050 = vpop.f32.mrb[0].mxu0
        %v4051 = vadd.f32 %v3077, %v4050
        %4052 = vmatprep.mubr.bf16.mxu0 %v2921
        %4053 = vmatmul.mubr.bf16.gmra.mrb[0].mxu0 %v2920
        %v4054 = vpop.f32.mrb[0].mxu0
        %v4055 = vadd.f32 %v3073, %v4054
        %v4056 = vpop.f32.mrb[0].mxu0
        %v4057 = vadd.f32 %v3077, %v4056
        %v4058 = vpop.f32.mrb[0].mxu0
        %v4059 = vadd.f32 %v3073, %v4058
        %v4060 = vpop.f32.mrb[0].mxu0
        %v4061 = vadd.f32 %v3077, %v4060
        %4062 = vmatprep.mubr.bf16.mxu0 %v2923
        %4063 = vmatmul.mubr.bf16.gmra.mrb[0].mxu0 %v2922
        %v4064 = vpop.f32.mrb[0].mxu0
        %v4065 = vadd.f32 %v3073, %v4064
        %v4066 = vpop.f32.mrb[0].mxu0
        %v4067 = vadd.f32 %v3077, %v4066
        %v4068 = vpop.f32.mrb[0].mxu0
        %v4069 = vadd.f32 %v3073, %v4068
        %v4070 = vpop.f32.mrb[0].mxu0
        %v4071 = vadd.f32 %v3077, %v4070
        %4072 = vdwg.mxu0
        %4073 = vmatprep.subr.bf16.mxu0 %v3485
        %4074 = vmatpush1.bf16.msra.mxu0 %v3484
        %4075 = vmatprep.subr.bf16.mxu0 %v3493
        %4076 = vmatpush1.bf16.msra.mxu0 %v3492
        %4077 = vmatprep.subr.bf16.mxu0 %v3501
        %4078 = vmatpush1.bf16.msra.mxu0 %v3500
        %4079 = vmatprep.subr.bf16.mxu0 %v3509
        %4080 = vmatpush1.bf16.msra.mxu0 %v3508
        %4081 = vmatprep.subr.bf16.mxu0 %v3517
        %4082 = vmatpush1.bf16.msra.mxu0 %v3516
        %4083 = vmatprep.subr.bf16.mxu0 %v3525
        %4084 = vmatpush1.bf16.msra.mxu0 %v3524
        %4085 = vmatprep.subr.bf16.mxu0 %v3533
        %4086 = vmatpush1.bf16.msra.mxu0 %v3532
        %4087 = vmatprep.subr.bf16.mxu0 %v3541
        %4088 = vmatpush1.bf16.msra.mxu0 %v3540
        %4089 = vmatprep.subr.bf16.mxu0 %v3549
        %4090 = vmatpush1.bf16.msra.mxu0 %v3548
        %4091 = vmatprep.subr.bf16.mxu0 %v3557
        %4092 = vmatpush1.bf16.msra.mxu0 %v3556
        %4093 = vmatprep.subr.bf16.mxu0 %v3565
        %4094 = vmatpush1.bf16.msra.mxu0 %v3564
        %4095 = vmatprep.subr.bf16.mxu0 %v3573
        %4096 = vmatpush1.bf16.msra.mxu0 %v3572
        %4097 = vmatprep.subr.bf16.mxu0 %v3581
        %4098 = vmatpush1.bf16.msra.mxu0 %v3580
        %4099 = vmatprep.subr.bf16.mxu0 %v3589
        %4100 = vmatpush1.bf16.msra.mxu0 %v3588
        %4101 = vmatprep.subr.bf16.mxu0 %v3597
        %4102 = vmatpush1.bf16.msra.mxu0 %v3596
        %4103 = vmatprep.subr.bf16.mxu0 %v3605
        %4104 = vmatpush1.bf16.msra.mxu0 %v3604
        %4105 = vmatprep.mubr.bf16.mxu0 %v2909
        %4106 = vmatmul.mubr.bf16.gmra.mrb[0].mxu0 %v2908
        %v4107 = vpop.f32.mrb[0].mxu0
        %v4108 = vadd.f32 %v3081, %v4107
        %v4109 = vpop.f32.mrb[0].mxu0
        %v4110 = vadd.f32 %v3085, %v4109
        %v4111 = vpop.f32.mrb[0].mxu0
        %v4112 = vadd.f32 %v3081, %v4111
        %v4113 = vpop.f32.mrb[0].mxu0
        %v4114 = vadd.f32 %v3085, %v4113
        %4115 = vmatprep.mubr.bf16.mxu0 %v2911
        %4116 = vmatmul.mubr.bf16.gmra.mrb[0].mxu0 %v2910
        %v4117 = vpop.f32.mrb[0].mxu0
        %v4118 = vadd.f32 %v3081, %v4117
        %v4119 = vpop.f32.mrb[0].mxu0
        %v4120 = vadd.f32 %v3085, %v4119
        %v4121 = vpop.f32.mrb[0].mxu0
        %v4122 = vadd.f32 %v3081, %v4121
        %v4123 = vpop.f32.mrb[0].mxu0
        %v4124 = vadd.f32 %v3085, %v4123
        %4125 = vmatprep.mubr.bf16.mxu0 %v2913
        %4126 = vmatmul.mubr.bf16.gmra.mrb[0].mxu0 %v2912
        %v4127 = vpop.f32.mrb[0].mxu0
        %v4128 = vadd.f32 %v3081, %v4127
        %v4129 = vpop.f32.mrb[0].mxu0
        %v4130 = vadd.f32 %v3085, %v4129
        %v4131 = vpop.f32.mrb[0].mxu0
        %v4132 = vadd.f32 %v3081, %v4131
        %v4133 = vpop.f32.mrb[0].mxu0
        %v4134 = vadd.f32 %v3085, %v4133
        %4135 = vmatprep.mubr.bf16.mxu0 %v2915
        %4136 = vmatmul.mubr.bf16.gmra.mrb[0].mxu0 %v2914
        %v4137 = vpop.f32.mrb[0].mxu0
        %v4138 = vadd.f32 %v3081, %v4137
        %v4139 = vpop.f32.mrb[0].mxu0
        %v4140 = vadd.f32 %v3085, %v4139
        %v4141 = vpop.f32.mrb[0].mxu0
        %v4142 = vadd.f32 %v3081, %v4141
        %v4143 = vpop.f32.mrb[0].mxu0
        %v4144 = vadd.f32 %v3085, %v4143
        %4145 = vmatprep.mubr.bf16.mxu0 %v2917
        %4146 = vmatmul.mubr.bf16.gmra.mrb[0].mxu0 %v2916
        %v4147 = vpop.f32.mrb[0].mxu0
        %v4148 = vadd.f32 %v3081, %v4147
        %v4149 = vpop.f32.mrb[0].mxu0
        %v4150 = vadd.f32 %v3085, %v4149
        %v4151 = vpop.f32.mrb[0].mxu0
        %v4152 = vadd.f32 %v3081, %v4151
        %v4153 = vpop.f32.mrb[0].mxu0
        %v4154 = vadd.f32 %v3085, %v4153
        %4155 = vmatprep.mubr.bf16.mxu0 %v2919
        %4156 = vmatmul.mubr.bf16.gmra.mrb[0].mxu0 %v2918
        %v4157 = vpop.f32.mrb[0].mxu0
        %v4158 = vadd.f32 %v3081, %v4157
        %v4159 = vpop.f32.mrb[0].mxu0
        %v4160 = vadd.f32 %v3085, %v4159
        %v4161 = vpop.f32.mrb[0].mxu0
        %v4162 = vadd.f32 %v3081, %v4161
        %v4163 = vpop.f32.mrb[0].mxu0
        %v4164 = vadd.f32 %v3085, %v4163
        %4165 = vmatprep.mubr.bf16.mxu0 %v2921
        %4166 = vmatmul.mubr.bf16.gmra.mrb[0].mxu0 %v2920
        %v4167 = vpop.f32.mrb[0].mxu0
        %v4168 = vadd.f32 %v3081, %v4167
        %v4169 = vpop.f32.mrb[0].mxu0
        %v4170 = vadd.f32 %v3085, %v4169
        %v4171 = vpop.f32.mrb[0].mxu0
        %v4172 = vadd.f32 %v3081, %v4171
        %v4173 = vpop.f32.mrb[0].mxu0
        %v4174 = vadd.f32 %v3085, %v4173
        %4175 = vmatprep.mubr.bf16.mxu0 %v2923
        %4176 = vmatmul.mubr.bf16.gmra.mrb[0].mxu0 %v2922
        %v4177 = vpop.f32.mrb[0].mxu0
        %v4178 = vadd.f32 %v3081, %v4177
        %v4179 = vpop.f32.mrb[0].mxu0
        %v4180 = vadd.f32 %v3085, %v4179
        %v4181 = vpop.f32.mrb[0].mxu0
        %v4182 = vadd.f32 %v3081, %v4181
        %v4183 = vpop.f32.mrb[0].mxu0
        %v4184 = vadd.f32 %v3085, %v4183
        %4185 = vdwg.mxu0
        %v4186 = vxor.u32 %v3769, 2147483648
        %v4187 = vxor.u32 %v3771, 2147483648
        %v4188 = vxor.u32 %v3882, 2147483648
        %v4189 = vxor.u32 %v3884, 2147483648
        %v4190 = vxor.u32 %v3995, 2147483648
        %v4191 = vxor.u32 %v3997, 2147483648
        %v4192 = vxor.u32 %v4108, 2147483648
        %v4193 = vxor.u32 %v4110, 2147483648
        %v4194 = vxor.u32 %v3773, 2147483648
        %v4195 = vxor.u32 %v3775, 2147483648
        %v4196 = vxor.u32 %v3886, 2147483648
        %v4197 = vxor.u32 %v3888, 2147483648
        %v4198 = vxor.u32 %v3999, 2147483648
        %v4199 = vxor.u32 %v4001, 2147483648
        %v4200 = vxor.u32 %v4112, 2147483648
        %v4201 = vxor.u32 %v4114, 2147483648
        %v4202 = vxor.u32 %v3779, 2147483648
        %v4203 = vxor.u32 %v3781, 2147483648
        %v4204 = vxor.u32 %v3892, 2147483648
        %v4205 = vxor.u32 %v3894, 2147483648
        %v4206 = vxor.u32 %v4005, 2147483648
        %v4207 = vxor.u32 %v4007, 2147483648
        %v4208 = vxor.u32 %v4118, 2147483648
        %v4209 = vxor.u32 %v4120, 2147483648
        %v4210 = vxor.u32 %v3783, 2147483648
        %v4211 = vxor.u32 %v3785, 2147483648
        %v4212 = vxor.u32 %v3896, 2147483648
        %v4213 = vxor.u32 %v3898, 2147483648
        %v4214 = vxor.u32 %v4009, 2147483648
        %v4215 = vxor.u32 %v4011, 2147483648
        %v4216 = vxor.u32 %v4122, 2147483648
        %v4217 = vxor.u32 %v4124, 2147483648
        %v4218 = vxor.u32 %v3789, 2147483648
        %v4219 = vxor.u32 %v3791, 2147483648
        %v4220 = vxor.u32 %v3902, 2147483648
        %v4221 = vxor.u32 %v3904, 2147483648
        %v4222 = vxor.u32 %v4015, 2147483648
        %v4223 = vxor.u32 %v4017, 2147483648
        %v4224 = vxor.u32 %v4128, 2147483648
        %v4225 = vxor.u32 %v4130, 2147483648
        %v4226 = vxor.u32 %v3793, 2147483648
        %v4227 = vxor.u32 %v3795, 2147483648
        %v4228 = vxor.u32 %v3906, 2147483648
        %v4229 = vxor.u32 %v3908, 2147483648
        %v4230 = vxor.u32 %v4019, 2147483648
        %v4231 = vxor.u32 %v4021, 2147483648
        %v4232 = vxor.u32 %v4132, 2147483648
        %v4233 = vxor.u32 %v4134, 2147483648
        %v4234 = vxor.u32 %v3799, 2147483648
        %v4235 = vxor.u32 %v3801, 2147483648
        %v4236 = vxor.u32 %v3912, 2147483648
        %v4237 = vxor.u32 %v3914, 2147483648
        %v4238 = vxor.u32 %v4025, 2147483648
        %v4239 = vxor.u32 %v4027, 2147483648
        %v4240 = vxor.u32 %v4138, 2147483648
        %v4241 = vxor.u32 %v4140, 2147483648
        %v4242 = vxor.u32 %v3803, 2147483648
        %v4243 = vxor.u32 %v3805, 2147483648
        %v4244 = vxor.u32 %v3916, 2147483648
        %v4245 = vxor.u32 %v3918, 2147483648
        %v4246 = vxor.u32 %v4029, 2147483648
        %v4247 = vxor.u32 %v4031, 2147483648
        %v4248 = vxor.u32 %v4142, 2147483648
        %v4249 = vxor.u32 %v4144, 2147483648
        %v4250 = vxor.u32 %v3809, 2147483648
        %v4251 = vxor.u32 %v3811, 2147483648
        %v4252 = vxor.u32 %v3922, 2147483648
        %v4253 = vxor.u32 %v3924, 2147483648
        %v4254 = vxor.u32 %v4035, 2147483648
        %v4255 = vxor.u32 %v4037, 2147483648
        %v4256 = vxor.u32 %v4148, 2147483648
        %v4257 = vxor.u32 %v4150, 2147483648
        %v4258 = vxor.u32 %v3813, 2147483648
        %v4259 = vxor.u32 %v3815, 2147483648
        %v4260 = vxor.u32 %v3926, 2147483648
        %v4261 = vxor.u32 %v3928, 2147483648
        %v4262 = vxor.u32 %v4039, 2147483648
        %v4263 = vxor.u32 %v4041, 2147483648
        %v4264 = vxor.u32 %v4152, 2147483648
        %v4265 = vxor.u32 %v4154, 2147483648
        %v4266 = vxor.u32 %v3819, 2147483648
        %v4267 = vxor.u32 %v3821, 2147483648
        %v4268 = vxor.u32 %v3932, 2147483648
        %v4269 = vxor.u32 %v3934, 2147483648
        %v4270 = vxor.u32 %v4045, 2147483648
        %v4271 = vxor.u32 %v4047, 2147483648
        %v4272 = vxor.u32 %v4158, 2147483648
        %v4273 = vxor.u32 %v4160, 2147483648
        %v4274 = vxor.u32 %v3823, 2147483648
        %v4275 = vxor.u32 %v3825, 2147483648
        %v4276 = vxor.u32 %v3936, 2147483648
        %v4277 = vxor.u32 %v3938, 2147483648
        %v4278 = vxor.u32 %v4049, 2147483648
        %v4279 = vxor.u32 %v4051, 2147483648
        %v4280 = vxor.u32 %v4162, 2147483648
        %v4281 = vxor.u32 %v4164, 2147483648
        %v4282 = vxor.u32 %v3829, 2147483648
        %v4283 = vxor.u32 %v3831, 2147483648
        %v4284 = vxor.u32 %v3942, 2147483648
        %v4285 = vxor.u32 %v3944, 2147483648
        %v4286 = vxor.u32 %v4055, 2147483648
        %v4287 = vxor.u32 %v4057, 2147483648
        %v4288 = vxor.u32 %v4168, 2147483648
        %v4289 = vxor.u32 %v4170, 2147483648
        %v4290 = vxor.u32 %v3833, 2147483648
        %v4291 = vxor.u32 %v3835, 2147483648
        %v4292 = vxor.u32 %v3946, 2147483648
        %v4293 = vxor.u32 %v3948, 2147483648
        %v4294 = vxor.u32 %v4059, 2147483648
        %v4295 = vxor.u32 %v4061, 2147483648
        %v4296 = vxor.u32 %v4172, 2147483648
        %v4297 = vxor.u32 %v4174, 2147483648
        %v4298 = vxor.u32 %v3839, 2147483648
        %v4299 = vxor.u32 %v3841, 2147483648
        %v4300 = vxor.u32 %v3952, 2147483648
        %v4301 = vxor.u32 %v3954, 2147483648
        %v4302 = vxor.u32 %v4065, 2147483648
        %v4303 = vxor.u32 %v4067, 2147483648
        %v4304 = vxor.u32 %v4178, 2147483648
        %v4305 = vxor.u32 %v4180, 2147483648
        %v4306 = vxor.u32 %v3843, 2147483648
        %v4307 = vxor.u32 %v3845, 2147483648
        %v4308 = vxor.u32 %v3956, 2147483648
        %v4309 = vxor.u32 %v3958, 2147483648
        %v4310 = vxor.u32 %v4069, 2147483648
        %v4311 = vxor.u32 %v4071, 2147483648
        %v4312 = vxor.u32 %v4182, 2147483648
        %v4313 = vxor.u32 %v4184, 2147483648
        %v4314 = vmul.f32 %v4186, 1.442695
        %v4315 = vpow.pop %v4314
        %v4316 = vmul.f32 %v4187, 1.442695
        %v4317 = vpow.pop %v4316
        %v4318 = vmul.f32 %v4188, 1.442695
        %v4319 = vpow.pop %v4318
        %v4320 = vmul.f32 %v4189, 1.442695
        %v4321 = vpow.pop %v4320
        %v4322 = vmul.f32 %v4190, 1.442695
        %v4323 = vpow.pop %v4322
        %v4324 = vmul.f32 %v4191, 1.442695
        %v4325 = vpow.pop %v4324
        %v4326 = vmul.f32 %v4192, 1.442695
        %v4327 = vpow.pop %v4326
        %v4328 = vmul.f32 %v4193, 1.442695
        %v4329 = vpow.pop %v4328
        %v4330 = vmul.f32 %v4194, 1.442695
        %v4331 = vpow.pop %v4330
        %v4332 = vmul.f32 %v4195, 1.442695
        %v4333 = vpow.pop %v4332
        %v4334 = vmul.f32 %v4196, 1.442695
        %v4335 = vpow.pop %v4334
        %v4336 = vmul.f32 %v4197, 1.442695
        %v4337 = vpow.pop %v4336
        %v4338 = vmul.f32 %v4198, 1.442695
        %v4339 = vpow.pop %v4338
        %v4340 = vmul.f32 %v4199, 1.442695
        %v4341 = vpow.pop %v4340
        %v4342 = vmul.f32 %v4200, 1.442695
        %v4343 = vpow.pop %v4342
        %v4344 = vmul.f32 %v4201, 1.442695
        %v4345 = vpow.pop %v4344
        %v4346 = vmul.f32 %v4202, 1.442695
        %v4347 = vpow.pop %v4346
        %v4348 = vmul.f32 %v4203, 1.442695
        %v4349 = vpow.pop %v4348
        %v4350 = vmul.f32 %v4204, 1.442695
        %v4351 = vpow.pop %v4350
        %v4352 = vmul.f32 %v4205, 1.442695
        %v4353 = vpow.pop %v4352
        %v4354 = vmul.f32 %v4206, 1.442695
        %v4355 = vpow.pop %v4354
        %v4356 = vmul.f32 %v4207, 1.442695
        %v4357 = vpow.pop %v4356
        %v4358 = vmul.f32 %v4208, 1.442695
        %v4359 = vpow.pop %v4358
        %v4360 = vmul.f32 %v4209, 1.442695
        %v4361 = vpow.pop %v4360
        %v4362 = vmul.f32 %v4210, 1.442695
        %v4363 = vpow.pop %v4362
        %v4364 = vmul.f32 %v4211, 1.442695
        %v4365 = vpow.pop %v4364
        %v4366 = vmul.f32 %v4212, 1.442695
        %v4367 = vpow.pop %v4366
        %v4368 = vmul.f32 %v4213, 1.442695
        %v4369 = vpow.pop %v4368
        %v4370 = vmul.f32 %v4214, 1.442695
        %v4371 = vpow.pop %v4370
        %v4372 = vmul.f32 %v4215, 1.442695
        %v4373 = vpow.pop %v4372
        %v4374 = vmul.f32 %v4216, 1.442695
        %v4375 = vpow.pop %v4374
        %v4376 = vmul.f32 %v4217, 1.442695
        %v4377 = vpow.pop %v4376
        %v4378 = vmul.f32 %v4218, 1.442695
        %v4379 = vpow.pop %v4378
        %v4380 = vmul.f32 %v4219, 1.442695
        %v4381 = vpow.pop %v4380
        %v4382 = vmul.f32 %v4220, 1.442695
        %v4383 = vpow.pop %v4382
        %v4384 = vmul.f32 %v4221, 1.442695
        %v4385 = vpow.pop %v4384
        %v4386 = vmul.f32 %v4222, 1.442695
        %v4387 = vpow.pop %v4386
        %v4388 = vmul.f32 %v4223, 1.442695
        %v4389 = vpow.pop %v4388
        %v4390 = vmul.f32 %v4224, 1.442695
        %v4391 = vpow.pop %v4390
        %v4392 = vmul.f32 %v4225, 1.442695
        %v4393 = vpow.pop %v4392
        %v4394 = vmul.f32 %v4226, 1.442695
        %v4395 = vpow.pop %v4394
        %v4396 = vmul.f32 %v4227, 1.442695
        %v4397 = vpow.pop %v4396
        %v4398 = vmul.f32 %v4228, 1.442695
        %v4399 = vpow.pop %v4398
        %v4400 = vmul.f32 %v4229, 1.442695
        %v4401 = vpow.pop %v4400
        %v4402 = vmul.f32 %v4230, 1.442695
        %v4403 = vpow.pop %v4402
        %v4404 = vmul.f32 %v4231, 1.442695
        %v4405 = vpow.pop %v4404
        %v4406 = vmul.f32 %v4232, 1.442695
        %v4407 = vpow.pop %v4406
        %v4408 = vmul.f32 %v4233, 1.442695
        %v4409 = vpow.pop %v4408
        %v4410 = vmul.f32 %v4234, 1.442695
        %v4411 = vpow.pop %v4410
        %v4412 = vmul.f32 %v4235, 1.442695
        %v4413 = vpow.pop %v4412
        %v4414 = vmul.f32 %v4236, 1.442695
        %v4415 = vpow.pop %v4414
        %v4416 = vmul.f32 %v4237, 1.442695
        %v4417 = vpow.pop %v4416
        %v4418 = vmul.f32 %v4238, 1.442695
        %v4419 = vpow.pop %v4418
        %v4420 = vmul.f32 %v4239, 1.442695
        %v4421 = vpow.pop %v4420
        %v4422 = vmul.f32 %v4240, 1.442695
        %v4423 = vpow.pop %v4422
        %v4424 = vmul.f32 %v4241, 1.442695
        %v4425 = vpow.pop %v4424
        %v4426 = vmul.f32 %v4242, 1.442695
        %v4427 = vpow.pop %v4426
        %v4428 = vmul.f32 %v4243, 1.442695
        %v4429 = vpow.pop %v4428
        %v4430 = vmul.f32 %v4244, 1.442695
        %v4431 = vpow.pop %v4430
        %v4432 = vmul.f32 %v4245, 1.442695
        %v4433 = vpow.pop %v4432
        %v4434 = vmul.f32 %v4246, 1.442695
        %v4435 = vpow.pop %v4434
        %v4436 = vmul.f32 %v4247, 1.442695
        %v4437 = vpow.pop %v4436
        %v4438 = vmul.f32 %v4248, 1.442695
        %v4439 = vpow.pop %v4438
        %v4440 = vmul.f32 %v4249, 1.442695
        %v4441 = vpow.pop %v4440
        %v4442 = vmul.f32 %v4250, 1.442695
        %v4443 = vpow.pop %v4442
        %v4444 = vmul.f32 %v4251, 1.442695
        %v4445 = vpow.pop %v4444
        %v4446 = vmul.f32 %v4252, 1.442695
        %v4447 = vpow.pop %v4446
        %v4448 = vmul.f32 %v4253, 1.442695
        %v4449 = vpow.pop %v4448
        %v4450 = vmul.f32 %v4254, 1.442695
        %v4451 = vpow.pop %v4450
        %v4452 = vmul.f32 %v4255, 1.442695
        %v4453 = vpow.pop %v4452
        %v4454 = vmul.f32 %v4256, 1.442695
        %v4455 = vpow.pop %v4454
        %v4456 = vmul.f32 %v4257, 1.442695
        %v4457 = vpow.pop %v4456
        %v4458 = vmul.f32 %v4258, 1.442695
        %v4459 = vpow.pop %v4458
        %v4460 = vmul.f32 %v4259, 1.442695
        %v4461 = vpow.pop %v4460
        %v4462 = vmul.f32 %v4260, 1.442695
        %v4463 = vpow.pop %v4462
        %v4464 = vmul.f32 %v4261, 1.442695
        %v4465 = vpow.pop %v4464
        %v4466 = vmul.f32 %v4262, 1.442695
        %v4467 = vpow.pop %v4466
        %v4468 = vmul.f32 %v4263, 1.442695
        %v4469 = vpow.pop %v4468
        %v4470 = vmul.f32 %v4264, 1.442695
        %v4471 = vpow.pop %v4470
        %v4472 = vmul.f32 %v4265, 1.442695
        %v4473 = vpow.pop %v4472
        %v4474 = vmul.f32 %v4266, 1.442695
        %v4475 = vpow.pop %v4474
        %v4476 = vmul.f32 %v4267, 1.442695
        %v4477 = vpow.pop %v4476
        %v4478 = vmul.f32 %v4268, 1.442695
        %v4479 = vpow.pop %v4478
        %v4480 = vmul.f32 %v4269, 1.442695
        %v4481 = vpow.pop %v4480
        %v4482 = vmul.f32 %v4270, 1.442695
        %v4483 = vpow.pop %v4482
        %v4484 = vmul.f32 %v4271, 1.442695
        %v4485 = vpow.pop %v4484
        %v4486 = vmul.f32 %v4272, 1.442695
        %v4487 = vpow.pop %v4486
        %v4488 = vmul.f32 %v4273, 1.442695
        %v4489 = vpow.pop %v4488
        %v4490 = vmul.f32 %v4274, 1.442695
        %v4491 = vpow.pop %v4490
        %v4492 = vmul.f32 %v4275, 1.442695
        %v4493 = vpow.pop %v4492
        %v4494 = vmul.f32 %v4276, 1.442695
        %v4495 = vpow.pop %v4494
        %v4496 = vmul.f32 %v4277, 1.442695
        %v4497 = vpow.pop %v4496
        %v4498 = vmul.f32 %v4278, 1.442695
        %v4499 = vpow.pop %v4498
        %v4500 = vmul.f32 %v4279, 1.442695
        %v4501 = vpow.pop %v4500
        %v4502 = vmul.f32 %v4280, 1.442695
        %v4503 = vpow.pop %v4502
        %v4504 = vmul.f32 %v4281, 1.442695
        %v4505 = vpow.pop %v4504
        %v4506 = vmul.f32 %v4282, 1.442695
        %v4507 = vpow.pop %v4506
        %v4508 = vmul.f32 %v4283, 1.442695
        %v4509 = vpow.pop %v4508
        %v4510 = vmul.f32 %v4284, 1.442695
        %v4511 = vpow.pop %v4510
        %v4512 = vmul.f32 %v4285, 1.442695
        %v4513 = vpow.pop %v4512
        %v4514 = vmul.f32 %v4286, 1.442695
        %v4515 = vpow.pop %v4514
        %v4516 = vmul.f32 %v4287, 1.442695
        %v4517 = vpow.pop %v4516
        %v4518 = vmul.f32 %v4288, 1.442695
        %v4519 = vpow.pop %v4518
        %v4520 = vmul.f32 %v4289, 1.442695
        %v4521 = vpow.pop %v4520
        %v4522 = vmul.f32 %v4290, 1.442695
        %v4523 = vpow.pop %v4522
        %v4524 = vmul.f32 %v4291, 1.442695
        %v4525 = vpow.pop %v4524
        %v4526 = vmul.f32 %v4292, 1.442695
        %v4527 = vpow.pop %v4526
        %v4528 = vmul.f32 %v4293, 1.442695
        %v4529 = vpow.pop %v4528
        %v4530 = vmul.f32 %v4294, 1.442695
        %v4531 = vpow.pop %v4530
        %v4532 = vmul.f32 %v4295, 1.442695
        %v4533 = vpow.pop %v4532
        %v4534 = vmul.f32 %v4296, 1.442695
        %v4535 = vpow.pop %v4534
        %v4536 = vmul.f32 %v4297, 1.442695
        %v4537 = vpow.pop %v4536
        %v4538 = vmul.f32 %v4298, 1.442695
        %v4539 = vpow.pop %v4538
        %v4540 = vmul.f32 %v4299, 1.442695
        %v4541 = vpow.pop %v4540
        %v4542 = vmul.f32 %v4300, 1.442695
        %v4543 = vpow.pop %v4542
        %v4544 = vmul.f32 %v4301, 1.442695
        %v4545 = vpow.pop %v4544
        %v4546 = vmul.f32 %v4302, 1.442695
        %v4547 = vpow.pop %v4546
        %v4548 = vmul.f32 %v4303, 1.442695
        %v4549 = vpow.pop %v4548
        %v4550 = vmul.f32 %v4304, 1.442695
        %v4551 = vpow.pop %v4550
        %v4552 = vmul.f32 %v4305, 1.442695
        %v4553 = vpow.pop %v4552
        %v4554 = vmul.f32 %v4306, 1.442695
        %v4555 = vpow.pop %v4554
        %v4556 = vmul.f32 %v4307, 1.442695
        %v4557 = vpow.pop %v4556
        %v4558 = vmul.f32 %v4308, 1.442695
        %v4559 = vpow.pop %v4558
        %v4560 = vmul.f32 %v4309, 1.442695
        %v4561 = vpow.pop %v4560
        %v4562 = vmul.f32 %v4310, 1.442695
        %v4563 = vpow.pop %v4562
        %v4564 = vmul.f32 %v4311, 1.442695
        %v4565 = vpow.pop %v4564
        %v4566 = vmul.f32 %v4312, 1.442695
        %v4567 = vpow.pop %v4566
        %v4568 = vmul.f32 %v4313, 1.442695
        %v4569 = vpow.pop %v4568
        %v4570 = vadd.f32 %v4315, 1.0
        %v4571 = vadd.f32 %v4317, 1.0
        %v4572 = vadd.f32 %v4319, 1.0
        %v4573 = vadd.f32 %v4321, 1.0
        %v4574 = vadd.f32 %v4323, 1.0
        %v4575 = vadd.f32 %v4325, 1.0
        %v4576 = vadd.f32 %v4327, 1.0
        %v4577 = vadd.f32 %v4329, 1.0
        %v4578 = vadd.f32 %v4331, 1.0
        %v4579 = vadd.f32 %v4333, 1.0
        %v4580 = vadd.f32 %v4335, 1.0
        %v4581 = vadd.f32 %v4337, 1.0
        %v4582 = vadd.f32 %v4339, 1.0
        %v4583 = vadd.f32 %v4341, 1.0
        %v4584 = vadd.f32 %v4343, 1.0
        %v4585 = vadd.f32 %v4345, 1.0
        %v4586 = vadd.f32 %v4347, 1.0
        %v4587 = vadd.f32 %v4349, 1.0
        %v4588 = vadd.f32 %v4351, 1.0
        %v4589 = vadd.f32 %v4353, 1.0
        %v4590 = vadd.f32 %v4355, 1.0
        %v4591 = vadd.f32 %v4357, 1.0
        %v4592 = vadd.f32 %v4359, 1.0
        %v4593 = vadd.f32 %v4361, 1.0
        %v4594 = vadd.f32 %v4363, 1.0
        %v4595 = vadd.f32 %v4365, 1.0
        %v4596 = vadd.f32 %v4367, 1.0
        %v4597 = vadd.f32 %v4369, 1.0
        %v4598 = vadd.f32 %v4371, 1.0
        %v4599 = vadd.f32 %v4373, 1.0
        %v4600 = vadd.f32 %v4375, 1.0
        %v4601 = vadd.f32 %v4377, 1.0
        %v4602 = vadd.f32 %v4379, 1.0
        %v4603 = vadd.f32 %v4381, 1.0
        %v4604 = vadd.f32 %v4383, 1.0
        %v4605 = vadd.f32 %v4385, 1.0
        %v4606 = vadd.f32 %v4387, 1.0
        %v4607 = vadd.f32 %v4389, 1.0
        %v4608 = vadd.f32 %v4391, 1.0
        %v4609 = vadd.f32 %v4393, 1.0
        %v4610 = vadd.f32 %v4395, 1.0
        %v4611 = vadd.f32 %v4397, 1.0
        %v4612 = vadd.f32 %v4399, 1.0
        %v4613 = vadd.f32 %v4401, 1.0
        %v4614 = vadd.f32 %v4403, 1.0
        %v4615 = vadd.f32 %v4405, 1.0
        %v4616 = vadd.f32 %v4407, 1.0
        %v4617 = vadd.f32 %v4409, 1.0
        %v4618 = vadd.f32 %v4411, 1.0
        %v4619 = vadd.f32 %v4413, 1.0
        %v4620 = vadd.f32 %v4415, 1.0
        %v4621 = vadd.f32 %v4417, 1.0
        %v4622 = vadd.f32 %v4419, 1.0
        %v4623 = vadd.f32 %v4421, 1.0
        %v4624 = vadd.f32 %v4423, 1.0
        %v4625 = vadd.f32 %v4425, 1.0
        %v4626 = vadd.f32 %v4427, 1.0
        %v4627 = vadd.f32 %v4429, 1.0
        %v4628 = vadd.f32 %v4431, 1.0
        %v4629 = vadd.f32 %v4433, 1.0
        %v4630 = vadd.f32 %v4435, 1.0
        %v4631 = vadd.f32 %v4437, 1.0
        %v4632 = vadd.f32 %v4439, 1.0
        %v4633 = vadd.f32 %v4441, 1.0
        %v4634 = vadd.f32 %v4443, 1.0
        %v4635 = vadd.f32 %v4445, 1.0
        %v4636 = vadd.f32 %v4447, 1.0
        %v4637 = vadd.f32 %v4449, 1.0
        %v4638 = vadd.f32 %v4451, 1.0
        %v4639 = vadd.f32 %v4453, 1.0
        %v4640 = vadd.f32 %v4455, 1.0
        %v4641 = vadd.f32 %v4457, 1.0
        %v4642 = vadd.f32 %v4459, 1.0
        %v4643 = vadd.f32 %v4461, 1.0
        %v4644 = vadd.f32 %v4463, 1.0
        %v4645 = vadd.f32 %v4465, 1.0
        %v4646 = vadd.f32 %v4467, 1.0
        %v4647 = vadd.f32 %v4469, 1.0
        %v4648 = vadd.f32 %v4471, 1.0
        %v4649 = vadd.f32 %v4473, 1.0
        %v4650 = vadd.f32 %v4475, 1.0
        %v4651 = vadd.f32 %v4477, 1.0
        %v4652 = vadd.f32 %v4479, 1.0
        %v4653 = vadd.f32 %v4481, 1.0
        %v4654 = vadd.f32 %v4483, 1.0
        %v4655 = vadd.f32 %v4485, 1.0
        %v4656 = vadd.f32 %v4487, 1.0
        %v4657 = vadd.f32 %v4489, 1.0
        %v4658 = vadd.f32 %v4491, 1.0
        %v4659 = vadd.f32 %v4493, 1.0
        %v4660 = vadd.f32 %v4495, 1.0
        %v4661 = vadd.f32 %v4497, 1.0
        %v4662 = vadd.f32 %v4499, 1.0
        %v4663 = vadd.f32 %v4501, 1.0
        %v4664 = vadd.f32 %v4503, 1.0
        %v4665 = vadd.f32 %v4505, 1.0
        %v4666 = vadd.f32 %v4507, 1.0
        %v4667 = vadd.f32 %v4509, 1.0
        %v4668 = vadd.f32 %v4511, 1.0
        %v4669 = vadd.f32 %v4513, 1.0
        %v4670 = vadd.f32 %v4515, 1.0
        %v4671 = vadd.f32 %v4517, 1.0
        %v4672 = vadd.f32 %v4519, 1.0
        %v4673 = vadd.f32 %v4521, 1.0
        %v4674 = vadd.f32 %v4523, 1.0
        %v4675 = vadd.f32 %v4525, 1.0
        %v4676 = vadd.f32 %v4527, 1.0
        %v4677 = vadd.f32 %v4529, 1.0
        %v4678 = vadd.f32 %v4531, 1.0
        %v4679 = vadd.f32 %v4533, 1.0
        %v4680 = vadd.f32 %v4535, 1.0
        %v4681 = vadd.f32 %v4537, 1.0
        %v4682 = vadd.f32 %v4539, 1.0
        %v4683 = vadd.f32 %v4541, 1.0
        %v4684 = vadd.f32 %v4543, 1.0
        %v4685 = vadd.f32 %v4545, 1.0
        %v4686 = vadd.f32 %v4547, 1.0
        %v4687 = vadd.f32 %v4549, 1.0
        %v4688 = vadd.f32 %v4551, 1.0
        %v4689 = vadd.f32 %v4553, 1.0
        %v4690 = vadd.f32 %v4555, 1.0
        %v4691 = vadd.f32 %v4557, 1.0
        %v4692 = vadd.f32 %v4559, 1.0
        %v4693 = vadd.f32 %v4561, 1.0
        %v4694 = vadd.f32 %v4563, 1.0
        %v4695 = vadd.f32 %v4565, 1.0
        %v4696 = vadd.f32 %v4567, 1.0
        %v4697 = vadd.f32 %v4569, 1.0
        %v4698 = vrcp.pop %v4570
        %v4699 = vmul.f32 1.0, %v4698
        %v4700 = vrcp.pop %v4571
        %v4701 = vmul.f32 1.0, %v4700
        %v4702 = vrcp.pop %v4572
        %v4703 = vmul.f32 1.0, %v4702
        %v4704 = vrcp.pop %v4573
        %v4705 = vmul.f32 1.0, %v4704
        %v4706 = vrcp.pop %v4574
        %v4707 = vmul.f32 1.0, %v4706
        %v4708 = vrcp.pop %v4575
        %v4709 = vmul.f32 1.0, %v4708
        %v4710 = vrcp.pop %v4576
        %v4711 = vmul.f32 1.0, %v4710
        %v4712 = vrcp.pop %v4577
        %v4713 = vmul.f32 1.0, %v4712
        %v4714 = vrcp.pop %v4578
        %v4715 = vmul.f32 1.0, %v4714
        %v4716 = vrcp.pop %v4579
        %v4717 = vmul.f32 1.0, %v4716
        %v4718 = vrcp.pop %v4580
        %v4719 = vmul.f32 1.0, %v4718
        %v4720 = vrcp.pop %v4581
        %v4721 = vmul.f32 1.0, %v4720
        %v4722 = vrcp.pop %v4582
        %v4723 = vmul.f32 1.0, %v4722
        %v4724 = vrcp.pop %v4583
        %v4725 = vmul.f32 1.0, %v4724
        %v4726 = vrcp.pop %v4584
        %v4727 = vmul.f32 1.0, %v4726
        %v4728 = vrcp.pop %v4585
        %v4729 = vmul.f32 1.0, %v4728
        %v4730 = vrcp.pop %v4586
        %v4731 = vmul.f32 1.0, %v4730
        %v4732 = vrcp.pop %v4587
        %v4733 = vmul.f32 1.0, %v4732
        %v4734 = vrcp.pop %v4588
        %v4735 = vmul.f32 1.0, %v4734
        %v4736 = vrcp.pop %v4589
        %v4737 = vmul.f32 1.0, %v4736
        %v4738 = vrcp.pop %v4590
        %v4739 = vmul.f32 1.0, %v4738
        %v4740 = vrcp.pop %v4591
        %v4741 = vmul.f32 1.0, %v4740
        %v4742 = vrcp.pop %v4592
        %v4743 = vmul.f32 1.0, %v4742
        %v4744 = vrcp.pop %v4593
        %v4745 = vmul.f32 1.0, %v4744
        %v4746 = vrcp.pop %v4594
        %v4747 = vmul.f32 1.0, %v4746
        %v4748 = vrcp.pop %v4595
        %v4749 = vmul.f32 1.0, %v4748
        %v4750 = vrcp.pop %v4596
        %v4751 = vmul.f32 1.0, %v4750
        %v4752 = vrcp.pop %v4597
        %v4753 = vmul.f32 1.0, %v4752
        %v4754 = vrcp.pop %v4598
        %v4755 = vmul.f32 1.0, %v4754
        %v4756 = vrcp.pop %v4599
        %v4757 = vmul.f32 1.0, %v4756
        %v4758 = vrcp.pop %v4600
        %v4759 = vmul.f32 1.0, %v4758
        %v4760 = vrcp.pop %v4601
        %v4761 = vmul.f32 1.0, %v4760
        %v4762 = vrcp.pop %v4602
        %v4763 = vmul.f32 1.0, %v4762
        %v4764 = vrcp.pop %v4603
        %v4765 = vmul.f32 1.0, %v4764
        %v4766 = vrcp.pop %v4604
        %v4767 = vmul.f32 1.0, %v4766
        %v4768 = vrcp.pop %v4605
        %v4769 = vmul.f32 1.0, %v4768
        %v4770 = vrcp.pop %v4606
        %v4771 = vmul.f32 1.0, %v4770
        %v4772 = vrcp.pop %v4607
        %v4773 = vmul.f32 1.0, %v4772
        %v4774 = vrcp.pop %v4608
        %v4775 = vmul.f32 1.0, %v4774
        %v4776 = vrcp.pop %v4609
        %v4777 = vmul.f32 1.0, %v4776
        %v4778 = vrcp.pop %v4610
        %v4779 = vmul.f32 1.0, %v4778
        %v4780 = vrcp.pop %v4611
        %v4781 = vmul.f32 1.0, %v4780
        %v4782 = vrcp.pop %v4612
        %v4783 = vmul.f32 1.0, %v4782
        %v4784 = vrcp.pop %v4613
        %v4785 = vmul.f32 1.0, %v4784
        %v4786 = vrcp.pop %v4614
        %v4787 = vmul.f32 1.0, %v4786
        %v4788 = vrcp.pop %v4615
        %v4789 = vmul.f32 1.0, %v4788
        %v4790 = vrcp.pop %v4616
        %v4791 = vmul.f32 1.0, %v4790
        %v4792 = vrcp.pop %v4617
        %v4793 = vmul.f32 1.0, %v4792
        %v4794 = vrcp.pop %v4618
        %v4795 = vmul.f32 1.0, %v4794
        %v4796 = vrcp.pop %v4619
        %v4797 = vmul.f32 1.0, %v4796
        %v4798 = vrcp.pop %v4620
        %v4799 = vmul.f32 1.0, %v4798
        %v4800 = vrcp.pop %v4621
        %v4801 = vmul.f32 1.0, %v4800
        %v4802 = vrcp.pop %v4622
        %v4803 = vmul.f32 1.0, %v4802
        %v4804 = vrcp.pop %v4623
        %v4805 = vmul.f32 1.0, %v4804
        %v4806 = vrcp.pop %v4624
        %v4807 = vmul.f32 1.0, %v4806
        %v4808 = vrcp.pop %v4625
        %v4809 = vmul.f32 1.0, %v4808
        %v4810 = vrcp.pop %v4626
        %v4811 = vmul.f32 1.0, %v4810
        %v4812 = vrcp.pop %v4627
        %v4813 = vmul.f32 1.0, %v4812
        %v4814 = vrcp.pop %v4628
        %v4815 = vmul.f32 1.0, %v4814
        %v4816 = vrcp.pop %v4629
        %v4817 = vmul.f32 1.0, %v4816
        %v4818 = vrcp.pop %v4630
        %v4819 = vmul.f32 1.0, %v4818
        %v4820 = vrcp.pop %v4631
        %v4821 = vmul.f32 1.0, %v4820
        %v4822 = vrcp.pop %v4632
        %v4823 = vmul.f32 1.0, %v4822
        %v4824 = vrcp.pop %v4633
        %v4825 = vmul.f32 1.0, %v4824
        %v4826 = vrcp.pop %v4634
        %v4827 = vmul.f32 1.0, %v4826
        %v4828 = vrcp.pop %v4635
        %v4829 = vmul.f32 1.0, %v4828
        %v4830 = vrcp.pop %v4636
        %v4831 = vmul.f32 1.0, %v4830
        %v4832 = vrcp.pop %v4637
        %v4833 = vmul.f32 1.0, %v4832
        %v4834 = vrcp.pop %v4638
        %v4835 = vmul.f32 1.0, %v4834
        %v4836 = vrcp.pop %v4639
        %v4837 = vmul.f32 1.0, %v4836
        %v4838 = vrcp.pop %v4640
        %v4839 = vmul.f32 1.0, %v4838
        %v4840 = vrcp.pop %v4641
        %v4841 = vmul.f32 1.0, %v4840
        %v4842 = vrcp.pop %v4642
        %v4843 = vmul.f32 1.0, %v4842
        %v4844 = vrcp.pop %v4643
        %v4845 = vmul.f32 1.0, %v4844
        %v4846 = vrcp.pop %v4644
        %v4847 = vmul.f32 1.0, %v4846
        %v4848 = vrcp.pop %v4645
        %v4849 = vmul.f32 1.0, %v4848
        %v4850 = vrcp.pop %v4646
        %v4851 = vmul.f32 1.0, %v4850
        %v4852 = vrcp.pop %v4647
        %v4853 = vmul.f32 1.0, %v4852
        %v4854 = vrcp.pop %v4648
        %v4855 = vmul.f32 1.0, %v4854
        %v4856 = vrcp.pop %v4649
        %v4857 = vmul.f32 1.0, %v4856
        %v4858 = vrcp.pop %v4650
        %v4859 = vmul.f32 1.0, %v4858
        %v4860 = vrcp.pop %v4651
        %v4861 = vmul.f32 1.0, %v4860
        %v4862 = vrcp.pop %v4652
        %v4863 = vmul.f32 1.0, %v4862
        %v4864 = vrcp.pop %v4653
        %v4865 = vmul.f32 1.0, %v4864
        %v4866 = vrcp.pop %v4654
        %v4867 = vmul.f32 1.0, %v4866
        %v4868 = vrcp.pop %v4655
        %v4869 = vmul.f32 1.0, %v4868
        %v4870 = vrcp.pop %v4656
        %v4871 = vmul.f32 1.0, %v4870
        %v4872 = vrcp.pop %v4657
        %v4873 = vmul.f32 1.0, %v4872
        %v4874 = vrcp.pop %v4658
        %v4875 = vmul.f32 1.0, %v4874
        %v4876 = vrcp.pop %v4659
        %v4877 = vmul.f32 1.0, %v4876
        %v4878 = vrcp.pop %v4660
        %v4879 = vmul.f32 1.0, %v4878
        %v4880 = vrcp.pop %v4661
        %v4881 = vmul.f32 1.0, %v4880
        %v4882 = vrcp.pop %v4662
        %v4883 = vmul.f32 1.0, %v4882
        %v4884 = vrcp.pop %v4663
        %v4885 = vmul.f32 1.0, %v4884
        %v4886 = vrcp.pop %v4664
        %v4887 = vmul.f32 1.0, %v4886
        %v4888 = vrcp.pop %v4665
        %v4889 = vmul.f32 1.0, %v4888
        %v4890 = vrcp.pop %v4666
        %v4891 = vmul.f32 1.0, %v4890
        %v4892 = vrcp.pop %v4667
        %v4893 = vmul.f32 1.0, %v4892
        %v4894 = vrcp.pop %v4668
        %v4895 = vmul.f32 1.0, %v4894
        %v4896 = vrcp.pop %v4669
        %v4897 = vmul.f32 1.0, %v4896
        %v4898 = vrcp.pop %v4670
        %v4899 = vmul.f32 1.0, %v4898
        %v4900 = vrcp.pop %v4671
        %v4901 = vmul.f32 1.0, %v4900
        %v4902 = vrcp.pop %v4672
        %v4903 = vmul.f32 1.0, %v4902
        %v4904 = vrcp.pop %v4673
        %v4905 = vmul.f32 1.0, %v4904
        %v4906 = vrcp.pop %v4674
        %v4907 = vmul.f32 1.0, %v4906
        %v4908 = vrcp.pop %v4675
        %v4909 = vmul.f32 1.0, %v4908
        %v4910 = vrcp.pop %v4676
        %v4911 = vmul.f32 1.0, %v4910
        %v4912 = vrcp.pop %v4677
        %v4913 = vmul.f32 1.0, %v4912
        %v4914 = vrcp.pop %v4678
        %v4915 = vmul.f32 1.0, %v4914
        %v4916 = vrcp.pop %v4679
        %v4917 = vmul.f32 1.0, %v4916
        %v4918 = vrcp.pop %v4680
        %v4919 = vmul.f32 1.0, %v4918
        %v4920 = vrcp.pop %v4681
        %v4921 = vmul.f32 1.0, %v4920
        %v4922 = vrcp.pop %v4682
        %v4923 = vmul.f32 1.0, %v4922
        %v4924 = vrcp.pop %v4683
        %v4925 = vmul.f32 1.0, %v4924
        %v4926 = vrcp.pop %v4684
        %v4927 = vmul.f32 1.0, %v4926
        %v4928 = vrcp.pop %v4685
        %v4929 = vmul.f32 1.0, %v4928
        %v4930 = vrcp.pop %v4686
        %v4931 = vmul.f32 1.0, %v4930
        %v4932 = vrcp.pop %v4687
        %v4933 = vmul.f32 1.0, %v4932
        %v4934 = vrcp.pop %v4688
        %v4935 = vmul.f32 1.0, %v4934
        %v4936 = vrcp.pop %v4689
        %v4937 = vmul.f32 1.0, %v4936
        %v4938 = vrcp.pop %v4690
        %v4939 = vmul.f32 1.0, %v4938
        %v4940 = vrcp.pop %v4691
        %v4941 = vmul.f32 1.0, %v4940
        %v4942 = vrcp.pop %v4692
        %v4943 = vmul.f32 1.0, %v4942
        %v4944 = vrcp.pop %v4693
        %v4945 = vmul.f32 1.0, %v4944
        %v4946 = vrcp.pop %v4694
        %v4947 = vmul.f32 1.0, %v4946
        %v4948 = vrcp.pop %v4695
        %v4949 = vmul.f32 1.0, %v4948
        %v4950 = vrcp.pop %v4696
        %v4951 = vmul.f32 1.0, %v4950
        %v4952 = vrcp.pop %v4697
        %v4953 = vmul.f32 1.0, %v4952
        %4954 = vst [vmem:[%s557] sm:$0xff] %v4699
        %4955 = vst [vmem:[%s557 + $0x8] sm:$0xff] %v4701
        %4956 = vst [vmem:[%s557 + $0x10] sm:$0xff] %v4703
        %4957 = vst [vmem:[%s557 + $0x18] sm:$0xff] %v4705
        %4958 = vst [vmem:[%s557 + $0x20] sm:$0xff] %v4707
        %4959 = vst [vmem:[%s557 + $0x28] sm:$0xff] %v4709
        %4960 = vst [vmem:[%s557 + $0x30] sm:$0xff] %v4711
        %4961 = vst [vmem:[%s557 + $0x38] sm:$0xff] %v4713
        %4962 = vst [vmem:[%s557 + $0x40] sm:$0xff] %v4715
        %4963 = vst [vmem:[%s557 + $0x48] sm:$0xff] %v4717
        %4964 = vst [vmem:[%s557 + $0x50] sm:$0xff] %v4719
        %4965 = vst [vmem:[%s557 + $0x58] sm:$0xff] %v4721
        %4966 = vst [vmem:[%s557 + $0x60] sm:$0xff] %v4723
        %4967 = vst [vmem:[%s557 + $0x68] sm:$0xff] %v4725
        %4968 = vst [vmem:[%s557 + $0x70] sm:$0xff] %v4727
        %4969 = vst [vmem:[%s557 + $0x78] sm:$0xff] %v4729
        %4970 = vst [vmem:[%s557 + $0x80] sm:$0xff] %v4731
        %4971 = vst [vmem:[%s557 + $0x88] sm:$0xff] %v4733
        %4972 = vst [vmem:[%s557 + $0x90] sm:$0xff] %v4735
        %4973 = vst [vmem:[%s557 + $0x98] sm:$0xff] %v4737
        %4974 = vst [vmem:[%s557 + $0xa0] sm:$0xff] %v4739
        %4975 = vst [vmem:[%s557 + $0xa8] sm:$0xff] %v4741
        %4976 = vst [vmem:[%s557 + $0xb0] sm:$0xff] %v4743
        %4977 = vst [vmem:[%s557 + $0xb8] sm:$0xff] %v4745
        %4978 = vst [vmem:[%s557 + $0xc0] sm:$0xff] %v4747
        %4979 = vst [vmem:[%s557 + $0xc8] sm:$0xff] %v4749
        %4980 = vst [vmem:[%s557 + $0xd0] sm:$0xff] %v4751
        %4981 = vst [vmem:[%s557 + $0xd8] sm:$0xff] %v4753
        %4982 = vst [vmem:[%s557 + $0xe0] sm:$0xff] %v4755
        %4983 = vst [vmem:[%s557 + $0xe8] sm:$0xff] %v4757
        %4984 = vst [vmem:[%s557 + $0xf0] sm:$0xff] %v4759
        %4985 = vst [vmem:[%s557 + $0xf8] sm:$0xff] %v4761
        %4986 = vst [vmem:[%s557 + $0x100] sm:$0xff] %v4763
        %4987 = vst [vmem:[%s557 + $0x108] sm:$0xff] %v4765
        %4988 = vst [vmem:[%s557 + $0x110] sm:$0xff] %v4767
        %4989 = vst [vmem:[%s557 + $0x118] sm:$0xff] %v4769
        %4990 = vst [vmem:[%s557 + $0x120] sm:$0xff] %v4771
        %4991 = vst [vmem:[%s557 + $0x128] sm:$0xff] %v4773
        %4992 = vst [vmem:[%s557 + $0x130] sm:$0xff] %v4775
        %4993 = vst [vmem:[%s557 + $0x138] sm:$0xff] %v4777
        %4994 = vst [vmem:[%s557 + $0x140] sm:$0xff] %v4779
        %4995 = vst [vmem:[%s557 + $0x148] sm:$0xff] %v4781
        %4996 = vst [vmem:[%s557 + $0x150] sm:$0xff] %v4783
        %4997 = vst [vmem:[%s557 + $0x158] sm:$0xff] %v4785
        %4998 = vst [vmem:[%s557 + $0x160] sm:$0xff] %v4787
        %4999 = vst [vmem:[%s557 + $0x168] sm:$0xff] %v4789
        %5000 = vst [vmem:[%s557 + $0x170] sm:$0xff] %v4791
        %5001 = vst [vmem:[%s557 + $0x178] sm:$0xff] %v4793
        %5002 = vst [vmem:[%s557 + $0x180] sm:$0xff] %v4795
        %5003 = vst [vmem:[%s557 + $0x188] sm:$0xff] %v4797
        %5004 = vst [vmem:[%s557 + $0x190] sm:$0xff] %v4799
        %5005 = vst [vmem:[%s557 + $0x198] sm:$0xff] %v4801
        %5006 = vst [vmem:[%s557 + $0x1a0] sm:$0xff] %v4803
        %5007 = vst [vmem:[%s557 + $0x1a8] sm:$0xff] %v4805
        %5008 = vst [vmem:[%s557 + $0x1b0] sm:$0xff] %v4807
        %5009 = vst [vmem:[%s557 + $0x1b8] sm:$0xff] %v4809
        %5010 = vst [vmem:[%s557 + $0x1c0] sm:$0xff] %v4811
        %5011 = vst [vmem:[%s557 + $0x1c8] sm:$0xff] %v4813
        %5012 = vst [vmem:[%s557 + $0x1d0] sm:$0xff] %v4815
        %5013 = vst [vmem:[%s557 + $0x1d8] sm:$0xff] %v4817
        %5014 = vst [vmem:[%s557 + $0x1e0] sm:$0xff] %v4819
        %5015 = vst [vmem:[%s557 + $0x1e8] sm:$0xff] %v4821
        %5016 = vst [vmem:[%s557 + $0x1f0] sm:$0xff] %v4823
        %5017 = vst [vmem:[%s557 + $0x1f8] sm:$0xff] %v4825
        %5018 = vst [vmem:[%s557 + $0x200] sm:$0xff] %v4827
        %5019 = vst [vmem:[%s557 + $0x208] sm:$0xff] %v4829
        %5020 = vst [vmem:[%s557 + $0x210] sm:$0xff] %v4831
        %5021 = vst [vmem:[%s557 + $0x218] sm:$0xff] %v4833
        %5022 = vst [vmem:[%s557 + $0x220] sm:$0xff] %v4835
        %5023 = vst [vmem:[%s557 + $0x228] sm:$0xff] %v4837
        %5024 = vst [vmem:[%s557 + $0x230] sm:$0xff] %v4839
        %5025 = vst [vmem:[%s557 + $0x238] sm:$0xff] %v4841
        %5026 = vst [vmem:[%s557 + $0x240] sm:$0xff] %v4843
        %5027 = vst [vmem:[%s557 + $0x248] sm:$0xff] %v4845
        %5028 = vst [vmem:[%s557 + $0x250] sm:$0xff] %v4847
        %5029 = vst [vmem:[%s557 + $0x258] sm:$0xff] %v4849
        %5030 = vst [vmem:[%s557 + $0x260] sm:$0xff] %v4851
        %5031 = vst [vmem:[%s557 + $0x268] sm:$0xff] %v4853
        %5032 = vst [vmem:[%s557 + $0x270] sm:$0xff] %v4855
        %5033 = vst [vmem:[%s557 + $0x278] sm:$0xff] %v4857
        %5034 = vst [vmem:[%s557 + $0x280] sm:$0xff] %v4859
        %5035 = vst [vmem:[%s557 + $0x288] sm:$0xff] %v4861
        %5036 = vst [vmem:[%s557 + $0x290] sm:$0xff] %v4863
        %5037 = vst [vmem:[%s557 + $0x298] sm:$0xff] %v4865
        %5038 = vst [vmem:[%s557 + $0x2a0] sm:$0xff] %v4867
        %5039 = vst [vmem:[%s557 + $0x2a8] sm:$0xff] %v4869
        %5040 = vst [vmem:[%s557 + $0x2b0] sm:$0xff] %v4871
        %5041 = vst [vmem:[%s557 + $0x2b8] sm:$0xff] %v4873
        %5042 = vst [vmem:[%s557 + $0x2c0] sm:$0xff] %v4875
        %5043 = vst [vmem:[%s557 + $0x2c8] sm:$0xff] %v4877
        %5044 = vst [vmem:[%s557 + $0x2d0] sm:$0xff] %v4879
        %5045 = vst [vmem:[%s557 + $0x2d8] sm:$0xff] %v4881
        %5046 = vst [vmem:[%s557 + $0x2e0] sm:$0xff] %v4883
        %5047 = vst [vmem:[%s557 + $0x2e8] sm:$0xff] %v4885
        %5048 = vst [vmem:[%s557 + $0x2f0] sm:$0xff] %v4887
        %5049 = vst [vmem:[%s557 + $0x2f8] sm:$0xff] %v4889
        %5050 = vst [vmem:[%s557 + $0x300] sm:$0xff] %v4891
        %5051 = vst [vmem:[%s557 + $0x308] sm:$0xff] %v4893
        %5052 = vst [vmem:[%s557 + $0x310] sm:$0xff] %v4895
        %5053 = vst [vmem:[%s557 + $0x318] sm:$0xff] %v4897
        %5054 = vst [vmem:[%s557 + $0x320] sm:$0xff] %v4899
        %5055 = vst [vmem:[%s557 + $0x328] sm:$0xff] %v4901
        %5056 = vst [vmem:[%s557 + $0x330] sm:$0xff] %v4903
        %5057 = vst [vmem:[%s557 + $0x338] sm:$0xff] %v4905
        %5058 = vst [vmem:[%s557 + $0x340] sm:$0xff] %v4907
        %5059 = vst [vmem:[%s557 + $0x348] sm:$0xff] %v4909
        %5060 = vst [vmem:[%s557 + $0x350] sm:$0xff] %v4911
        %5061 = vst [vmem:[%s557 + $0x358] sm:$0xff] %v4913
        %5062 = vst [vmem:[%s557 + $0x360] sm:$0xff] %v4915
        %5063 = vst [vmem:[%s557 + $0x368] sm:$0xff] %v4917
        %5064 = vst [vmem:[%s557 + $0x370] sm:$0xff] %v4919
        %5065 = vst [vmem:[%s557 + $0x378] sm:$0xff] %v4921
        %5066 = vst [vmem:[%s557 + $0x380] sm:$0xff] %v4923
        %5067 = vst [vmem:[%s557 + $0x388] sm:$0xff] %v4925
        %5068 = vst [vmem:[%s557 + $0x390] sm:$0xff] %v4927
        %5069 = vst [vmem:[%s557 + $0x398] sm:$0xff] %v4929
        %5070 = vst [vmem:[%s557 + $0x3a0] sm:$0xff] %v4931
        %5071 = vst [vmem:[%s557 + $0x3a8] sm:$0xff] %v4933
        %5072 = vst [vmem:[%s557 + $0x3b0] sm:$0xff] %v4935
        %5073 = vst [vmem:[%s557 + $0x3b8] sm:$0xff] %v4937
        %5074 = vst [vmem:[%s557 + $0x3c0] sm:$0xff] %v4939
        %5075 = vst [vmem:[%s557 + $0x3c8] sm:$0xff] %v4941
        %5076 = vst [vmem:[%s557 + $0x3d0] sm:$0xff] %v4943
        %5077 = vst [vmem:[%s557 + $0x3d8] sm:$0xff] %v4945
        %5078 = vst [vmem:[%s557 + $0x3e0] sm:$0xff] %v4947
        %5079 = vst [vmem:[%s557 + $0x3e8] sm:$0xff] %v4949
        %5080 = vst [vmem:[%s557 + $0x3f0] sm:$0xff] %v4951
        %5081 = vst [vmem:[%s557 + $0x3f8] sm:$0xff] %v4953
        %5082 = vst [vmem:[%s564] sm:$0xff] %v2489
        %5083 = vst [vmem:[%s564 + $0x8] sm:$0xff] %v2491
        %5084 = vst [vmem:[%s564 + $0x10] sm:$0xff] %v2493
        %5085 = vst [vmem:[%s564 + $0x18] sm:$0xff] %v2495
        %5086 = vst [vmem:[%s564 + $0x20] sm:$0xff] %v2499
        %5087 = vst [vmem:[%s564 + $0x28] sm:$0xff] %v2501
        %5088 = vst [vmem:[%s564 + $0x30] sm:$0xff] %v2503
        %5089 = vst [vmem:[%s564 + $0x38] sm:$0xff] %v2505
        %5090 = vst [vmem:[%s564 + $0x40] sm:$0xff] %v2509
        %5091 = vst [vmem:[%s564 + $0x48] sm:$0xff] %v2511
        %5092 = vst [vmem:[%s564 + $0x50] sm:$0xff] %v2513
        %5093 = vst [vmem:[%s564 + $0x58] sm:$0xff] %v2515
        %5094 = vst [vmem:[%s564 + $0x60] sm:$0xff] %v2519
        %5095 = vst [vmem:[%s564 + $0x68] sm:$0xff] %v2521
        %5096 = vst [vmem:[%s564 + $0x70] sm:$0xff] %v2523
        %5097 = vst [vmem:[%s564 + $0x78] sm:$0xff] %v2525
        %5098 = vst [vmem:[%s564 + $0x80] sm:$0xff] %v2529
        %5099 = vst [vmem:[%s564 + $0x88] sm:$0xff] %v2531
        %5100 = vst [vmem:[%s564 + $0x90] sm:$0xff] %v2533
        %5101 = vst [vmem:[%s564 + $0x98] sm:$0xff] %v2535
        %5102 = vst [vmem:[%s564 + $0xa0] sm:$0xff] %v2539
        %5103 = vst [vmem:[%s564 + $0xa8] sm:$0xff] %v2541
        %5104 = vst [vmem:[%s564 + $0xb0] sm:$0xff] %v2543
        %5105 = vst [vmem:[%s564 + $0xb8] sm:$0xff] %v2545
        %5106 = vst [vmem:[%s564 + $0xc0] sm:$0xff] %v2549
        %5107 = vst [vmem:[%s564 + $0xc8] sm:$0xff] %v2551
        %5108 = vst [vmem:[%s564 + $0xd0] sm:$0xff] %v2553
        %5109 = vst [vmem:[%s564 + $0xd8] sm:$0xff] %v2555
        %5110 = vst [vmem:[%s564 + $0xe0] sm:$0xff] %v2559
        %5111 = vst [vmem:[%s564 + $0xe8] sm:$0xff] %v2561
        %5112 = vst [vmem:[%s564 + $0xf0] sm:$0xff] %v2563
        %5113 = vst [vmem:[%s564 + $0xf8] sm:$0xff] %v2565
        %s5114 = sand.u32 %s267, 1
        %s5115 = scalar_lea.sflag [#allocation4], %s5114
        %s5116 = sand.u32 %s267, 1
        %s5117 = smul.addr %s5116, 1024
        %s5118 = scalar_lea.vmem [#allocation19], %s5117
        %s5119 = sand.u32 %s293, 1
        %s5120 = scalar_lea.sflag [#allocation21], %s5119
        %s5121 = sand.u32 %s293, 1
        %s5122 = smul.addr %s5121, 256
        %s5123 = scalar_lea.vmem [#allocation20], %s5122
        // Predicated region
        $region101: #{tpu_custom_call.1} parent=59 // pred_check
          %p5124 = pneg %p277
        $region102: #{tpu_custom_call.1} parent=59 // pred_check_branch
          %5126 = sbr.rel (%p5124) target = $region104
        $region103: #{tpu_custom_call.1} parent=59 // pred_region
          %s5127 = smul.u32 16, %s39
          %s5129 = ssub.s32 16384, 16384
          %5130 = vsyncadd %s5115, %s5129
          %s5131 = smul.addr %s5127, 8
          %s5132 = smul.addr %s5131, 128
          %s5133 = scalar_lea.hbm %s10, %s5132
          %s5134 = sshll.u32 %s5118, 4
          %s5135 = int_to_ptr.vmem [resolvable:$true] %s5134
          %5140 = dma.vmem_to_hbm [thread:$0]  %s5135, 16384, %s5133, %s5115, 1024, 1024, 64
        $region104: #{tpu_custom_call.1} parent=59 // pred_fallthru
          _
        // Predicated region
        $region105: #{tpu_custom_call.1} parent=59 // pred_check
          %p5141 = pneg %p303
        $region106: #{tpu_custom_call.1} parent=59 // pred_check_branch
          %5143 = sbr.rel (%p5141) target = $region108
        $region107: #{tpu_custom_call.1} parent=59 // pred_region
          %s5144 = smul.u32 16, %s39
          %s5146 = ssub.s32 4096, 4096
          %5147 = vsyncadd %s5120, %s5146
          %s5148 = smul.addr %s5144, 2
          %s5149 = smul.addr %s5148, 128
          %s5150 = scalar_lea.hbm %s11, %s5149
          %s5151 = sshll.u32 %s5123, 4
          %s5152 = int_to_ptr.vmem [resolvable:$true] %s5151
          %5157 = dma.vmem_to_hbm [thread:$0]  %s5152, 4096, %s5150, %s5120, 256, 256, 16
        $region108: #{tpu_custom_call.1} parent=59 // pred_fallthru
          _
      $region60: #{tpu_custom_call.1} parent=5 // pred_fallthru
        _
      %p5158 = scmp.le.s32.totalorder 2, %s34
      // Predicated region
      $region109: #{tpu_custom_call.1} parent=5 // pred_check
        %p5159 = pneg %p5158
      $region110: #{tpu_custom_call.1} parent=5 // pred_check_branch
        %5161 = sbr.rel (%p5159) target = $region112
      $region111: #{tpu_custom_call.1} parent=5 // pred_region
        %s5162 = ssub.s32 %s34, 2
        // Predicated region
        $region113: #{tpu_custom_call.1} parent=111 // pred_check
          %p5163 = pneg %p283
        $region114: #{tpu_custom_call.1} parent=111 // pred_check_branch
          %5165 = sbr.rel (%p5163) target = $region116
        $region115: #{tpu_custom_call.1} parent=111 // pred_region
          %s5166 = sand.u32 %s268, 1
          %s5167 = scalar_lea.sflag [#allocation4], %s5166
          %s5168 = sand.u32 %s268, 1
          %s5169 = smul.addr %s5168, 1024
          %s5170 = scalar_lea.vmem [#allocation19], %s5169
          %5171 = dma.done %s5167, 16384
        $region116: #{tpu_custom_call.1} parent=111 // pred_fallthru
          _
        // Predicated region
        $region117: #{tpu_custom_call.1} parent=111 // pred_check
          %p5172 = pneg %p309
        $region118: #{tpu_custom_call.1} parent=111 // pred_check_branch
          %5174 = sbr.rel (%p5172) target = $region120
        $region119: #{tpu_custom_call.1} parent=111 // pred_region
          %s5175 = sand.u32 %s294, 1
          %s5176 = scalar_lea.sflag [#allocation21], %s5175
          %s5177 = sand.u32 %s294, 1
          %s5178 = smul.addr %s5177, 256
          %s5179 = scalar_lea.vmem [#allocation20], %s5178
          %5180 = dma.done %s5176, 4096
        $region120: #{tpu_custom_call.1} parent=111 // pred_fallthru
          _
      $region112: #{tpu_custom_call.1} parent=5 // pred_fallthru
        _
    $region6: #{tpu_custom_call.1} parent=1 // loop_footer
      %s38 = sadd.s32 1, %s34
    $region7: #{tpu_custom_call.1} parent=1 // loop_footer_branch
      %33 = sbr.rel target = $region3
    $region8: #{tpu_custom_call.1} parent=1 // loop_exit
      _
    %5181 = vsyncpa [#allocation3], 1
    %s5182 = scalar_lea.sflag [#allocation3], 1
    %5183 = vsyncpa %s5182, 1
    %5184 = vsyncpa [#allocation6], 1
    %s5185 = scalar_lea.sflag [#allocation6], 1
    %5186 = vsyncpa %s5185, 1
    %5187 = vsyncpa [#allocation9], 1
    %5188 = vsyncpa [#allocation12], 1
    %5189 = vsyncpa [#allocation15], 1
    %5190 = vsyncpa [#allocation18], 1
    %5191 = vsyncpa [#allocation4], 1
    %s5192 = scalar_lea.sflag [#allocation4], 1
    %5193 = vsyncpa %s5192, 1
    %5194 = vsyncpa [#allocation21], 1
    %s5195 = scalar_lea.sflag [#allocation21], 1
    %5196 = vsyncpa %s5195, 1

</llo_original>
